<compile_context>
chip_gen: v6e
topology: v6e:2x2x1
jax: 0.10.0
libtpu: 0.0.40
codegen_flags: <defaults>
</compile_context>

<pallas_src>
import jax
import jax.numpy as jnp
from jax.experimental import pallas as pl
from jax.experimental.pallas import tpu as pltpu

EPS = 1e-5


def _round_up(x, m):
    return (x + m - 1) // m * m


def _vmem_limit_bytes():
    # ~3/4 of physical VMEM: ~96 MiB on v5e/v6e (128 MiB phys), ~48 MiB on v7x (64 MiB).
    try:
        cap = pltpu.get_tpu_info().vmem_capacity_bytes
    except Exception:
        cap = 64 << 20
    return int(min(96 << 20, cap * 3 // 4))


# ---------------------------------------------------------------------------
# Pass 1: conv as a K-tiled im2col GEMM (bf16 operands, f32 MXU accumulation in
# a VMEM scratch) + per-M-tile partial batch statistics (sum, sum^2), emitted
# once on the last K step with a single unmasked (8, Cout_p) store.
# ---------------------------------------------------------------------------
def _conv_mm_kernel(a_ref, b_ref, y_ref, stats_ref, acc_ref):
    k = pl.program_id(1)

    @pl.when(k == 0)
    def _():
        acc_ref[...] = jnp.zeros_like(acc_ref)

    acc_ref[...] += jnp.dot(a_ref[...], b_ref[...], preferred_element_type=jnp.float32)

    @pl.when(k == pl.num_programs(1) - 1)
    def _():
        y = acc_ref[...]
        y_ref[...] = y.astype(y_ref.dtype)
        s1 = jnp.sum(y, axis=0, keepdims=True)
        s2 = jnp.sum(y * y, axis=0, keepdims=True)
        pad = jnp.zeros((6, s1.shape[1]), jnp.float32)
        stats_ref[...] = jnp.concatenate([s1, s2, pad], axis=0)   # one unmasked store


# ---------------------------------------------------------------------------
# Pass 2: fused affine BatchNorm (precomputed per-channel scale/shift packed in
# one (8, Cout_p) operand) + ReLU.  Math in f32 (v5e-safe); writes f32 directly.
# ---------------------------------------------------------------------------
def _bn_relu_kernel(y_ref, params_ref, o_ref):
    y = y_ref[...].astype(jnp.float32)
    p = params_ref[...]
    o_ref[...] = jnp.maximum(y * p[0:1, :] + p[1:2, :], 0.0)


def _im2col_ndhwc(x_ndhwc, ksize=3, stride=2, pad=1):
    """Channels-last NDHWC -> [M, 27*C] patch matrix, K ordered (kd, kh, kw, c).

    Wrapper glue: strided slices + one lane-axis concat (no minor-dim transpose).
    """
    # TODO(synk): replace with a true implicit-GEMM pass that streams the 27 taps straight
    # from the padded NDHWC tensor via the grid (no 27x A materialization in HBM).
    N, D, H, W, C = x_ndhwc.shape
    xp = jnp.pad(x_ndhwc, ((0, 0), (pad, pad), (pad, pad), (pad, pad), (0, 0)))
    Do = (D + 2 * pad - ksize) // stride + 1
    Ho = (H + 2 * pad - ksize) // stride + 1
    Wo = (W + 2 * pad - ksize) // stride + 1
    taps = []
    for kd in range(ksize):
        for kh in range(ksize):
            for kw in range(ksize):
                taps.append(
                    xp[:, kd:kd + stride * (Do - 1) + 1:stride,
                          kh:kh + stride * (Ho - 1) + 1:stride,
                          kw:kw + stride * (Wo - 1) + 1:stride, :])
    A = jnp.concatenate(taps, axis=-1)                    # [N, Do, Ho, Wo, 27*C]
    return A.reshape(N * Do * Ho * Wo, ksize ** 3 * C), (N, Do, Ho, Wo)


def transition_layer(x, w, b, gamma, beta, *, stride=2, tm1=256, tk=512, tm2=2048,
                     compute_dtype=jnp.bfloat16):
    """x: [N, Cin, D, H, W] (PyTorch NCDHW). Returns [N, Cout, Do, Ho, Wo] float32.

    Matches TransitionLayer.forward in training mode (BatchNorm3d uses batch statistics).
    `b` (Conv3d bias) is accepted for API parity but not applied: a per-channel constant
    cancels exactly in (y - mean) under training-mode BN (NOT valid for eval-mode BN).
    """
    del b  # cancels exactly under training-mode BatchNorm
    Cout, Cin = w.shape[0], w.shape[1]
    K = Cin * 27

    # NDHWC once up front (cheap relative to A); taps then concatenate on the lane axis.
    x_cl = x.astype(compute_dtype).transpose(0, 2, 3, 4, 1)
    A, (N, Do, Ho, Wo) = _im2col_ndhwc(x_cl, ksize=3, stride=stride, pad=1)
    M = N * Do * Ho * Wo

    # 256-aligned K / Cout for full-width 256x256 MXU pushes (v6e/v7x); tk must divide K_p.
    Cout_p = _round_up(Cout, 256)
    K_p = _round_up(K, 256)
    tk = min(tk, K_p)
    K_p = _round_up(K_p, tk)

    # Pass-2 tile: multiple of tm1, capped by padded M and by a conservative VMEM budget.
    tm2 = min(tm2, _round_up(M, tm1),
              max(tm1, ((24 << 20) // (Cout_p * 12)) // tm1 * tm1))
    tm2 = max(tm1, tm2 // tm1 * tm1)
    M_p = _round_up(M, tm2)          # multiple of tm2, hence of tm1

    A = jnp.pad(A, ((0, M_p - M), (0, K_p - K)))
    # Weight -> [K, Cout] with rows ordered (kd, kh, kw, cin) to match A's lane layout.
    B = jnp.pad(w.astype(compute_dtype).transpose(2, 3, 4, 1, 0).reshape(K, Cout),
                ((0, K_p - K), (0, Cout_p - Cout)))

    n_m, n_k = M_p // tm1, K_p // tk
    vmem = _vmem_limit_bytes()

    # Pass 1: K-tiled GEMM + per-tile (sum, sum^2) partial batch stats.
    # NOTE: when n_k == 1 the B block index is constant across the grid, so B is DMA'd
    # only once; pipeline_mode=pl.Buffered(1) on it would additionally reclaim the
    # second VMEM buffer (skipped here to keep lowering maximally portable).
    y, stats = pl.pallas_call(
        _conv_mm_kernel,
        out_shape=(jax.ShapeDtypeStruct((M_p, Cout_p), compute_dtype),
                   jax.ShapeDtypeStruct((n_m * 8, Cout_p), jnp.float32)),
        grid_spec=pltpu.PrefetchScalarGridSpec(
            num_scalar_prefetch=0,
            grid=(n_m, n_k),
            in_specs=[pl.BlockSpec((tm1, tk), lambda i, k: (i, k)),
                      pl.BlockSpec((tk, Cout_p), lambda i, k: (k, 0))],
            out_specs=[pl.BlockSpec((tm1, Cout_p), lambda i, k: (i, 0)),
                       pl.BlockSpec((8, Cout_p), lambda i, k: (i, 0))],
            scratch_shapes=[pltpu.VMEM((tm1, Cout_p), jnp.float32)]),
        compiler_params=pltpu.CompilerParams(
            dimension_semantics=("parallel", "arbitrary"),
            vmem_limit_bytes=vmem),
    )(A, B)

    # Scalar glue: reduce per-tile partials, fold batch stats + affine into scale/shift.
    # TODO(synk): Welford-style (count, mean, M2) merging if E[y^2]-E[y]^2 cancellation
    # ever matters (very large M with |mean| >> std).
    stats = stats.reshape(n_m, 8, Cout_p)
    sum_c = jnp.sum(stats[:, 0, :], axis=0)               # [Cout_p]
    ssq_c = jnp.sum(stats[:, 1, :], axis=0)                # [Cout_p]
    mean = sum_c / M                                       # real-row count (pads are zero)
    var = jnp.maximum(ssq_c / M - mean * mean, 0.0)        # biased var (PyTorch BN training)
    gamma_p = jnp.pad(gamma.astype(jnp.float32), (0, Cout_p - Cout))
    beta_p = jnp.pad(beta.astype(jnp.float32), (0, Cout_p - Cout))
    scale = gamma_p * jax.lax.rsqrt(var + EPS)
    shift = beta_p - mean * scale
    params = jnp.zeros((8, Cout_p), jnp.float32).at[0].set(scale).at[1].set(shift)

    # Pass 2: fused BatchNorm + ReLU, lane-dense, large tiles, f32 out (no upcast pass).
    out = pl.pallas_call(
        _bn_relu_kernel,
        out_shape=jax.ShapeDtypeStruct((M_p, Cout_p), jnp.float32),
        grid_spec=pltpu.PrefetchScalarGridSpec(
            num_scalar_prefetch=0,
            grid=(M_p // tm2,),
            in_specs=[pl.BlockSpec((tm2, Cout_p), lambda i: (i, 0)),
                      pl.BlockSpec((8, Cout_p), lambda i: (0, 0))],
            out_specs=pl.BlockSpec((tm2, Cout_p), lambda i: (i, 0))),
        compiler_params=pltpu.CompilerParams(
            dimension_semantics=("parallel",),
            vmem_limit_bytes=vmem),
    )(y, params)

    # Strip padding and go back to PyTorch NCDHW layout (already f32).
    out = out[:M, :Cout].reshape(N, Do, Ho, Wo, Cout)
    return out.transpose(0, 4, 1, 2, 3)


if __name__ == "__main__":
    key = jax.random.PRNGKey(0)
    k1, k2, k3, k4, k5 = jax.random.split(key, 5)

    N, Cin, Cout, S = 2, 4, 8, 16
    x = jax.random.normal(k1, (N, Cin, S, S, S), jnp.float32)
    w = 0.1 * jax.random.normal(k2, (Cout, Cin, 3, 3, 3), jnp.float32)
    b = 0.1 * jax.random.normal(k3, (Cout,), jnp.float32)
    gamma = 1.0 + 0.1 * jax.random.normal(k4, (Cout,), jnp.float32)
    beta = 0.1 * jax.random.normal(k5, (Cout,), jnp.float32)

    fn = jax.jit(lambda x, w, b, gamma, beta: transition_layer(x, w, b, gamma, beta))
    out = jax.block_until_ready(fn(x, w, b, gamma, beta))

    # pure-JAX f32 reference (Conv3d + bias + training-mode BN + ReLU)
    dn = jax.lax.conv_dimension_numbers(x.shape, w.shape, ('NCDHW', 'OIDHW', 'NCDHW'))
    y_ref = jax.lax.conv_general_dilated(
        x, w, (2, 2, 2), ((1, 1), (1, 1), (1, 1)), dimension_numbers=dn)
    y_ref = y_ref + b.reshape(1, -1, 1, 1, 1)
    mean = y_ref.mean(axis=(0, 2, 3, 4), keepdims=True)
    var = y_ref.var(axis=(0, 2, 3, 4), keepdims=True)
    ref = jnp.maximum(
        (y_ref - mean) / jnp.sqrt(var + EPS) * gamma.reshape(1, -1, 1, 1, 1)
        + beta.reshape(1, -1, 1, 1, 1), 0.0)

    assert out.shape == (N, Cout, S // 2, S // 2, S // 2), out.shape
    max_err = float(jnp.max(jnp.abs(out - ref)))
    mean_err = float(jnp.mean(jnp.abs(out - ref)))
    # bf16 matmul/storage vs f32 reference -> tolerances sized for bf16 rounding.
    assert max_err < 6e-2, f"max abs err {max_err}"
    assert mean_err < 1e-2, f"mean abs err {mean_err}"

    print("KERNEL_OK")
</pallas_src>

<mosaic_0001>
module attributes {stable_mosaic.version = 11 : i64} {
  func.func @_conv_mm_kernel(%arg0: i32, %arg1: i32, %arg2: memref<256x256xbf16, #tpu.memory_space<vmem>>, %arg3: memref<256x256xbf16, #tpu.memory_space<vmem>>, %arg4: memref<256x256xbf16, #tpu.memory_space<vmem>>, %arg5: memref<8x256xf32, #tpu.memory_space<vmem>>, %arg6: memref<256x256xf32, #tpu.memory_space<vmem>>) attributes {dimension_semantics = [#tpu.dimension_semantics<parallel>, #tpu.dimension_semantics<arbitrary>], iteration_bounds = array<i64: 4, 1>, scalar_prefetch = 0 : i64, scratch_operands = 1 : i64, tpu.core_type = #tpu.core_type<tc>, window_params = [{transform_indices = @transform_0, window_bounds = array<i64: 256, 256>}, {transform_indices = @transform_1, window_bounds = array<i64: 256, 256>}, {transform_indices = @transform_2, window_bounds = array<i64: 256, 256>}, {transform_indices = @transform_3, window_bounds = array<i64: 8, 256>}]} {
    %c0_i32 = arith.constant 0 : i32
    %0 = arith.cmpi eq, %arg1, %c0_i32 : i32
    %1 = arith.extui %0 : i1 to i32
    %c0_i32_0 = arith.constant 0 : i32
    %2 = arith.cmpi ne, %1, %c0_i32_0 : i32
    scf.if %2 {
      %cst_10 = arith.constant 0.000000e+00 : f32
      %12 = vector.broadcast %cst_10 : f32 to vector<256x256xf32>
      %c0_11 = arith.constant 0 : index
      %c0_12 = arith.constant 0 : index
      %13 = vector.load %arg6[%c0_11, %c0_12] : memref<256x256xf32, #tpu.memory_space<vmem>>, vector<256x256xf32>
      tpu.vector_store %arg6[%c0_11, %c0_12], %12 {strides = array<i32>} : memref<256x256xf32, #tpu.memory_space<vmem>>, vector<256x256xf32>,
    } else {
    }
    %c0 = arith.constant 0 : index
    %c0_1 = arith.constant 0 : index
    %3 = vector.load %arg6[%c0, %c0_1] : memref<256x256xf32, #tpu.memory_space<vmem>>, vector<256x256xf32>
    %c0_2 = arith.constant 0 : index
    %c0_3 = arith.constant 0 : index
    %4 = vector.load %arg2[%c0_2, %c0_3] : memref<256x256xbf16, #tpu.memory_space<vmem>>, vector<256x256xbf16>
    %c0_4 = arith.constant 0 : index
    %c0_5 = arith.constant 0 : index
    %5 = vector.load %arg3[%c0_4, %c0_5] : memref<256x256xbf16, #tpu.memory_space<vmem>>, vector<256x256xbf16>
    %cst = arith.constant dense<0.000000e+00> : vector<256x256xf32>
    %6 = tpu.matmul %4, %5, %cst {dimension_numbers = #tpu.dot_dimension_numbers<[1], [0], [0], [1], [0, 0, 1, 1], [], []>} : vector<256x256xbf16>, vector<256x256xbf16>, vector<256x256xf32> -> vector<256x256xf32>
    %7 = arith.addf %3, %6 : vector<256x256xf32>
    %c0_6 = arith.constant 0 : index
    %c0_7 = arith.constant 0 : index
    %8 = vector.load %arg6[%c0_6, %c0_7] : memref<256x256xf32, #tpu.memory_space<vmem>>, vector<256x256xf32>
    tpu.vector_store %arg6[%c0_6, %c0_7], %7 {strides = array<i32>} : memref<256x256xf32, #tpu.memory_space<vmem>>, vector<256x256xf32>,
    %c0_i32_8 = arith.constant 0 : i32
    %9 = arith.cmpi eq, %arg1, %c0_i32_8 : i32
    %10 = arith.extui %9 : i1 to i32
    %c0_i32_9 = arith.constant 0 : i32
    %11 = arith.cmpi ne, %10, %c0_i32_9 : i32
    scf.if %11 {
      %c0_10 = arith.constant 0 : index
      %c0_11 = arith.constant 0 : index
      %12 = vector.load %arg6[%c0_10, %c0_11] : memref<256x256xf32, #tpu.memory_space<vmem>>, vector<256x256xf32>
      %13 = arith.truncf %12 : vector<256x256xf32> to vector<256x256xbf16>
      %c0_12 = arith.constant 0 : index
      %c0_13 = arith.constant 0 : index
      %14 = vector.load %arg4[%c0_12, %c0_13] : memref<256x256xbf16, #tpu.memory_space<vmem>>, vector<256x256xbf16>
      tpu.vector_store %arg4[%c0_12, %c0_13], %13 {strides = array<i32>} : memref<256x256xbf16, #tpu.memory_space<vmem>>, vector<256x256xbf16>,
      %cst_14 = arith.constant dense<0.000000e+00> : vector<256xf32>
      %15 = vector.multi_reduction <add>, %12, %cst_14 [0] : vector<256x256xf32> to vector<256xf32>
      %16 = vector.shape_cast %15 : vector<256xf32> to vector<1x256xf32>
      %17 = arith.mulf %12, %12 : vector<256x256xf32>
      %cst_15 = arith.constant dense<0.000000e+00> : vector<256xf32>
      %18 = vector.multi_reduction <add>, %17, %cst_15 [0] : vector<256x256xf32> to vector<256xf32>
      %19 = vector.shape_cast %18 : vector<256xf32> to vector<1x256xf32>
      %cst_16 = arith.constant 0.000000e+00 : f32
      %20 = vector.broadcast %cst_16 : f32 to vector<6x256xf32>
      %21 = tpu.concatenate %16, %19, %20 in 0 : vector<1x256xf32>, vector<1x256xf32>, vector<6x256xf32> -> vector<8x256xf32>
      %c0_17 = arith.constant 0 : index
      %c0_18 = arith.constant 0 : index
      %22 = vector.load %arg5[%c0_17, %c0_18] : memref<8x256xf32, #tpu.memory_space<vmem>>, vector<8x256xf32>
      tpu.vector_store %arg5[%c0_17, %c0_18], %21 {strides = array<i32>} : memref<8x256xf32, #tpu.memory_space<vmem>>, vector<8x256xf32>,
    } else {
    }
    return
  }
  func.func @transform_0(%arg0: i32, %arg1: i32) -> (i32, i32) {
    %c0_i32 = arith.constant 0 : i32
    return %arg0, %arg1 : i32, i32
  }
  func.func @transform_1(%arg0: i32, %arg1: i32) -> (i32, i32) {
    %c0_i32 = arith.constant 0 : i32
    %c0_i32_0 = arith.constant 0 : i32
    return %arg1, %c0_i32 : i32, i32
  }
  func.func @transform_2(%arg0: i32, %arg1: i32) -> (i32, i32) {
    %c0_i32 = arith.constant 0 : i32
    %c0_i32_0 = arith.constant 0 : i32
    return %arg0, %c0_i32 : i32, i32
  }
  func.func @transform_3(%arg0: i32, %arg1: i32) -> (i32, i32) {
    %c0_i32 = arith.constant 0 : i32
    %c0_i32_0 = arith.constant 0 : i32
    return %arg0, %c0_i32 : i32, i32
  }
}

module attributes {stable_mosaic.version = 11 : i64} {
  func.func @_bn_relu_kernel(%arg0: i32, %arg1: memref<1024x256xbf16, #tpu.memory_space<vmem>>, %arg2: memref<8x256xf32, #tpu.memory_space<vmem>>, %arg3: memref<1024x256xf32, #tpu.memory_space<vmem>>) attributes {dimension_semantics = [#tpu.dimension_semantics<parallel>], iteration_bounds = array<i64: 1>, scalar_prefetch = 0 : i64, scratch_operands = 0 : i64, tpu.core_type = #tpu.core_type<tc>, window_params = [{transform_indices = @transform_0, window_bounds = array<i64: 1024, 256>}, {pipeline_mode = #tpu.pipeline_mode<synchronous>, transform_indices = @transform_1, window_bounds = array<i64: 8, 256>}, {transform_indices = @transform_2, window_bounds = array<i64: 1024, 256>}]} {
    %c0 = arith.constant 0 : index
    %c0_0 = arith.constant 0 : index
    %0 = vector.load %arg1[%c0, %c0_0] : memref<1024x256xbf16, #tpu.memory_space<vmem>>, vector<1024x256xbf16>
    %1 = arith.extf %0 : vector<1024x256xbf16> to vector<1024x256xf32>
    %c0_1 = arith.constant 0 : index
    %c0_2 = arith.constant 0 : index
    %2 = vector.load %arg2[%c0_1, %c0_2] : memref<8x256xf32, #tpu.memory_space<vmem>>, vector<8x256xf32>
    %3 = vector.extract_strided_slice %2 {offsets = [0, 0], sizes = [1, 256], strides = [1, 1]} : vector<8x256xf32> to vector<1x256xf32>
    %4 = vector.broadcast %3 : vector<1x256xf32> to vector<1024x256xf32>
    %5 = arith.mulf %1, %4 : vector<1024x256xf32>
    %6 = vector.extract_strided_slice %2 {offsets = [1, 0], sizes = [1, 256], strides = [1, 1]} : vector<8x256xf32> to vector<1x256xf32>
    %7 = vector.broadcast %6 : vector<1x256xf32> to vector<1024x256xf32>
    %8 = arith.addf %5, %7 : vector<1024x256xf32>
    %cst = arith.constant 0.000000e+00 : f32
    %9 = vector.broadcast %cst : f32 to vector<1024x256xf32>
    %10 = arith.maximumf %8, %9 : vector<1024x256xf32>
    %c0_3 = arith.constant 0 : index
    %c0_4 = arith.constant 0 : index
    %11 = vector.load %arg3[%c0_3, %c0_4] : memref<1024x256xf32, #tpu.memory_space<vmem>>, vector<1024x256xf32>
    tpu.vector_store %arg3[%c0_3, %c0_4], %10 {strides = array<i32>} : memref<1024x256xf32, #tpu.memory_space<vmem>>, vector<1024x256xf32>,
    return
  }
  func.func @transform_0(%arg0: i32) -> (i32, i32) {
    %c0_i32 = arith.constant 0 : i32
    %c0_i32_0 = arith.constant 0 : i32
    return %arg0, %c0_i32 : i32, i32
  }
  func.func @transform_1(%arg0: i32) -> (i32, i32) {
    %c0_i32 = arith.constant 0 : i32
    %c0_i32_0 = arith.constant 0 : i32
    %c0_i32_1 = arith.constant 0 : i32
    return %c0_i32, %c0_i32_0 : i32, i32
  }
  func.func @transform_2(%arg0: i32) -> (i32, i32) {
    %c0_i32 = arith.constant 0 : i32
    %c0_i32_0 = arith.constant 0 : i32
    return %arg0, %c0_i32 : i32, i32
  }
}

</mosaic_0001>

<llo_original>
// kernel: _lambda_.2
$region0: #{_lambda_.2}
  #allocation0 [shape = 'u32[]', space=smem, size = 0x4, offset = 0x4, fixed_abs, tag = 'smem constant byte address 0x4 - core index']
  #allocation1 [shape = 'u32[144,128]{1,0:T(1,128)}', space=vmem, size = 0x12000, scoped, tag = 'internal scratch']
  #allocation2 [shape = 'f32[256,256]{1,0:T(8,128)}', space=vmem, size = 0x40000, scoped, tag = 'scratch operand']
  %s0 = inlined_call_operand.vmem [shape: bf16[1024,256], index: 0, kind: input, shape index: {}]
  %s1 = inlined_call_operand.vmem [shape: bf16[256,256], index: 1, kind: input, shape index: {}]
  %s2 = inlined_call_operand.vmem [shape: bf16[1024,256], index: 2, kind: output, shape index: {0}]
  %s3 = inlined_call_operand.vmem [shape: f32[32,256], index: 3, kind: output, shape index: {1}]
  %4 = xla_tuple %s2, %s3
  %s5 = sld [smem:[#allocation0]]
  $region57: #{_lambda_.2} parent=0
    _
  %s7 = ssub.s32 1, %s5
  %s8 = scalar_select 0, %s7, %s5
  loop: start=0, step=1, limit=6
  $region2: #{_lambda_.2} parent=0 // loop_pre_header
    _
  $region3: #{_lambda_.2} parent=0 // loop_header
    %s10 = sphi 0, %s14
    %p11 = scmp.ge.s32.totalorder %s10, 6
    %s17 = sphi 0, %s29
    %s18 = sphi 0, %s25
    %s19 = sphi 0, %s17
    %s20 = sphi 0, %s18
    %s21 = sphi 0, %s19
    %s22 = sphi 0, %s20
    %s34 = sphi 0, %s36
    %s37 = sphi 0, %s34
    %s38 = sphi 0, %s37
    %s54 = sphi 0, %s38
    %s60 = sphi 0, %s62
    %s63 = sphi 0, %s60
    %s64 = sphi 0, %s63
    %s80 = sphi 0, %s64
    %s86 = sphi 0, %s88
    %s89 = sphi 0, %s86
    %s90 = sphi 0, %s89
    %s106 = sphi 0, %s90
    %s112 = sphi 0, %s114
    %s115 = sphi 0, %s112
    %s116 = sphi 0, %s115
    %s132 = sphi 0, %s116
  $region4: #{_lambda_.2} parent=0 // loop_header_branch
    %13 = sbr.rel (%p11) target = $region8
  $region5: #{_lambda_.2} parent=0 // loop_body
    %s15 = ssub.s32 %s10, 1
    %s16 = ssub.s32 %s10, 2
    %s23 = sadd.s32 1, %s18
    %p24 = scmp.ge.s32.totalorder %s23, 1
    %s25 = scalar_select %p24, 0, %s23
    %s26 = sadd.s32 1, %s17
    %s27 = scalar_select %p24, %s26, %s17
    %p28 = scmp.ge.s32.totalorder %s27, 4
    %s29 = scalar_select %p28, 0, %s27
    %s30 = ssub.s32 %s17, %s29
    %s31 = ssub.s32 %s18, %s25
    %s32 = sor.u32 %s30, %s31
    %p33 = scmp.eq.s32.totalorder %s32, 0
    %s35 = sadd.s32 %s34, 1
    %s36 = scalar_select %p33, %s34, %s35
    %p39 = pneg %p33
    %p40 = scmp.eq.s32.totalorder %s10, 3
    %p41 = por %p39, %p40
    %p42 = scmp.ne.s32.totalorder %s34, %s37
    %p43 = scmp.eq.s32.totalorder %s10, 0
    %p44 = por %p42, %p43
    %p45 = scmp.ne.s32.totalorder %s34, %s37
    %p46 = scmp.eq.s32.totalorder %s15, 3
    %p47 = por %p45, %p46
    %p48 = scmp.ne.s32.totalorder %s37, %s38
    %p49 = scmp.eq.s32.totalorder %s15, 0
    %p50 = por %p48, %p49
    %p51 = scmp.ne.s32.totalorder %s37, %s38
    %p52 = scmp.eq.s32.totalorder %s16, 3
    %p53 = por %p51, %p52
    %p55 = scmp.ne.s32.totalorder %s38, %s54
    %p56 = scmp.eq.s32.totalorder %s16, 0
    %p57 = por %p55, %p56
    %s58 = ssub.s32 %s18, %s25
    %p59 = scmp.eq.s32.totalorder %s58, 0
    %s61 = sadd.s32 %s60, 1
    %s62 = scalar_select %p59, %s60, %s61
    %p65 = pneg %p59
    %p66 = scmp.eq.s32.totalorder %s10, 3
    %p67 = por %p65, %p66
    %p68 = scmp.ne.s32.totalorder %s60, %s63
    %p69 = scmp.eq.s32.totalorder %s10, 0
    %p70 = por %p68, %p69
    %p71 = scmp.ne.s32.totalorder %s60, %s63
    %p72 = scmp.eq.s32.totalorder %s15, 3
    %p73 = por %p71, %p72
    %p74 = scmp.ne.s32.totalorder %s63, %s64
    %p75 = scmp.eq.s32.totalorder %s15, 0
    %p76 = por %p74, %p75
    %p77 = scmp.ne.s32.totalorder %s63, %s64
    %p78 = scmp.eq.s32.totalorder %s16, 3
    %p79 = por %p77, %p78
    %p81 = scmp.ne.s32.totalorder %s64, %s80
    %p82 = scmp.eq.s32.totalorder %s16, 0
    %p83 = por %p81, %p82
    %s84 = ssub.s32 %s17, %s29
    %p85 = scmp.eq.s32.totalorder %s84, 0
    %s87 = sadd.s32 %s86, 1
    %s88 = scalar_select %p85, %s86, %s87
    %p91 = pneg %p85
    %p92 = scmp.eq.s32.totalorder %s10, 3
    %p93 = por %p91, %p92
    %p94 = scmp.ne.s32.totalorder %s86, %s89
    %p95 = scmp.eq.s32.totalorder %s10, 0
    %p96 = por %p94, %p95
    %p97 = scmp.ne.s32.totalorder %s86, %s89
    %p98 = scmp.eq.s32.totalorder %s15, 3
    %p99 = por %p97, %p98
    %p100 = scmp.ne.s32.totalorder %s89, %s90
    %p101 = scmp.eq.s32.totalorder %s15, 0
    %p102 = por %p100, %p101
    %p103 = scmp.ne.s32.totalorder %s89, %s90
    %p104 = scmp.eq.s32.totalorder %s16, 3
    %p105 = por %p103, %p104
    %p107 = scmp.ne.s32.totalorder %s90, %s106
    %p108 = scmp.eq.s32.totalorder %s16, 0
    %p109 = por %p107, %p108
    %s110 = ssub.s32 %s17, %s29
    %p111 = scmp.eq.s32.totalorder %s110, 0
    %s113 = sadd.s32 %s112, 1
    %s114 = scalar_select %p111, %s112, %s113
    %p117 = pneg %p111
    %p118 = scmp.eq.s32.totalorder %s10, 3
    %p119 = por %p117, %p118
    %p120 = scmp.ne.s32.totalorder %s112, %s115
    %p121 = scmp.eq.s32.totalorder %s10, 0
    %p122 = por %p120, %p121
    %p123 = scmp.ne.s32.totalorder %s112, %s115
    %p124 = scmp.eq.s32.totalorder %s15, 3
    %p125 = por %p123, %p124
    %p126 = scmp.ne.s32.totalorder %s115, %s116
    %p127 = scmp.eq.s32.totalorder %s15, 0
    %p128 = por %p126, %p127
    %p129 = scmp.ne.s32.totalorder %s115, %s116
    %p130 = scmp.eq.s32.totalorder %s16, 3
    %p131 = por %p129, %p130
    %p133 = scmp.ne.s32.totalorder %s116, %s132
    %p134 = scmp.eq.s32.totalorder %s16, 0
    %p135 = por %p133, %p134
    %p136 = scmp.le.s32.totalorder 1, %s10
    %p137 = scmp.lt.s32.totalorder %s10, 5
    %p138 = pnand %p136, %p137
    %p139 = pneg %p138
    // Predicated region
    $region9: #{_lambda_.2} parent=5 // pred_check
      _
    $region10: #{_lambda_.2} parent=5 // pred_check_branch
      %141 = sbr.rel (%p138) target = $region12
    $region11: #{_lambda_.2} parent=5 // pred_region
      %s142 = ssub.s32 %s10, 1
      // Predicated region
      $region13: #{_lambda_.2} parent=11 // pred_check
        %p143 = pneg %p76
      $region14: #{_lambda_.2} parent=11 // pred_check_branch
        %145 = sbr.rel (%p143) target = $region16
      $region15: #{_lambda_.2} parent=11 // pred_region
        %s146 = smul.u32 32, %s20
        %p147 = scmp.lt.s32.totalorder %s146, 31
        %s148 = scalar_select %p147, %s146, 31
        %s149 = smul.addr %s148, 2
        %s150 = smul.addr %s149, 4
        %s151 = scalar_lea.vmem %s1, %s150
        %s152 = smul.u32 32, %s20
      $region16: #{_lambda_.2} parent=11 // pred_fallthru
        _
    $region12: #{_lambda_.2} parent=5 // pred_fallthru
      _
    %p153 = scmp.lt.s32.totalorder %s10, 4
    // Predicated region
    $region17: #{_lambda_.2} parent=5 // pred_check
      %p154 = pneg %p153
    $region18: #{_lambda_.2} parent=5 // pred_check_branch
      %156 = sbr.rel (%p154) target = $region20
    $region19: #{_lambda_.2} parent=5 // pred_region
      // Predicated region
      $region21: #{_lambda_.2} parent=19 // pred_check
        %p157 = pneg %p44
      $region22: #{_lambda_.2} parent=19 // pred_check_branch
        %159 = sbr.rel (%p157) target = $region24
      $region23: #{_lambda_.2} parent=19 // pred_region
        %s160 = smul.u32 32, %s17
        %s161 = smul.u32 2, %s18
        %p162 = scmp.lt.s32.totalorder %s160, 127
        %s163 = scalar_select %p162, %s160, 127
        %p164 = scmp.lt.s32.totalorder %s161, 1
        %s165 = scalar_select %p164, %s161, 1
        %s166 = smul.addr %s163, 2
        %s167 = sadd.s32 %s165, %s166
        %s168 = smul.addr %s167, 4
        %s169 = scalar_lea.vmem %s0, %s168
        %s170 = smul.u32 32, %s17
        %s171 = smul.u32 2, %s18
      $region24: #{_lambda_.2} parent=19 // pred_fallthru
        _
    $region20: #{_lambda_.2} parent=5 // pred_fallthru
      _
    %p172 = scmp.le.s32.totalorder 1, %s10
    %p173 = scmp.lt.s32.totalorder %s10, 5
    %p174 = pnand %p172, %p173
    %p175 = pneg %p174
    // Predicated region
    $region25: #{_lambda_.2} parent=5 // pred_check
      _
    $region26: #{_lambda_.2} parent=5 // pred_check_branch
      %177 = sbr.rel (%p174) target = $region28
    $region27: #{_lambda_.2} parent=5 // pred_region
      %s178 = ssub.s32 %s10, 1
      %s179 = smul.u32 32, %s19
      %s180 = smul.u32 2, %s20
      %p181 = scmp.lt.s32.totalorder %s179, 127
      %s182 = scalar_select %p181, %s179, 127
      %p183 = scmp.lt.s32.totalorder %s180, 1
      %s184 = scalar_select %p183, %s180, 1
      %s185 = smul.addr %s182, 2
      %s186 = sadd.s32 %s184, %s185
      %s187 = smul.addr %s186, 4
      %s188 = scalar_lea.vmem %s0, %s187
      %p189 = pneg %p50
      %p190 = pneg %p47
      %s191 = smul.u32 32, %s20
      %p192 = scmp.lt.s32.totalorder %s191, 31
      %s193 = scalar_select %p192, %s191, 31
      %s194 = smul.addr %s193, 2
      %s195 = smul.addr %s194, 4
      %s196 = scalar_lea.vmem %s1, %s195
      %p197 = pneg %p76
      %p198 = pneg %p73
      %p199 = pneg %p102
      %p200 = pneg %p99
      %s201 = smul.u32 32, %s19
      %p202 = scmp.lt.s32.totalorder %s201, 127
      %s203 = scalar_select %p202, %s201, 127
      %s204 = smul.addr %s203, 2
      %s205 = smul.addr %s204, 4
      %s206 = scalar_lea.vmem %s2, %s205
      %p207 = pneg %p128
      %p208 = pneg %p125
      %p209 = scmp.lt.s32.totalorder %s19, 3
      %s210 = scalar_select %p209, %s19, 3
      %s211 = smul.addr %s210, 2
      %s212 = smul.addr %s211, 8
      %s213 = scalar_lea.vmem %s3, %s212
      %s214 = smul.u32 32, %s19
      %s215 = smul.u32 2, %s20
      %p216 = scmp.lt.s32.totalorder %s214, 127
      %s217 = scalar_select %p216, %s214, 127
      %p218 = scmp.lt.s32.totalorder %s215, 1
      %s219 = scalar_select %p218, %s215, 1
      %s220 = smul.addr %s217, 2
      %s221 = sadd.s32 %s219, %s220
      %s222 = smul.addr %s221, 4
      %s223 = scalar_lea.vmem %s0, %s222
      %s224 = smul.u32 32, %s19
      %s225 = smul.u32 2, %s20
      %s226 = smul.u32 32, %s20
      %p227 = scmp.lt.s32.totalorder %s226, 31
      %s228 = scalar_select %p227, %s226, 31
      %s229 = smul.addr %s228, 2
      %s230 = smul.addr %s229, 4
      %s231 = scalar_lea.vmem %s1, %s230
      %s232 = smul.u32 32, %s20
      %s233 = smul.u32 32, %s19
      %p234 = scmp.lt.s32.totalorder %s233, 127
      %s235 = scalar_select %p234, %s233, 127
      %s236 = smul.addr %s235, 2
      %s237 = smul.addr %s236, 4
      %s238 = scalar_lea.vmem %s2, %s237
      %s239 = smul.u32 32, %s19
      %p240 = scmp.lt.s32.totalorder %s19, 3
      %s241 = scalar_select %p240, %s19, 3
      %s242 = smul.addr %s241, 2
      %s243 = smul.addr %s242, 8
      %s244 = scalar_lea.vmem %s3, %s243
      %p245 = scmp.eq.s32.totalorder %s20, 0
      // Predicated region
      $region29: #{_lambda_.2} parent=27 // pred_check
        %p246 = pneg %p245
      $region30: #{_lambda_.2} parent=27 // pred_check_branch
        %248 = sbr.rel (%p246) target = $region32
      $region31: #{_lambda_.2} parent=27 // pred_region
        %249 = vst [vmem:[#allocation2] sm:$0xff] 0.0
        %250 = vst [vmem:[#allocation2 + $0x8] sm:$0xff] 0.0
        %251 = vst [vmem:[#allocation2 + $0x10] sm:$0xff] 0.0
        %252 = vst [vmem:[#allocation2 + $0x18] sm:$0xff] 0.0
        %253 = vst [vmem:[#allocation2 + $0x20] sm:$0xff] 0.0
        %254 = vst [vmem:[#allocation2 + $0x28] sm:$0xff] 0.0
        %255 = vst [vmem:[#allocation2 + $0x30] sm:$0xff] 0.0
        %256 = vst [vmem:[#allocation2 + $0x38] sm:$0xff] 0.0
        %257 = vst [vmem:[#allocation2 + $0x40] sm:$0xff] 0.0
        %258 = vst [vmem:[#allocation2 + $0x48] sm:$0xff] 0.0
        %259 = vst [vmem:[#allocation2 + $0x50] sm:$0xff] 0.0
        %260 = vst [vmem:[#allocation2 + $0x58] sm:$0xff] 0.0
        %261 = vst [vmem:[#allocation2 + $0x60] sm:$0xff] 0.0
        %262 = vst [vmem:[#allocation2 + $0x68] sm:$0xff] 0.0
        %263 = vst [vmem:[#allocation2 + $0x70] sm:$0xff] 0.0
        %264 = vst [vmem:[#allocation2 + $0x78] sm:$0xff] 0.0
        %265 = vst [vmem:[#allocation2 + $0x80] sm:$0xff] 0.0
        %266 = vst [vmem:[#allocation2 + $0x88] sm:$0xff] 0.0
        %267 = vst [vmem:[#allocation2 + $0x90] sm:$0xff] 0.0
        %268 = vst [vmem:[#allocation2 + $0x98] sm:$0xff] 0.0
        %269 = vst [vmem:[#allocation2 + $0xa0] sm:$0xff] 0.0
        %270 = vst [vmem:[#allocation2 + $0xa8] sm:$0xff] 0.0
        %271 = vst [vmem:[#allocation2 + $0xb0] sm:$0xff] 0.0
        %272 = vst [vmem:[#allocation2 + $0xb8] sm:$0xff] 0.0
        %273 = vst [vmem:[#allocation2 + $0xc0] sm:$0xff] 0.0
        %274 = vst [vmem:[#allocation2 + $0xc8] sm:$0xff] 0.0
        %275 = vst [vmem:[#allocation2 + $0xd0] sm:$0xff] 0.0
        %276 = vst [vmem:[#allocation2 + $0xd8] sm:$0xff] 0.0
        %277 = vst [vmem:[#allocation2 + $0xe0] sm:$0xff] 0.0
        %278 = vst [vmem:[#allocation2 + $0xe8] sm:$0xff] 0.0
        %279 = vst [vmem:[#allocation2 + $0xf0] sm:$0xff] 0.0
        %280 = vst [vmem:[#allocation2 + $0xf8] sm:$0xff] 0.0
        %281 = vst [vmem:[#allocation2 + $0x100] sm:$0xff] 0.0
        %282 = vst [vmem:[#allocation2 + $0x108] sm:$0xff] 0.0
        %283 = vst [vmem:[#allocation2 + $0x110] sm:$0xff] 0.0
        %284 = vst [vmem:[#allocation2 + $0x118] sm:$0xff] 0.0
        %285 = vst [vmem:[#allocation2 + $0x120] sm:$0xff] 0.0
        %286 = vst [vmem:[#allocation2 + $0x128] sm:$0xff] 0.0
        %287 = vst [vmem:[#allocation2 + $0x130] sm:$0xff] 0.0
        %288 = vst [vmem:[#allocation2 + $0x138] sm:$0xff] 0.0
        %289 = vst [vmem:[#allocation2 + $0x140] sm:$0xff] 0.0
        %290 = vst [vmem:[#allocation2 + $0x148] sm:$0xff] 0.0
        %291 = vst [vmem:[#allocation2 + $0x150] sm:$0xff] 0.0
        %292 = vst [vmem:[#allocation2 + $0x158] sm:$0xff] 0.0
        %293 = vst [vmem:[#allocation2 + $0x160] sm:$0xff] 0.0
        %294 = vst [vmem:[#allocation2 + $0x168] sm:$0xff] 0.0
        %295 = vst [vmem:[#allocation2 + $0x170] sm:$0xff] 0.0
        %296 = vst [vmem:[#allocation2 + $0x178] sm:$0xff] 0.0
        %297 = vst [vmem:[#allocation2 + $0x180] sm:$0xff] 0.0
        %298 = vst [vmem:[#allocation2 + $0x188] sm:$0xff] 0.0
        %299 = vst [vmem:[#allocation2 + $0x190] sm:$0xff] 0.0
        %300 = vst [vmem:[#allocation2 + $0x198] sm:$0xff] 0.0
        %301 = vst [vmem:[#allocation2 + $0x1a0] sm:$0xff] 0.0
        %302 = vst [vmem:[#allocation2 + $0x1a8] sm:$0xff] 0.0
        %303 = vst [vmem:[#allocation2 + $0x1b0] sm:$0xff] 0.0
        %304 = vst [vmem:[#allocation2 + $0x1b8] sm:$0xff] 0.0
        %305 = vst [vmem:[#allocation2 + $0x1c0] sm:$0xff] 0.0
        %306 = vst [vmem:[#allocation2 + $0x1c8] sm:$0xff] 0.0
        %307 = vst [vmem:[#allocation2 + $0x1d0] sm:$0xff] 0.0
        %308 = vst [vmem:[#allocation2 + $0x1d8] sm:$0xff] 0.0
        %309 = vst [vmem:[#allocation2 + $0x1e0] sm:$0xff] 0.0
        %310 = vst [vmem:[#allocation2 + $0x1e8] sm:$0xff] 0.0
        %311 = vst [vmem:[#allocation2 + $0x1f0] sm:$0xff] 0.0
        %312 = vst [vmem:[#allocation2 + $0x1f8] sm:$0xff] 0.0
      $region32: #{_lambda_.2} parent=27 // pred_fallthru
        _
      %v313 = vld [vmem:[#allocation2] sm:$0xff]
      %v314 = vld [vmem:[#allocation2 + $0x8] sm:$0xff]
      %v315 = vld [vmem:[#allocation2 + $0x10] sm:$0xff]
      %v316 = vld [vmem:[#allocation2 + $0x18] sm:$0xff]
      %v317 = vld [vmem:[#allocation2 + $0x20] sm:$0xff]
      %v318 = vld [vmem:[#allocation2 + $0x28] sm:$0xff]
      %v319 = vld [vmem:[#allocation2 + $0x30] sm:$0xff]
      %v320 = vld [vmem:[#allocation2 + $0x38] sm:$0xff]
      %v321 = vld [vmem:[#allocation2 + $0x40] sm:$0xff]
      %v322 = vld [vmem:[#allocation2 + $0x48] sm:$0xff]
      %v323 = vld [vmem:[#allocation2 + $0x50] sm:$0xff]
      %v324 = vld [vmem:[#allocation2 + $0x58] sm:$0xff]
      %v325 = vld [vmem:[#allocation2 + $0x60] sm:$0xff]
      %v326 = vld [vmem:[#allocation2 + $0x68] sm:$0xff]
      %v327 = vld [vmem:[#allocation2 + $0x70] sm:$0xff]
      %v328 = vld [vmem:[#allocation2 + $0x78] sm:$0xff]
      %v329 = vld [vmem:[#allocation2 + $0x80] sm:$0xff]
      %v330 = vld [vmem:[#allocation2 + $0x88] sm:$0xff]
      %v331 = vld [vmem:[#allocation2 + $0x90] sm:$0xff]
      %v332 = vld [vmem:[#allocation2 + $0x98] sm:$0xff]
      %v333 = vld [vmem:[#allocation2 + $0xa0] sm:$0xff]
      %v334 = vld [vmem:[#allocation2 + $0xa8] sm:$0xff]
      %v335 = vld [vmem:[#allocation2 + $0xb0] sm:$0xff]
      %v336 = vld [vmem:[#allocation2 + $0xb8] sm:$0xff]
      %v337 = vld [vmem:[#allocation2 + $0xc0] sm:$0xff]
      %v338 = vld [vmem:[#allocation2 + $0xc8] sm:$0xff]
      %v339 = vld [vmem:[#allocation2 + $0xd0] sm:$0xff]
      %v340 = vld [vmem:[#allocation2 + $0xd8] sm:$0xff]
      %v341 = vld [vmem:[#allocation2 + $0xe0] sm:$0xff]
      %v342 = vld [vmem:[#allocation2 + $0xe8] sm:$0xff]
      %v343 = vld [vmem:[#allocation2 + $0xf0] sm:$0xff]
      %v344 = vld [vmem:[#allocation2 + $0xf8] sm:$0xff]
      %v345 = vld [vmem:[#allocation2 + $0x100] sm:$0xff]
      %v346 = vld [vmem:[#allocation2 + $0x108] sm:$0xff]
      %v347 = vld [vmem:[#allocation2 + $0x110] sm:$0xff]
      %v348 = vld [vmem:[#allocation2 + $0x118] sm:$0xff]
      %v349 = vld [vmem:[#allocation2 + $0x120] sm:$0xff]
      %v350 = vld [vmem:[#allocation2 + $0x128] sm:$0xff]
      %v351 = vld [vmem:[#allocation2 + $0x130] sm:$0xff]
      %v352 = vld [vmem:[#allocation2 + $0x138] sm:$0xff]
      %v353 = vld [vmem:[#allocation2 + $0x140] sm:$0xff]
      %v354 = vld [vmem:[#allocation2 + $0x148] sm:$0xff]
      %v355 = vld [vmem:[#allocation2 + $0x150] sm:$0xff]
      %v356 = vld [vmem:[#allocation2 + $0x158] sm:$0xff]
      %v357 = vld [vmem:[#allocation2 + $0x160] sm:$0xff]
      %v358 = vld [vmem:[#allocation2 + $0x168] sm:$0xff]
      %v359 = vld [vmem:[#allocation2 + $0x170] sm:$0xff]
      %v360 = vld [vmem:[#allocation2 + $0x178] sm:$0xff]
      %v361 = vld [vmem:[#allocation2 + $0x180] sm:$0xff]
      %v362 = vld [vmem:[#allocation2 + $0x188] sm:$0xff]
      %v363 = vld [vmem:[#allocation2 + $0x190] sm:$0xff]
      %v364 = vld [vmem:[#allocation2 + $0x198] sm:$0xff]
      %v365 = vld [vmem:[#allocation2 + $0x1a0] sm:$0xff]
      %v366 = vld [vmem:[#allocation2 + $0x1a8] sm:$0xff]
      %v367 = vld [vmem:[#allocation2 + $0x1b0] sm:$0xff]
      %v368 = vld [vmem:[#allocation2 + $0x1b8] sm:$0xff]
      %v369 = vld [vmem:[#allocation2 + $0x1c0] sm:$0xff]
      %v370 = vld [vmem:[#allocation2 + $0x1c8] sm:$0xff]
      %v371 = vld [vmem:[#allocation2 + $0x1d0] sm:$0xff]
      %v372 = vld [vmem:[#allocation2 + $0x1d8] sm:$0xff]
      %v373 = vld [vmem:[#allocation2 + $0x1e0] sm:$0xff]
      %v374 = vld [vmem:[#allocation2 + $0x1e8] sm:$0xff]
      %v375 = vld [vmem:[#allocation2 + $0x1f0] sm:$0xff]
      %v376 = vld [vmem:[#allocation2 + $0x1f8] sm:$0xff]
      %v377 = vld [vmem:[%s223] sm:$0xff]
      %v378 = vld [vmem:[%s223 + $0x8] sm:$0xff]
      %v379 = vld [vmem:[%s223 + $0x10] sm:$0xff]
      %v380 = vld [vmem:[%s223 + $0x18] sm:$0xff]
      %v381 = vld [vmem:[%s223 + $0x20] sm:$0xff]
      %v382 = vld [vmem:[%s223 + $0x28] sm:$0xff]
      %v383 = vld [vmem:[%s223 + $0x30] sm:$0xff]
      %v384 = vld [vmem:[%s223 + $0x38] sm:$0xff]
      %v385 = vld [vmem:[%s223 + $0x40] sm:$0xff]
      %v386 = vld [vmem:[%s223 + $0x48] sm:$0xff]
      %v387 = vld [vmem:[%s223 + $0x50] sm:$0xff]
      %v388 = vld [vmem:[%s223 + $0x58] sm:$0xff]
      %v389 = vld [vmem:[%s223 + $0x60] sm:$0xff]
      %v390 = vld [vmem:[%s223 + $0x68] sm:$0xff]
      %v391 = vld [vmem:[%s223 + $0x70] sm:$0xff]
      %v392 = vld [vmem:[%s223 + $0x78] sm:$0xff]
      %v393 = vld [vmem:[%s223 + $0x80] sm:$0xff]
      %v394 = vld [vmem:[%s223 + $0x88] sm:$0xff]
      %v395 = vld [vmem:[%s223 + $0x90] sm:$0xff]
      %v396 = vld [vmem:[%s223 + $0x98] sm:$0xff]
      %v397 = vld [vmem:[%s223 + $0xa0] sm:$0xff]
      %v398 = vld [vmem:[%s223 + $0xa8] sm:$0xff]
      %v399 = vld [vmem:[%s223 + $0xb0] sm:$0xff]
      %v400 = vld [vmem:[%s223 + $0xb8] sm:$0xff]
      %v401 = vld [vmem:[%s223 + $0xc0] sm:$0xff]
      %v402 = vld [vmem:[%s223 + $0xc8] sm:$0xff]
      %v403 = vld [vmem:[%s223 + $0xd0] sm:$0xff]
      %v404 = vld [vmem:[%s223 + $0xd8] sm:$0xff]
      %v405 = vld [vmem:[%s223 + $0xe0] sm:$0xff]
      %v406 = vld [vmem:[%s223 + $0xe8] sm:$0xff]
      %v407 = vld [vmem:[%s223 + $0xf0] sm:$0xff]
      %v408 = vld [vmem:[%s223 + $0xf8] sm:$0xff]
      %v409 = vld [vmem:[%s231] sm:$0xff]
      %v410 = vld [vmem:[%s231 + $0x8] sm:$0xff]
      %v411 = vld [vmem:[%s231 + $0x10] sm:$0xff]
      %v412 = vld [vmem:[%s231 + $0x18] sm:$0xff]
      %v413 = vld [vmem:[%s231 + $0x20] sm:$0xff]
      %v414 = vld [vmem:[%s231 + $0x28] sm:$0xff]
      %v415 = vld [vmem:[%s231 + $0x30] sm:$0xff]
      %v416 = vld [vmem:[%s231 + $0x38] sm:$0xff]
      %v417 = vld [vmem:[%s231 + $0x40] sm:$0xff]
      %v418 = vld [vmem:[%s231 + $0x48] sm:$0xff]
      %v419 = vld [vmem:[%s231 + $0x50] sm:$0xff]
      %v420 = vld [vmem:[%s231 + $0x58] sm:$0xff]
      %v421 = vld [vmem:[%s231 + $0x60] sm:$0xff]
      %v422 = vld [vmem:[%s231 + $0x68] sm:$0xff]
      %v423 = vld [vmem:[%s231 + $0x70] sm:$0xff]
      %v424 = vld [vmem:[%s231 + $0x78] sm:$0xff]
      %v425 = vld [vmem:[%s231 + $0x80] sm:$0xff]
      %v426 = vld [vmem:[%s231 + $0x88] sm:$0xff]
      %v427 = vld [vmem:[%s231 + $0x90] sm:$0xff]
      %v428 = vld [vmem:[%s231 + $0x98] sm:$0xff]
      %v429 = vld [vmem:[%s231 + $0xa0] sm:$0xff]
      %v430 = vld [vmem:[%s231 + $0xa8] sm:$0xff]
      %v431 = vld [vmem:[%s231 + $0xb0] sm:$0xff]
      %v432 = vld [vmem:[%s231 + $0xb8] sm:$0xff]
      %v433 = vld [vmem:[%s231 + $0xc0] sm:$0xff]
      %v434 = vld [vmem:[%s231 + $0xc8] sm:$0xff]
      %v435 = vld [vmem:[%s231 + $0xd0] sm:$0xff]
      %v436 = vld [vmem:[%s231 + $0xd8] sm:$0xff]
      %v437 = vld [vmem:[%s231 + $0xe0] sm:$0xff]
      %v438 = vld [vmem:[%s231 + $0xe8] sm:$0xff]
      %v439 = vld [vmem:[%s231 + $0xf0] sm:$0xff]
      %v440 = vld [vmem:[%s231 + $0xf8] sm:$0xff]
      %v473 = vunpack.c.l.b16 %v377
      %v474 = vunpack.c.h.b16 %v377
      %v475 = vunpack.c.l.b16 %v378
      %v476 = vunpack.c.h.b16 %v378
      %v477 = vunpack.c.l.b16 %v379
      %v478 = vunpack.c.h.b16 %v379
      %v479 = vunpack.c.l.b16 %v380
      %v480 = vunpack.c.h.b16 %v380
      %v481 = vunpack.c.l.b16 %v381
      %v482 = vunpack.c.h.b16 %v381
      %v483 = vunpack.c.l.b16 %v382
      %v484 = vunpack.c.h.b16 %v382
      %v485 = vunpack.c.l.b16 %v383
      %v486 = vunpack.c.h.b16 %v383
      %v487 = vunpack.c.l.b16 %v384
      %v488 = vunpack.c.h.b16 %v384
      %v489 = vunpack.c.l.b16 %v385
      %v490 = vunpack.c.h.b16 %v385
      %v491 = vunpack.c.l.b16 %v386
      %v492 = vunpack.c.h.b16 %v386
      %v493 = vunpack.c.l.b16 %v387
      %v494 = vunpack.c.h.b16 %v387
      %v495 = vunpack.c.l.b16 %v388
      %v496 = vunpack.c.h.b16 %v388
      %v497 = vunpack.c.l.b16 %v389
      %v498 = vunpack.c.h.b16 %v389
      %v499 = vunpack.c.l.b16 %v390
      %v500 = vunpack.c.h.b16 %v390
      %v501 = vunpack.c.l.b16 %v391
      %v502 = vunpack.c.h.b16 %v391
      %v503 = vunpack.c.l.b16 %v392
      %v504 = vunpack.c.h.b16 %v392
      %v505 = vunpack.c.l.b16 %v393
      %v506 = vunpack.c.h.b16 %v393
      %v507 = vunpack.c.l.b16 %v394
      %v508 = vunpack.c.h.b16 %v394
      %v509 = vunpack.c.l.b16 %v395
      %v510 = vunpack.c.h.b16 %v395
      %v511 = vunpack.c.l.b16 %v396
      %v512 = vunpack.c.h.b16 %v396
      %v513 = vunpack.c.l.b16 %v397
      %v514 = vunpack.c.h.b16 %v397
      %v515 = vunpack.c.l.b16 %v398
      %v516 = vunpack.c.h.b16 %v398
      %v517 = vunpack.c.l.b16 %v399
      %v518 = vunpack.c.h.b16 %v399
      %v519 = vunpack.c.l.b16 %v400
      %v520 = vunpack.c.h.b16 %v400
      %v521 = vunpack.c.l.b16 %v401
      %v522 = vunpack.c.h.b16 %v401
      %v523 = vunpack.c.l.b16 %v402
      %v524 = vunpack.c.h.b16 %v402
      %v525 = vunpack.c.l.b16 %v403
      %v526 = vunpack.c.h.b16 %v403
      %v527 = vunpack.c.l.b16 %v404
      %v528 = vunpack.c.h.b16 %v404
      %v529 = vunpack.c.l.b16 %v405
      %v530 = vunpack.c.h.b16 %v405
      %v531 = vunpack.c.l.b16 %v406
      %v532 = vunpack.c.h.b16 %v406
      %v533 = vunpack.c.l.b16 %v407
      %v534 = vunpack.c.h.b16 %v407
      %v535 = vunpack.c.l.b16 %v408
      %v536 = vunpack.c.h.b16 %v408
      %v537 = vpack.c.b16 %v475, %v473
      %v538 = vpack.c.b16 %v476, %v474
      %v539 = vpack.c.b16 %v479, %v477
      %v540 = vpack.c.b16 %v480, %v478
      %v541 = vpack.c.b16 %v483, %v481
      %v542 = vpack.c.b16 %v484, %v482
      %v543 = vpack.c.b16 %v487, %v485
      %v544 = vpack.c.b16 %v488, %v486
      %v545 = vpack.c.b16 %v491, %v489
      %v546 = vpack.c.b16 %v492, %v490
      %v547 = vpack.c.b16 %v495, %v493
      %v548 = vpack.c.b16 %v496, %v494
      %v549 = vpack.c.b16 %v499, %v497
      %v550 = vpack.c.b16 %v500, %v498
      %v551 = vpack.c.b16 %v503, %v501
      %v552 = vpack.c.b16 %v504, %v502
      %v553 = vpack.c.b16 %v507, %v505
      %v554 = vpack.c.b16 %v508, %v506
      %v555 = vpack.c.b16 %v511, %v509
      %v556 = vpack.c.b16 %v512, %v510
      %v557 = vpack.c.b16 %v515, %v513
      %v558 = vpack.c.b16 %v516, %v514
      %v559 = vpack.c.b16 %v519, %v517
      %v560 = vpack.c.b16 %v520, %v518
      %v561 = vpack.c.b16 %v523, %v521
      %v562 = vpack.c.b16 %v524, %v522
      %v563 = vpack.c.b16 %v527, %v525
      %v564 = vpack.c.b16 %v528, %v526
      %v565 = vpack.c.b16 %v531, %v529
      %v566 = vpack.c.b16 %v532, %v530
      %v567 = vpack.c.b16 %v535, %v533
      %v568 = vpack.c.b16 %v536, %v534
      %v633 = vunpack.c.l.b16 %v409
      %v634 = vunpack.c.h.b16 %v409
      %v635 = vunpack.c.l.b16 %v410
      %v636 = vunpack.c.h.b16 %v410
      %v637 = vunpack.c.l.b16 %v411
      %v638 = vunpack.c.h.b16 %v411
      %v639 = vunpack.c.l.b16 %v412
      %v640 = vunpack.c.h.b16 %v412
      %v641 = vunpack.c.l.b16 %v413
      %v642 = vunpack.c.h.b16 %v413
      %v643 = vunpack.c.l.b16 %v414
      %v644 = vunpack.c.h.b16 %v414
      %v645 = vunpack.c.l.b16 %v415
      %v646 = vunpack.c.h.b16 %v415
      %v647 = vunpack.c.l.b16 %v416
      %v648 = vunpack.c.h.b16 %v416
      %v649 = vunpack.c.l.b16 %v417
      %v650 = vunpack.c.h.b16 %v417
      %v651 = vunpack.c.l.b16 %v418
      %v652 = vunpack.c.h.b16 %v418
      %v653 = vunpack.c.l.b16 %v419
      %v654 = vunpack.c.h.b16 %v419
      %v655 = vunpack.c.l.b16 %v420
      %v656 = vunpack.c.h.b16 %v420
      %v657 = vunpack.c.l.b16 %v421
      %v658 = vunpack.c.h.b16 %v421
      %v659 = vunpack.c.l.b16 %v422
      %v660 = vunpack.c.h.b16 %v422
      %v661 = vunpack.c.l.b16 %v423
      %v662 = vunpack.c.h.b16 %v423
      %v663 = vunpack.c.l.b16 %v424
      %v664 = vunpack.c.h.b16 %v424
      %v665 = vunpack.c.l.b16 %v425
      %v666 = vunpack.c.h.b16 %v425
      %v667 = vunpack.c.l.b16 %v426
      %v668 = vunpack.c.h.b16 %v426
      %v669 = vunpack.c.l.b16 %v427
      %v670 = vunpack.c.h.b16 %v427
      %v671 = vunpack.c.l.b16 %v428
      %v672 = vunpack.c.h.b16 %v428
      %v673 = vunpack.c.l.b16 %v429
      %v674 = vunpack.c.h.b16 %v429
      %v675 = vunpack.c.l.b16 %v430
      %v676 = vunpack.c.h.b16 %v430
      %v677 = vunpack.c.l.b16 %v431
      %v678 = vunpack.c.h.b16 %v431
      %v679 = vunpack.c.l.b16 %v432
      %v680 = vunpack.c.h.b16 %v432
      %v681 = vunpack.c.l.b16 %v433
      %v682 = vunpack.c.h.b16 %v433
      %v683 = vunpack.c.l.b16 %v434
      %v684 = vunpack.c.h.b16 %v434
      %v685 = vunpack.c.l.b16 %v435
      %v686 = vunpack.c.h.b16 %v435
      %v687 = vunpack.c.l.b16 %v436
      %v688 = vunpack.c.h.b16 %v436
      %v689 = vunpack.c.l.b16 %v437
      %v690 = vunpack.c.h.b16 %v437
      %v691 = vunpack.c.l.b16 %v438
      %v692 = vunpack.c.h.b16 %v438
      %v693 = vunpack.c.l.b16 %v439
      %v694 = vunpack.c.h.b16 %v439
      %v695 = vunpack.c.l.b16 %v440
      %v696 = vunpack.c.h.b16 %v440
      %v697 = vpack.c.b16 %v635, %v633
      %v698 = vpack.c.b16 %v636, %v634
      %v699 = vpack.c.b16 %v639, %v637
      %v700 = vpack.c.b16 %v640, %v638
      %v701 = vpack.c.b16 %v643, %v641
      %v702 = vpack.c.b16 %v644, %v642
      %v703 = vpack.c.b16 %v647, %v645
      %v704 = vpack.c.b16 %v648, %v646
      %v705 = vpack.c.b16 %v651, %v649
      %v706 = vpack.c.b16 %v652, %v650
      %v707 = vpack.c.b16 %v655, %v653
      %v708 = vpack.c.b16 %v656, %v654
      %v709 = vpack.c.b16 %v659, %v657
      %v710 = vpack.c.b16 %v660, %v658
      %v711 = vpack.c.b16 %v663, %v661
      %v712 = vpack.c.b16 %v664, %v662
      %v713 = vpack.c.b16 %v667, %v665
      %v714 = vpack.c.b16 %v668, %v666
      %v715 = vpack.c.b16 %v671, %v669
      %v716 = vpack.c.b16 %v672, %v670
      %v717 = vpack.c.b16 %v675, %v673
      %v718 = vpack.c.b16 %v676, %v674
      %v719 = vpack.c.b16 %v679, %v677
      %v720 = vpack.c.b16 %v680, %v678
      %v721 = vpack.c.b16 %v683, %v681
      %v722 = vpack.c.b16 %v684, %v682
      %v723 = vpack.c.b16 %v687, %v685
      %v724 = vpack.c.b16 %v688, %v686
      %v725 = vpack.c.b16 %v691, %v689
      %v726 = vpack.c.b16 %v692, %v690
      %v727 = vpack.c.b16 %v695, %v693
      %v728 = vpack.c.b16 %v696, %v694
      %761 = vmatprep.subr.bf16.mxu0 %v712
      %762 = vmatpush1.bf16.msra.mxu0 %v711
      %763 = vmatprep.subr.bf16.mxu0 %v710
      %764 = vmatpush1.bf16.msra.mxu0 %v709
      %765 = vmatprep.subr.bf16.mxu0 %v708
      %766 = vmatpush1.bf16.msra.mxu0 %v707
      %767 = vmatprep.subr.bf16.mxu0 %v706
      %768 = vmatpush1.bf16.msra.mxu0 %v705
      %769 = vmatprep.subr.bf16.mxu0 %v704
      %770 = vmatpush1.bf16.msra.mxu0 %v703
      %771 = vmatprep.subr.bf16.mxu0 %v702
      %772 = vmatpush1.bf16.msra.mxu0 %v701
      %773 = vmatprep.subr.bf16.mxu0 %v700
      %774 = vmatpush1.bf16.msra.mxu0 %v699
      %775 = vmatprep.subr.bf16.mxu0 %v698
      %776 = vmatpush1.bf16.msra.mxu0 %v697
      %777 = vmatprep.subr.bf16.mxu0 %v728
      %778 = vmatpush2.bf16.msra.mxu0 %v727
      %779 = vmatprep.subr.bf16.mxu0 %v726
      %780 = vmatpush2.bf16.msra.mxu0 %v725
      %781 = vmatprep.subr.bf16.mxu0 %v724
      %782 = vmatpush2.bf16.msra.mxu0 %v723
      %783 = vmatprep.subr.bf16.mxu0 %v722
      %784 = vmatpush2.bf16.msra.mxu0 %v721
      %785 = vmatprep.subr.bf16.mxu0 %v720
      %786 = vmatpush2.bf16.msra.mxu0 %v719
      %787 = vmatprep.subr.bf16.mxu0 %v718
      %788 = vmatpush2.bf16.msra.mxu0 %v717
      %789 = vmatprep.subr.bf16.mxu0 %v716
      %790 = vmatpush2.bf16.msra.mxu0 %v715
      %791 = vmatprep.subr.bf16.mxu0 %v714
      %792 = vmatpush2.bf16.msra.mxu0 %v713
      %793 = vmatprep.mubr.bf16.mxu0 %v538
      %794 = vmatmul.mubr.bf16.gmra.mxu0 %v537
      %v795 = vpop.f32.mrf.mxu0
      %v796 = vadd.f32 0.0, %v795
      %v797 = vpop.f32.mrf.mxu0
      %v798 = vadd.f32 0.0, %v797
      %v799 = vpop.f32.mrf.mxu0
      %v800 = vadd.f32 0.0, %v799
      %v801 = vpop.f32.mrf.mxu0
      %v802 = vadd.f32 0.0, %v801
      %803 = vmatprep.mubr.bf16.mxu0 %v540
      %804 = vmatmul.mubr.bf16.gmra.mxu0 %v539
      %v805 = vpop.f32.mrf.mxu0
      %v806 = vadd.f32 0.0, %v805
      %v807 = vpop.f32.mrf.mxu0
      %v808 = vadd.f32 0.0, %v807
      %v809 = vpop.f32.mrf.mxu0
      %v810 = vadd.f32 0.0, %v809
      %v811 = vpop.f32.mrf.mxu0
      %v812 = vadd.f32 0.0, %v811
      %813 = vmatprep.mubr.bf16.mxu0 %v542
      %814 = vmatmul.mubr.bf16.gmra.mxu0 %v541
      %v815 = vpop.f32.mrf.mxu0
      %v816 = vadd.f32 0.0, %v815
      %v817 = vpop.f32.mrf.mxu0
      %v818 = vadd.f32 0.0, %v817
      %v819 = vpop.f32.mrf.mxu0
      %v820 = vadd.f32 0.0, %v819
      %v821 = vpop.f32.mrf.mxu0
      %v822 = vadd.f32 0.0, %v821
      %823 = vmatprep.mubr.bf16.mxu0 %v544
      %824 = vmatmul.mubr.bf16.gmra.mxu0 %v543
      %v825 = vpop.f32.mrf.mxu0
      %v826 = vadd.f32 0.0, %v825
      %v827 = vpop.f32.mrf.mxu0
      %v828 = vadd.f32 0.0, %v827
      %v829 = vpop.f32.mrf.mxu0
      %v830 = vadd.f32 0.0, %v829
      %v831 = vpop.f32.mrf.mxu0
      %v832 = vadd.f32 0.0, %v831
      %833 = vmatprep.mubr.bf16.mxu0 %v546
      %834 = vmatmul.mubr.bf16.gmra.mxu0 %v545
      %v835 = vpop.f32.mrf.mxu0
      %v836 = vadd.f32 0.0, %v835
      %v837 = vpop.f32.mrf.mxu0
      %v838 = vadd.f32 0.0, %v837
      %v839 = vpop.f32.mrf.mxu0
      %v840 = vadd.f32 0.0, %v839
      %v841 = vpop.f32.mrf.mxu0
      %v842 = vadd.f32 0.0, %v841
      %843 = vmatprep.mubr.bf16.mxu0 %v548
      %844 = vmatmul.mubr.bf16.gmra.mxu0 %v547
      %v845 = vpop.f32.mrf.mxu0
      %v846 = vadd.f32 0.0, %v845
      %v847 = vpop.f32.mrf.mxu0
      %v848 = vadd.f32 0.0, %v847
      %v849 = vpop.f32.mrf.mxu0
      %v850 = vadd.f32 0.0, %v849
      %v851 = vpop.f32.mrf.mxu0
      %v852 = vadd.f32 0.0, %v851
      %853 = vmatprep.mubr.bf16.mxu0 %v550
      %854 = vmatmul.mubr.bf16.gmra.mxu0 %v549
      %v855 = vpop.f32.mrf.mxu0
      %v856 = vadd.f32 0.0, %v855
      %v857 = vpop.f32.mrf.mxu0
      %v858 = vadd.f32 0.0, %v857
      %v859 = vpop.f32.mrf.mxu0
      %v860 = vadd.f32 0.0, %v859
      %v861 = vpop.f32.mrf.mxu0
      %v862 = vadd.f32 0.0, %v861
      %863 = vmatprep.mubr.bf16.mxu0 %v552
      %864 = vmatmul.mubr.bf16.gmra.mxu0 %v551
      %v865 = vpop.f32.mrf.mxu0
      %v866 = vadd.f32 0.0, %v865
      %v867 = vpop.f32.mrf.mxu0
      %v868 = vadd.f32 0.0, %v867
      %v869 = vpop.f32.mrf.mxu0
      %v870 = vadd.f32 0.0, %v869
      %v871 = vpop.f32.mrf.mxu0
      %v872 = vadd.f32 0.0, %v871
      %873 = vmatprep.mubr.bf16.mxu0 %v554
      %874 = vmatmul.mubr.bf16.gmra.mxu0 %v553
      %v875 = vpop.f32.mrf.mxu0
      %v876 = vadd.f32 0.0, %v875
      %v877 = vpop.f32.mrf.mxu0
      %v878 = vadd.f32 0.0, %v877
      %v879 = vpop.f32.mrf.mxu0
      %v880 = vadd.f32 0.0, %v879
      %v881 = vpop.f32.mrf.mxu0
      %v882 = vadd.f32 0.0, %v881
      %883 = vmatprep.mubr.bf16.mxu0 %v556
      %884 = vmatmul.mubr.bf16.gmra.mxu0 %v555
      %v885 = vpop.f32.mrf.mxu0
      %v886 = vadd.f32 0.0, %v885
      %v887 = vpop.f32.mrf.mxu0
      %v888 = vadd.f32 0.0, %v887
      %v889 = vpop.f32.mrf.mxu0
      %v890 = vadd.f32 0.0, %v889
      %v891 = vpop.f32.mrf.mxu0
      %v892 = vadd.f32 0.0, %v891
      %893 = vmatprep.mubr.bf16.mxu0 %v558
      %894 = vmatmul.mubr.bf16.gmra.mxu0 %v557
      %v895 = vpop.f32.mrf.mxu0
      %v896 = vadd.f32 0.0, %v895
      %v897 = vpop.f32.mrf.mxu0
      %v898 = vadd.f32 0.0, %v897
      %v899 = vpop.f32.mrf.mxu0
      %v900 = vadd.f32 0.0, %v899
      %v901 = vpop.f32.mrf.mxu0
      %v902 = vadd.f32 0.0, %v901
      %903 = vmatprep.mubr.bf16.mxu0 %v560
      %904 = vmatmul.mubr.bf16.gmra.mxu0 %v559
      %v905 = vpop.f32.mrf.mxu0
      %v906 = vadd.f32 0.0, %v905
      %v907 = vpop.f32.mrf.mxu0
      %v908 = vadd.f32 0.0, %v907
      %v909 = vpop.f32.mrf.mxu0
      %v910 = vadd.f32 0.0, %v909
      %v911 = vpop.f32.mrf.mxu0
      %v912 = vadd.f32 0.0, %v911
      %913 = vmatprep.mubr.bf16.mxu0 %v562
      %914 = vmatmul.mubr.bf16.gmra.mxu0 %v561
      %v915 = vpop.f32.mrf.mxu0
      %v916 = vadd.f32 0.0, %v915
      %v917 = vpop.f32.mrf.mxu0
      %v918 = vadd.f32 0.0, %v917
      %v919 = vpop.f32.mrf.mxu0
      %v920 = vadd.f32 0.0, %v919
      %v921 = vpop.f32.mrf.mxu0
      %v922 = vadd.f32 0.0, %v921
      %923 = vmatprep.mubr.bf16.mxu0 %v564
      %924 = vmatmul.mubr.bf16.gmra.mxu0 %v563
      %v925 = vpop.f32.mrf.mxu0
      %v926 = vadd.f32 0.0, %v925
      %v927 = vpop.f32.mrf.mxu0
      %v928 = vadd.f32 0.0, %v927
      %v929 = vpop.f32.mrf.mxu0
      %v930 = vadd.f32 0.0, %v929
      %v931 = vpop.f32.mrf.mxu0
      %v932 = vadd.f32 0.0, %v931
      %933 = vmatprep.mubr.bf16.mxu0 %v566
      %934 = vmatmul.mubr.bf16.gmra.mxu0 %v565
      %v935 = vpop.f32.mrf.mxu0
      %v936 = vadd.f32 0.0, %v935
      %v937 = vpop.f32.mrf.mxu0
      %v938 = vadd.f32 0.0, %v937
      %v939 = vpop.f32.mrf.mxu0
      %v940 = vadd.f32 0.0, %v939
      %v941 = vpop.f32.mrf.mxu0
      %v942 = vadd.f32 0.0, %v941
      %943 = vmatprep.mubr.bf16.mxu0 %v568
      %944 = vmatmul.mubr.bf16.gmra.mxu0 %v567
      %v945 = vpop.f32.mrf.mxu0
      %v946 = vadd.f32 0.0, %v945
      %v947 = vpop.f32.mrf.mxu0
      %v948 = vadd.f32 0.0, %v947
      %v949 = vpop.f32.mrf.mxu0
      %v950 = vadd.f32 0.0, %v949
      %v951 = vpop.f32.mrf.mxu0
      %v952 = vadd.f32 0.0, %v951
      %953 = vdwg.mxu0
      %v954 = vadd.f32 %v313, %v796
      %v955 = vadd.f32 %v314, %v798
      %v956 = vadd.f32 %v315, %v800
      %v957 = vadd.f32 %v316, %v802
      %v958 = vadd.f32 %v317, %v806
      %v959 = vadd.f32 %v318, %v808
      %v960 = vadd.f32 %v319, %v810
      %v961 = vadd.f32 %v320, %v812
      %v962 = vadd.f32 %v321, %v816
      %v963 = vadd.f32 %v322, %v818
      %v964 = vadd.f32 %v323, %v820
      %v965 = vadd.f32 %v324, %v822
      %v966 = vadd.f32 %v325, %v826
      %v967 = vadd.f32 %v326, %v828
      %v968 = vadd.f32 %v327, %v830
      %v969 = vadd.f32 %v328, %v832
      %v970 = vadd.f32 %v329, %v836
      %v971 = vadd.f32 %v330, %v838
      %v972 = vadd.f32 %v331, %v840
      %v973 = vadd.f32 %v332, %v842
      %v974 = vadd.f32 %v333, %v846
      %v975 = vadd.f32 %v334, %v848
      %v976 = vadd.f32 %v335, %v850
      %v977 = vadd.f32 %v336, %v852
      %v978 = vadd.f32 %v337, %v856
      %v979 = vadd.f32 %v338, %v858
      %v980 = vadd.f32 %v339, %v860
      %v981 = vadd.f32 %v340, %v862
      %v982 = vadd.f32 %v341, %v866
      %v983 = vadd.f32 %v342, %v868
      %v984 = vadd.f32 %v343, %v870
      %v985 = vadd.f32 %v344, %v872
      %v986 = vadd.f32 %v345, %v876
      %v987 = vadd.f32 %v346, %v878
      %v988 = vadd.f32 %v347, %v880
      %v989 = vadd.f32 %v348, %v882
      %v990 = vadd.f32 %v349, %v886
      %v991 = vadd.f32 %v350, %v888
      %v992 = vadd.f32 %v351, %v890
      %v993 = vadd.f32 %v352, %v892
      %v994 = vadd.f32 %v353, %v896
      %v995 = vadd.f32 %v354, %v898
      %v996 = vadd.f32 %v355, %v900
      %v997 = vadd.f32 %v356, %v902
      %v998 = vadd.f32 %v357, %v906
      %v999 = vadd.f32 %v358, %v908
      %v1000 = vadd.f32 %v359, %v910
      %v1001 = vadd.f32 %v360, %v912
      %v1002 = vadd.f32 %v361, %v916
      %v1003 = vadd.f32 %v362, %v918
      %v1004 = vadd.f32 %v363, %v920
      %v1005 = vadd.f32 %v364, %v922
      %v1006 = vadd.f32 %v365, %v926
      %v1007 = vadd.f32 %v366, %v928
      %v1008 = vadd.f32 %v367, %v930
      %v1009 = vadd.f32 %v368, %v932
      %v1010 = vadd.f32 %v369, %v936
      %v1011 = vadd.f32 %v370, %v938
      %v1012 = vadd.f32 %v371, %v940
      %v1013 = vadd.f32 %v372, %v942
      %v1014 = vadd.f32 %v373, %v946
      %v1015 = vadd.f32 %v374, %v948
      %v1016 = vadd.f32 %v375, %v950
      %v1017 = vadd.f32 %v376, %v952
      %1018 = vst [vmem:[#allocation2] sm:$0xff] %v954
      %1019 = vst [vmem:[#allocation2 + $0x8] sm:$0xff] %v955
      %1020 = vst [vmem:[#allocation2 + $0x10] sm:$0xff] %v956
      %1021 = vst [vmem:[#allocation2 + $0x18] sm:$0xff] %v957
      %1022 = vst [vmem:[#allocation2 + $0x20] sm:$0xff] %v958
      %1023 = vst [vmem:[#allocation2 + $0x28] sm:$0xff] %v959
      %1024 = vst [vmem:[#allocation2 + $0x30] sm:$0xff] %v960
      %1025 = vst [vmem:[#allocation2 + $0x38] sm:$0xff] %v961
      %1026 = vst [vmem:[#allocation2 + $0x40] sm:$0xff] %v962
      %1027 = vst [vmem:[#allocation2 + $0x48] sm:$0xff] %v963
      %1028 = vst [vmem:[#allocation2 + $0x50] sm:$0xff] %v964
      %1029 = vst [vmem:[#allocation2 + $0x58] sm:$0xff] %v965
      %1030 = vst [vmem:[#allocation2 + $0x60] sm:$0xff] %v966
      %1031 = vst [vmem:[#allocation2 + $0x68] sm:$0xff] %v967
      %1032 = vst [vmem:[#allocation2 + $0x70] sm:$0xff] %v968
      %1033 = vst [vmem:[#allocation2 + $0x78] sm:$0xff] %v969
      %1034 = vst [vmem:[#allocation2 + $0x80] sm:$0xff] %v970
      %1035 = vst [vmem:[#allocation2 + $0x88] sm:$0xff] %v971
      %1036 = vst [vmem:[#allocation2 + $0x90] sm:$0xff] %v972
      %1037 = vst [vmem:[#allocation2 + $0x98] sm:$0xff] %v973
      %1038 = vst [vmem:[#allocation2 + $0xa0] sm:$0xff] %v974
      %1039 = vst [vmem:[#allocation2 + $0xa8] sm:$0xff] %v975
      %1040 = vst [vmem:[#allocation2 + $0xb0] sm:$0xff] %v976
      %1041 = vst [vmem:[#allocation2 + $0xb8] sm:$0xff] %v977
      %1042 = vst [vmem:[#allocation2 + $0xc0] sm:$0xff] %v978
      %1043 = vst [vmem:[#allocation2 + $0xc8] sm:$0xff] %v979
      %1044 = vst [vmem:[#allocation2 + $0xd0] sm:$0xff] %v980
      %1045 = vst [vmem:[#allocation2 + $0xd8] sm:$0xff] %v981
      %1046 = vst [vmem:[#allocation2 + $0xe0] sm:$0xff] %v982
      %1047 = vst [vmem:[#allocation2 + $0xe8] sm:$0xff] %v983
      %1048 = vst [vmem:[#allocation2 + $0xf0] sm:$0xff] %v984
      %1049 = vst [vmem:[#allocation2 + $0xf8] sm:$0xff] %v985
      %1050 = vst [vmem:[#allocation2 + $0x100] sm:$0xff] %v986
      %1051 = vst [vmem:[#allocation2 + $0x108] sm:$0xff] %v987
      %1052 = vst [vmem:[#allocation2 + $0x110] sm:$0xff] %v988
      %1053 = vst [vmem:[#allocation2 + $0x118] sm:$0xff] %v989
      %1054 = vst [vmem:[#allocation2 + $0x120] sm:$0xff] %v990
      %1055 = vst [vmem:[#allocation2 + $0x128] sm:$0xff] %v991
      %1056 = vst [vmem:[#allocation2 + $0x130] sm:$0xff] %v992
      %1057 = vst [vmem:[#allocation2 + $0x138] sm:$0xff] %v993
      %1058 = vst [vmem:[#allocation2 + $0x140] sm:$0xff] %v994
      %1059 = vst [vmem:[#allocation2 + $0x148] sm:$0xff] %v995
      %1060 = vst [vmem:[#allocation2 + $0x150] sm:$0xff] %v996
      %1061 = vst [vmem:[#allocation2 + $0x158] sm:$0xff] %v997
      %1062 = vst [vmem:[#allocation2 + $0x160] sm:$0xff] %v998
      %1063 = vst [vmem:[#allocation2 + $0x168] sm:$0xff] %v999
      %1064 = vst [vmem:[#allocation2 + $0x170] sm:$0xff] %v1000
      %1065 = vst [vmem:[#allocation2 + $0x178] sm:$0xff] %v1001
      %1066 = vst [vmem:[#allocation2 + $0x180] sm:$0xff] %v1002
      %1067 = vst [vmem:[#allocation2 + $0x188] sm:$0xff] %v1003
      %1068 = vst [vmem:[#allocation2 + $0x190] sm:$0xff] %v1004
      %1069 = vst [vmem:[#allocation2 + $0x198] sm:$0xff] %v1005
      %1070 = vst [vmem:[#allocation2 + $0x1a0] sm:$0xff] %v1006
      %1071 = vst [vmem:[#allocation2 + $0x1a8] sm:$0xff] %v1007
      %1072 = vst [vmem:[#allocation2 + $0x1b0] sm:$0xff] %v1008
      %1073 = vst [vmem:[#allocation2 + $0x1b8] sm:$0xff] %v1009
      %1074 = vst [vmem:[#allocation2 + $0x1c0] sm:$0xff] %v1010
      %1075 = vst [vmem:[#allocation2 + $0x1c8] sm:$0xff] %v1011
      %1076 = vst [vmem:[#allocation2 + $0x1d0] sm:$0xff] %v1012
      %1077 = vst [vmem:[#allocation2 + $0x1d8] sm:$0xff] %v1013
      %1078 = vst [vmem:[#allocation2 + $0x1e0] sm:$0xff] %v1014
      %1079 = vst [vmem:[#allocation2 + $0x1e8] sm:$0xff] %v1015
      %1080 = vst [vmem:[#allocation2 + $0x1f0] sm:$0xff] %v1016
      %1081 = vst [vmem:[#allocation2 + $0x1f8] sm:$0xff] %v1017
      // Predicated region
      $region33: #{_lambda_.2} parent=27 // pred_check
        %p1082 = pneg %p245
      $region34: #{_lambda_.2} parent=27 // pred_check_branch
        %1084 = sbr.rel (%p1082) target = $region36
      $region35: #{_lambda_.2} parent=27 // pred_region
        %v1085 = vld [vmem:[#allocation2] sm:$0xff]
        %v1086 = vld [vmem:[#allocation2 + $0x8] sm:$0xff]
        %v1087 = vld [vmem:[#allocation2 + $0x10] sm:$0xff]
        %v1088 = vld [vmem:[#allocation2 + $0x18] sm:$0xff]
        %v1089 = vld [vmem:[#allocation2 + $0x20] sm:$0xff]
        %v1090 = vld [vmem:[#allocation2 + $0x28] sm:$0xff]
        %v1091 = vld [vmem:[#allocation2 + $0x30] sm:$0xff]
        %v1092 = vld [vmem:[#allocation2 + $0x38] sm:$0xff]
        %v1093 = vld [vmem:[#allocation2 + $0x40] sm:$0xff]
        %v1094 = vld [vmem:[#allocation2 + $0x48] sm:$0xff]
        %v1095 = vld [vmem:[#allocation2 + $0x50] sm:$0xff]
        %v1096 = vld [vmem:[#allocation2 + $0x58] sm:$0xff]
        %v1097 = vld [vmem:[#allocation2 + $0x60] sm:$0xff]
        %v1098 = vld [vmem:[#allocation2 + $0x68] sm:$0xff]
        %v1099 = vld [vmem:[#allocation2 + $0x70] sm:$0xff]
        %v1100 = vld [vmem:[#allocation2 + $0x78] sm:$0xff]
        %v1101 = vld [vmem:[#allocation2 + $0x80] sm:$0xff]
        %v1102 = vld [vmem:[#allocation2 + $0x88] sm:$0xff]
        %v1103 = vld [vmem:[#allocation2 + $0x90] sm:$0xff]
        %v1104 = vld [vmem:[#allocation2 + $0x98] sm:$0xff]
        %v1105 = vld [vmem:[#allocation2 + $0xa0] sm:$0xff]
        %v1106 = vld [vmem:[#allocation2 + $0xa8] sm:$0xff]
        %v1107 = vld [vmem:[#allocation2 + $0xb0] sm:$0xff]
        %v1108 = vld [vmem:[#allocation2 + $0xb8] sm:$0xff]
        %v1109 = vld [vmem:[#allocation2 + $0xc0] sm:$0xff]
        %v1110 = vld [vmem:[#allocation2 + $0xc8] sm:$0xff]
        %v1111 = vld [vmem:[#allocation2 + $0xd0] sm:$0xff]
        %v1112 = vld [vmem:[#allocation2 + $0xd8] sm:$0xff]
        %v1113 = vld [vmem:[#allocation2 + $0xe0] sm:$0xff]
        %v1114 = vld [vmem:[#allocation2 + $0xe8] sm:$0xff]
        %v1115 = vld [vmem:[#allocation2 + $0xf0] sm:$0xff]
        %v1116 = vld [vmem:[#allocation2 + $0xf8] sm:$0xff]
        %v1117 = vld [vmem:[#allocation2 + $0x100] sm:$0xff]
        %v1118 = vld [vmem:[#allocation2 + $0x108] sm:$0xff]
        %v1119 = vld [vmem:[#allocation2 + $0x110] sm:$0xff]
        %v1120 = vld [vmem:[#allocation2 + $0x118] sm:$0xff]
        %v1121 = vld [vmem:[#allocation2 + $0x120] sm:$0xff]
        %v1122 = vld [vmem:[#allocation2 + $0x128] sm:$0xff]
        %v1123 = vld [vmem:[#allocation2 + $0x130] sm:$0xff]
        %v1124 = vld [vmem:[#allocation2 + $0x138] sm:$0xff]
        %v1125 = vld [vmem:[#allocation2 + $0x140] sm:$0xff]
        %v1126 = vld [vmem:[#allocation2 + $0x148] sm:$0xff]
        %v1127 = vld [vmem:[#allocation2 + $0x150] sm:$0xff]
        %v1128 = vld [vmem:[#allocation2 + $0x158] sm:$0xff]
        %v1129 = vld [vmem:[#allocation2 + $0x160] sm:$0xff]
        %v1130 = vld [vmem:[#allocation2 + $0x168] sm:$0xff]
        %v1131 = vld [vmem:[#allocation2 + $0x170] sm:$0xff]
        %v1132 = vld [vmem:[#allocation2 + $0x178] sm:$0xff]
        %v1133 = vld [vmem:[#allocation2 + $0x180] sm:$0xff]
        %v1134 = vld [vmem:[#allocation2 + $0x188] sm:$0xff]
        %v1135 = vld [vmem:[#allocation2 + $0x190] sm:$0xff]
        %v1136 = vld [vmem:[#allocation2 + $0x198] sm:$0xff]
        %v1137 = vld [vmem:[#allocation2 + $0x1a0] sm:$0xff]
        %v1138 = vld [vmem:[#allocation2 + $0x1a8] sm:$0xff]
        %v1139 = vld [vmem:[#allocation2 + $0x1b0] sm:$0xff]
        %v1140 = vld [vmem:[#allocation2 + $0x1b8] sm:$0xff]
        %v1141 = vld [vmem:[#allocation2 + $0x1c0] sm:$0xff]
        %v1142 = vld [vmem:[#allocation2 + $0x1c8] sm:$0xff]
        %v1143 = vld [vmem:[#allocation2 + $0x1d0] sm:$0xff]
        %v1144 = vld [vmem:[#allocation2 + $0x1d8] sm:$0xff]
        %v1145 = vld [vmem:[#allocation2 + $0x1e0] sm:$0xff]
        %v1146 = vld [vmem:[#allocation2 + $0x1e8] sm:$0xff]
        %v1147 = vld [vmem:[#allocation2 + $0x1f0] sm:$0xff]
        %v1148 = vld [vmem:[#allocation2 + $0x1f8] sm:$0xff]
        %v1149 = vpack.c.bf16 %v1087, %v1085
        %v1150 = vpack.c.bf16 %v1088, %v1086
        %v1151 = vpack.c.bf16 %v1091, %v1089
        %v1152 = vpack.c.bf16 %v1092, %v1090
        %v1153 = vpack.c.bf16 %v1095, %v1093
        %v1154 = vpack.c.bf16 %v1096, %v1094
        %v1155 = vpack.c.bf16 %v1099, %v1097
        %v1156 = vpack.c.bf16 %v1100, %v1098
        %v1157 = vpack.c.bf16 %v1103, %v1101
        %v1158 = vpack.c.bf16 %v1104, %v1102
        %v1159 = vpack.c.bf16 %v1107, %v1105
        %v1160 = vpack.c.bf16 %v1108, %v1106
        %v1161 = vpack.c.bf16 %v1111, %v1109
        %v1162 = vpack.c.bf16 %v1112, %v1110
        %v1163 = vpack.c.bf16 %v1115, %v1113
        %v1164 = vpack.c.bf16 %v1116, %v1114
        %v1165 = vpack.c.bf16 %v1119, %v1117
        %v1166 = vpack.c.bf16 %v1120, %v1118
        %v1167 = vpack.c.bf16 %v1123, %v1121
        %v1168 = vpack.c.bf16 %v1124, %v1122
        %v1169 = vpack.c.bf16 %v1127, %v1125
        %v1170 = vpack.c.bf16 %v1128, %v1126
        %v1171 = vpack.c.bf16 %v1131, %v1129
        %v1172 = vpack.c.bf16 %v1132, %v1130
        %v1173 = vpack.c.bf16 %v1135, %v1133
        %v1174 = vpack.c.bf16 %v1136, %v1134
        %v1175 = vpack.c.bf16 %v1139, %v1137
        %v1176 = vpack.c.bf16 %v1140, %v1138
        %v1177 = vpack.c.bf16 %v1143, %v1141
        %v1178 = vpack.c.bf16 %v1144, %v1142
        %v1179 = vpack.c.bf16 %v1147, %v1145
        %v1180 = vpack.c.bf16 %v1148, %v1146
        %v1213 = vunpack.c.l.b16 %v1149
        %v1214 = vunpack.c.l.b16 %v1150
        %v1215 = vunpack.c.h.b16 %v1149
        %v1216 = vunpack.c.h.b16 %v1150
        %v1217 = vunpack.c.l.b16 %v1151
        %v1218 = vunpack.c.l.b16 %v1152
        %v1219 = vunpack.c.h.b16 %v1151
        %v1220 = vunpack.c.h.b16 %v1152
        %v1221 = vunpack.c.l.b16 %v1153
        %v1222 = vunpack.c.l.b16 %v1154
        %v1223 = vunpack.c.h.b16 %v1153
        %v1224 = vunpack.c.h.b16 %v1154
        %v1225 = vunpack.c.l.b16 %v1155
        %v1226 = vunpack.c.l.b16 %v1156
        %v1227 = vunpack.c.h.b16 %v1155
        %v1228 = vunpack.c.h.b16 %v1156
        %v1229 = vunpack.c.l.b16 %v1157
        %v1230 = vunpack.c.l.b16 %v1158
        %v1231 = vunpack.c.h.b16 %v1157
        %v1232 = vunpack.c.h.b16 %v1158
        %v1233 = vunpack.c.l.b16 %v1159
        %v1234 = vunpack.c.l.b16 %v1160
        %v1235 = vunpack.c.h.b16 %v1159
        %v1236 = vunpack.c.h.b16 %v1160
        %v1237 = vunpack.c.l.b16 %v1161
        %v1238 = vunpack.c.l.b16 %v1162
        %v1239 = vunpack.c.h.b16 %v1161
        %v1240 = vunpack.c.h.b16 %v1162
        %v1241 = vunpack.c.l.b16 %v1163
        %v1242 = vunpack.c.l.b16 %v1164
        %v1243 = vunpack.c.h.b16 %v1163
        %v1244 = vunpack.c.h.b16 %v1164
        %v1245 = vunpack.c.l.b16 %v1165
        %v1246 = vunpack.c.l.b16 %v1166
        %v1247 = vunpack.c.h.b16 %v1165
        %v1248 = vunpack.c.h.b16 %v1166
        %v1249 = vunpack.c.l.b16 %v1167
        %v1250 = vunpack.c.l.b16 %v1168
        %v1251 = vunpack.c.h.b16 %v1167
        %v1252 = vunpack.c.h.b16 %v1168
        %v1253 = vunpack.c.l.b16 %v1169
        %v1254 = vunpack.c.l.b16 %v1170
        %v1255 = vunpack.c.h.b16 %v1169
        %v1256 = vunpack.c.h.b16 %v1170
        %v1257 = vunpack.c.l.b16 %v1171
        %v1258 = vunpack.c.l.b16 %v1172
        %v1259 = vunpack.c.h.b16 %v1171
        %v1260 = vunpack.c.h.b16 %v1172
        %v1261 = vunpack.c.l.b16 %v1173
        %v1262 = vunpack.c.l.b16 %v1174
        %v1263 = vunpack.c.h.b16 %v1173
        %v1264 = vunpack.c.h.b16 %v1174
        %v1265 = vunpack.c.l.b16 %v1175
        %v1266 = vunpack.c.l.b16 %v1176
        %v1267 = vunpack.c.h.b16 %v1175
        %v1268 = vunpack.c.h.b16 %v1176
        %v1269 = vunpack.c.l.b16 %v1177
        %v1270 = vunpack.c.l.b16 %v1178
        %v1271 = vunpack.c.h.b16 %v1177
        %v1272 = vunpack.c.h.b16 %v1178
        %v1273 = vunpack.c.l.b16 %v1179
        %v1274 = vunpack.c.l.b16 %v1180
        %v1275 = vunpack.c.h.b16 %v1179
        %v1276 = vunpack.c.h.b16 %v1180
        %v1277 = vpack.c.b16 %v1214, %v1213
        %v1278 = vpack.c.b16 %v1216, %v1215
        %v1279 = vpack.c.b16 %v1218, %v1217
        %v1280 = vpack.c.b16 %v1220, %v1219
        %v1281 = vpack.c.b16 %v1222, %v1221
        %v1282 = vpack.c.b16 %v1224, %v1223
        %v1283 = vpack.c.b16 %v1226, %v1225
        %v1284 = vpack.c.b16 %v1228, %v1227
        %v1285 = vpack.c.b16 %v1230, %v1229
        %v1286 = vpack.c.b16 %v1232, %v1231
        %v1287 = vpack.c.b16 %v1234, %v1233
        %v1288 = vpack.c.b16 %v1236, %v1235
        %v1289 = vpack.c.b16 %v1238, %v1237
        %v1290 = vpack.c.b16 %v1240, %v1239
        %v1291 = vpack.c.b16 %v1242, %v1241
        %v1292 = vpack.c.b16 %v1244, %v1243
        %v1293 = vpack.c.b16 %v1246, %v1245
        %v1294 = vpack.c.b16 %v1248, %v1247
        %v1295 = vpack.c.b16 %v1250, %v1249
        %v1296 = vpack.c.b16 %v1252, %v1251
        %v1297 = vpack.c.b16 %v1254, %v1253
        %v1298 = vpack.c.b16 %v1256, %v1255
        %v1299 = vpack.c.b16 %v1258, %v1257
        %v1300 = vpack.c.b16 %v1260, %v1259
        %v1301 = vpack.c.b16 %v1262, %v1261
        %v1302 = vpack.c.b16 %v1264, %v1263
        %v1303 = vpack.c.b16 %v1266, %v1265
        %v1304 = vpack.c.b16 %v1268, %v1267
        %v1305 = vpack.c.b16 %v1270, %v1269
        %v1306 = vpack.c.b16 %v1272, %v1271
        %v1307 = vpack.c.b16 %v1274, %v1273
        %v1308 = vpack.c.b16 %v1276, %v1275
        %1341 = vst [vmem:[%s238] sm:$0xff] %v1277
        %1342 = vst [vmem:[%s238 + $0x8] sm:$0xff] %v1278
        %1343 = vst [vmem:[%s238 + $0x10] sm:$0xff] %v1279
        %1344 = vst [vmem:[%s238 + $0x18] sm:$0xff] %v1280
        %1345 = vst [vmem:[%s238 + $0x20] sm:$0xff] %v1281
        %1346 = vst [vmem:[%s238 + $0x28] sm:$0xff] %v1282
        %1347 = vst [vmem:[%s238 + $0x30] sm:$0xff] %v1283
        %1348 = vst [vmem:[%s238 + $0x38] sm:$0xff] %v1284
        %1349 = vst [vmem:[%s238 + $0x40] sm:$0xff] %v1285
        %1350 = vst [vmem:[%s238 + $0x48] sm:$0xff] %v1286
        %1351 = vst [vmem:[%s238 + $0x50] sm:$0xff] %v1287
        %1352 = vst [vmem:[%s238 + $0x58] sm:$0xff] %v1288
        %1353 = vst [vmem:[%s238 + $0x60] sm:$0xff] %v1289
        %1354 = vst [vmem:[%s238 + $0x68] sm:$0xff] %v1290
        %1355 = vst [vmem:[%s238 + $0x70] sm:$0xff] %v1291
        %1356 = vst [vmem:[%s238 + $0x78] sm:$0xff] %v1292
        %1357 = vst [vmem:[%s238 + $0x80] sm:$0xff] %v1293
        %1358 = vst [vmem:[%s238 + $0x88] sm:$0xff] %v1294
        %1359 = vst [vmem:[%s238 + $0x90] sm:$0xff] %v1295
        %1360 = vst [vmem:[%s238 + $0x98] sm:$0xff] %v1296
        %1361 = vst [vmem:[%s238 + $0xa0] sm:$0xff] %v1297
        %1362 = vst [vmem:[%s238 + $0xa8] sm:$0xff] %v1298
        %1363 = vst [vmem:[%s238 + $0xb0] sm:$0xff] %v1299
        %1364 = vst [vmem:[%s238 + $0xb8] sm:$0xff] %v1300
        %1365 = vst [vmem:[%s238 + $0xc0] sm:$0xff] %v1301
        %1366 = vst [vmem:[%s238 + $0xc8] sm:$0xff] %v1302
        %1367 = vst [vmem:[%s238 + $0xd0] sm:$0xff] %v1303
        %1368 = vst [vmem:[%s238 + $0xd8] sm:$0xff] %v1304
        %1369 = vst [vmem:[%s238 + $0xe0] sm:$0xff] %v1305
        %1370 = vst [vmem:[%s238 + $0xe8] sm:$0xff] %v1306
        %1371 = vst [vmem:[%s238 + $0xf0] sm:$0xff] %v1307
        %1372 = vst [vmem:[%s238 + $0xf8] sm:$0xff] %v1308
        %v1373 = vadd.f32 %v1085, %v1087
        %v1374 = vadd.f32 %v1373, %v1089
        %v1375 = vadd.f32 %v1374, %v1091
        %v1376 = vadd.f32 %v1375, %v1093
        %v1377 = vadd.f32 %v1376, %v1095
        %v1378 = vadd.f32 %v1377, %v1097
        %v1379 = vadd.f32 %v1378, %v1099
        %v1380 = vadd.f32 %v1379, %v1101
        %v1381 = vadd.f32 %v1380, %v1103
        %v1382 = vadd.f32 %v1381, %v1105
        %v1383 = vadd.f32 %v1382, %v1107
        %v1384 = vadd.f32 %v1383, %v1109
        %v1385 = vadd.f32 %v1384, %v1111
        %v1386 = vadd.f32 %v1385, %v1113
        %v1387 = vadd.f32 %v1386, %v1115
        %v1388 = vadd.f32 %v1387, %v1117
        %v1389 = vadd.f32 %v1388, %v1119
        %v1390 = vadd.f32 %v1389, %v1121
        %v1391 = vadd.f32 %v1390, %v1123
        %v1392 = vadd.f32 %v1391, %v1125
        %v1393 = vadd.f32 %v1392, %v1127
        %v1394 = vadd.f32 %v1393, %v1129
        %v1395 = vadd.f32 %v1394, %v1131
        %v1396 = vadd.f32 %v1395, %v1133
        %v1397 = vadd.f32 %v1396, %v1135
        %v1398 = vadd.f32 %v1397, %v1137
        %v1399 = vadd.f32 %v1398, %v1139
        %v1400 = vadd.f32 %v1399, %v1141
        %v1401 = vadd.f32 %v1400, %v1143
        %v1402 = vadd.f32 %v1401, %v1145
        %v1403 = vadd.f32 %v1402, %v1147
        %v1404 = vrot.slane %v1403, 4
        %v1405 = vadd.f32 %v1403, %v1404
        %v1406 = vrot.slane %v1405, 2
        %v1407 = vadd.f32 %v1405, %v1406
        %v1408 = vrot.slane %v1407, 1
        %v1409 = vadd.f32 %v1407, %v1408
        %v1410 = vadd.f32 %v1086, %v1088
        %v1411 = vadd.f32 %v1410, %v1090
        %v1412 = vadd.f32 %v1411, %v1092
        %v1413 = vadd.f32 %v1412, %v1094
        %v1414 = vadd.f32 %v1413, %v1096
        %v1415 = vadd.f32 %v1414, %v1098
        %v1416 = vadd.f32 %v1415, %v1100
        %v1417 = vadd.f32 %v1416, %v1102
        %v1418 = vadd.f32 %v1417, %v1104
        %v1419 = vadd.f32 %v1418, %v1106
        %v1420 = vadd.f32 %v1419, %v1108
        %v1421 = vadd.f32 %v1420, %v1110
        %v1422 = vadd.f32 %v1421, %v1112
        %v1423 = vadd.f32 %v1422, %v1114
        %v1424 = vadd.f32 %v1423, %v1116
        %v1425 = vadd.f32 %v1424, %v1118
        %v1426 = vadd.f32 %v1425, %v1120
        %v1427 = vadd.f32 %v1426, %v1122
        %v1428 = vadd.f32 %v1427, %v1124
        %v1429 = vadd.f32 %v1428, %v1126
        %v1430 = vadd.f32 %v1429, %v1128
        %v1431 = vadd.f32 %v1430, %v1130
        %v1432 = vadd.f32 %v1431, %v1132
        %v1433 = vadd.f32 %v1432, %v1134
        %v1434 = vadd.f32 %v1433, %v1136
        %v1435 = vadd.f32 %v1434, %v1138
        %v1436 = vadd.f32 %v1435, %v1140
        %v1437 = vadd.f32 %v1436, %v1142
        %v1438 = vadd.f32 %v1437, %v1144
        %v1439 = vadd.f32 %v1438, %v1146
        %v1440 = vadd.f32 %v1439, %v1148
        %v1441 = vrot.slane %v1440, 4
        %v1442 = vadd.f32 %v1440, %v1441
        %v1443 = vrot.slane %v1442, 2
        %v1444 = vadd.f32 %v1442, %v1443
        %v1445 = vrot.slane %v1444, 1
        %v1446 = vadd.f32 %v1444, %v1445
        %v1447 = vmul.f32 %v1085, %v1085
        %v1448 = vmul.f32 %v1086, %v1086
        %v1449 = vmul.f32 %v1087, %v1087
        %v1450 = vmul.f32 %v1088, %v1088
        %v1451 = vmul.f32 %v1089, %v1089
        %v1452 = vmul.f32 %v1090, %v1090
        %v1453 = vmul.f32 %v1091, %v1091
        %v1454 = vmul.f32 %v1092, %v1092
        %v1455 = vmul.f32 %v1093, %v1093
        %v1456 = vmul.f32 %v1094, %v1094
        %v1457 = vmul.f32 %v1095, %v1095
        %v1458 = vmul.f32 %v1096, %v1096
        %v1459 = vmul.f32 %v1097, %v1097
        %v1460 = vmul.f32 %v1098, %v1098
        %v1461 = vmul.f32 %v1099, %v1099
        %v1462 = vmul.f32 %v1100, %v1100
        %v1463 = vmul.f32 %v1101, %v1101
        %v1464 = vmul.f32 %v1102, %v1102
        %v1465 = vmul.f32 %v1103, %v1103
        %v1466 = vmul.f32 %v1104, %v1104
        %v1467 = vmul.f32 %v1105, %v1105
        %v1468 = vmul.f32 %v1106, %v1106
        %v1469 = vmul.f32 %v1107, %v1107
        %v1470 = vmul.f32 %v1108, %v1108
        %v1471 = vmul.f32 %v1109, %v1109
        %v1472 = vmul.f32 %v1110, %v1110
        %v1473 = vmul.f32 %v1111, %v1111
        %v1474 = vmul.f32 %v1112, %v1112
        %v1475 = vmul.f32 %v1113, %v1113
        %v1476 = vmul.f32 %v1114, %v1114
        %v1477 = vmul.f32 %v1115, %v1115
        %v1478 = vmul.f32 %v1116, %v1116
        %v1479 = vmul.f32 %v1117, %v1117
        %v1480 = vmul.f32 %v1118, %v1118
        %v1481 = vmul.f32 %v1119, %v1119
        %v1482 = vmul.f32 %v1120, %v1120
        %v1483 = vmul.f32 %v1121, %v1121
        %v1484 = vmul.f32 %v1122, %v1122
        %v1485 = vmul.f32 %v1123, %v1123
        %v1486 = vmul.f32 %v1124, %v1124
        %v1487 = vmul.f32 %v1125, %v1125
        %v1488 = vmul.f32 %v1126, %v1126
        %v1489 = vmul.f32 %v1127, %v1127
        %v1490 = vmul.f32 %v1128, %v1128
        %v1491 = vmul.f32 %v1129, %v1129
        %v1492 = vmul.f32 %v1130, %v1130
        %v1493 = vmul.f32 %v1131, %v1131
        %v1494 = vmul.f32 %v1132, %v1132
        %v1495 = vmul.f32 %v1133, %v1133
        %v1496 = vmul.f32 %v1134, %v1134
        %v1497 = vmul.f32 %v1135, %v1135
        %v1498 = vmul.f32 %v1136, %v1136
        %v1499 = vmul.f32 %v1137, %v1137
        %v1500 = vmul.f32 %v1138, %v1138
        %v1501 = vmul.f32 %v1139, %v1139
        %v1502 = vmul.f32 %v1140, %v1140
        %v1503 = vmul.f32 %v1141, %v1141
        %v1504 = vmul.f32 %v1142, %v1142
        %v1505 = vmul.f32 %v1143, %v1143
        %v1506 = vmul.f32 %v1144, %v1144
        %v1507 = vmul.f32 %v1145, %v1145
        %v1508 = vmul.f32 %v1146, %v1146
        %v1509 = vmul.f32 %v1147, %v1147
        %v1510 = vmul.f32 %v1148, %v1148
        %v1511 = vadd.f32 %v1447, %v1449
        %v1512 = vadd.f32 %v1511, %v1451
        %v1513 = vadd.f32 %v1512, %v1453
        %v1514 = vadd.f32 %v1513, %v1455
        %v1515 = vadd.f32 %v1514, %v1457
        %v1516 = vadd.f32 %v1515, %v1459
        %v1517 = vadd.f32 %v1516, %v1461
        %v1518 = vadd.f32 %v1517, %v1463
        %v1519 = vadd.f32 %v1518, %v1465
        %v1520 = vadd.f32 %v1519, %v1467
        %v1521 = vadd.f32 %v1520, %v1469
        %v1522 = vadd.f32 %v1521, %v1471
        %v1523 = vadd.f32 %v1522, %v1473
        %v1524 = vadd.f32 %v1523, %v1475
        %v1525 = vadd.f32 %v1524, %v1477
        %v1526 = vadd.f32 %v1525, %v1479
        %v1527 = vadd.f32 %v1526, %v1481
        %v1528 = vadd.f32 %v1527, %v1483
        %v1529 = vadd.f32 %v1528, %v1485
        %v1530 = vadd.f32 %v1529, %v1487
        %v1531 = vadd.f32 %v1530, %v1489
        %v1532 = vadd.f32 %v1531, %v1491
        %v1533 = vadd.f32 %v1532, %v1493
        %v1534 = vadd.f32 %v1533, %v1495
        %v1535 = vadd.f32 %v1534, %v1497
        %v1536 = vadd.f32 %v1535, %v1499
        %v1537 = vadd.f32 %v1536, %v1501
        %v1538 = vadd.f32 %v1537, %v1503
        %v1539 = vadd.f32 %v1538, %v1505
        %v1540 = vadd.f32 %v1539, %v1507
        %v1541 = vadd.f32 %v1540, %v1509
        %v1542 = vrot.slane %v1541, 4
        %v1543 = vadd.f32 %v1541, %v1542
        %v1544 = vrot.slane %v1543, 2
        %v1545 = vadd.f32 %v1543, %v1544
        %v1546 = vrot.slane %v1545, 1
        %v1547 = vadd.f32 %v1545, %v1546
        %v1548 = vadd.f32 %v1448, %v1450
        %v1549 = vadd.f32 %v1548, %v1452
        %v1550 = vadd.f32 %v1549, %v1454
        %v1551 = vadd.f32 %v1550, %v1456
        %v1552 = vadd.f32 %v1551, %v1458
        %v1553 = vadd.f32 %v1552, %v1460
        %v1554 = vadd.f32 %v1553, %v1462
        %v1555 = vadd.f32 %v1554, %v1464
        %v1556 = vadd.f32 %v1555, %v1466
        %v1557 = vadd.f32 %v1556, %v1468
        %v1558 = vadd.f32 %v1557, %v1470
        %v1559 = vadd.f32 %v1558, %v1472
        %v1560 = vadd.f32 %v1559, %v1474
        %v1561 = vadd.f32 %v1560, %v1476
        %v1562 = vadd.f32 %v1561, %v1478
        %v1563 = vadd.f32 %v1562, %v1480
        %v1564 = vadd.f32 %v1563, %v1482
        %v1565 = vadd.f32 %v1564, %v1484
        %v1566 = vadd.f32 %v1565, %v1486
        %v1567 = vadd.f32 %v1566, %v1488
        %v1568 = vadd.f32 %v1567, %v1490
        %v1569 = vadd.f32 %v1568, %v1492
        %v1570 = vadd.f32 %v1569, %v1494
        %v1571 = vadd.f32 %v1570, %v1496
        %v1572 = vadd.f32 %v1571, %v1498
        %v1573 = vadd.f32 %v1572, %v1500
        %v1574 = vadd.f32 %v1573, %v1502
        %v1575 = vadd.f32 %v1574, %v1504
        %v1576 = vadd.f32 %v1575, %v1506
        %v1577 = vadd.f32 %v1576, %v1508
        %v1578 = vadd.f32 %v1577, %v1510
        %v1579 = vrot.slane %v1578, 4
        %v1580 = vadd.f32 %v1578, %v1579
        %v1581 = vrot.slane %v1580, 2
        %v1582 = vadd.f32 %v1580, %v1581
        %v1583 = vrot.slane %v1582, 1
        %v1584 = vadd.f32 %v1582, %v1583
        %vm1585 = vcmask 1040384
        %v1586 = vsel %vm1585, %v1409, %v1547
        %v1587 = vsel %vm1585, %v1446, %v1584
        %vm1588 = vcmask 1041408
        %v1589 = vsel %vm1588, %v1586, 0.0
        %v1590 = vsel %vm1588, %v1587, 0.0
        %1591 = vst [vmem:[%s244] sm:$0xff] %v1589
        %1592 = vst [vmem:[%s244 + $0x8] sm:$0xff] %v1590
      $region36: #{_lambda_.2} parent=27 // pred_fallthru
        _
      %s1593 = smul.u32 32, %s19
      %p1594 = scmp.lt.s32.totalorder %s1593, 127
      %s1595 = scalar_select %p1594, %s1593, 127
      %s1596 = smul.addr %s1595, 2
      %s1597 = smul.addr %s1596, 4
      %s1598 = scalar_lea.vmem %s2, %s1597
      %p1599 = scmp.lt.s32.totalorder %s19, 3
      %s1600 = scalar_select %p1599, %s19, 3
      %s1601 = smul.addr %s1600, 2
      %s1602 = smul.addr %s1601, 8
      %s1603 = scalar_lea.vmem %s3, %s1602
      // Predicated region
      $region37: #{_lambda_.2} parent=27 // pred_check
        %p1604 = pneg %p99
      $region38: #{_lambda_.2} parent=27 // pred_check_branch
        %1606 = sbr.rel (%p1604) target = $region40
      $region39: #{_lambda_.2} parent=27 // pred_region
        %s1607 = smul.u32 32, %s19
      $region40: #{_lambda_.2} parent=27 // pred_fallthru
        _
      // Predicated region
      $region41: #{_lambda_.2} parent=27 // pred_check
        %p1608 = pneg %p125
      $region42: #{_lambda_.2} parent=27 // pred_check_branch
        %1610 = sbr.rel (%p1608) target = $region44
      $region43: #{_lambda_.2} parent=27 // pred_region
        _
      $region44: #{_lambda_.2} parent=27 // pred_fallthru
        _
    $region28: #{_lambda_.2} parent=5 // pred_fallthru
      _
    %p1611 = scmp.le.s32.totalorder 2, %s10
    // Predicated region
    $region45: #{_lambda_.2} parent=5 // pred_check
      %p1612 = pneg %p1611
    $region46: #{_lambda_.2} parent=5 // pred_check_branch
      %1614 = sbr.rel (%p1612) target = $region48
    $region47: #{_lambda_.2} parent=5 // pred_region
      %s1615 = ssub.s32 %s10, 2
      // Predicated region
      $region49: #{_lambda_.2} parent=47 // pred_check
        %p1616 = pneg %p105
      $region50: #{_lambda_.2} parent=47 // pred_check_branch
        %1618 = sbr.rel (%p1616) target = $region52
      $region51: #{_lambda_.2} parent=47 // pred_region
        %s1619 = smul.u32 32, %s21
        %p1620 = scmp.lt.s32.totalorder %s1619, 127
        %s1621 = scalar_select %p1620, %s1619, 127
        %s1622 = smul.addr %s1621, 2
        %s1623 = smul.addr %s1622, 4
        %s1624 = scalar_lea.vmem %s2, %s1623
      $region52: #{_lambda_.2} parent=47 // pred_fallthru
        _
      // Predicated region
      $region53: #{_lambda_.2} parent=47 // pred_check
        %p1625 = pneg %p131
      $region54: #{_lambda_.2} parent=47 // pred_check_branch
        %1627 = sbr.rel (%p1625) target = $region56
      $region55: #{_lambda_.2} parent=47 // pred_region
        %p1628 = scmp.lt.s32.totalorder %s21, 3
        %s1629 = scalar_select %p1628, %s21, 3
        %s1630 = smul.addr %s1629, 2
        %s1631 = smul.addr %s1630, 8
        %s1632 = scalar_lea.vmem %s3, %s1631
      $region56: #{_lambda_.2} parent=47 // pred_fallthru
        _
    $region48: #{_lambda_.2} parent=5 // pred_fallthru
      _
  $region6: #{_lambda_.2} parent=0 // loop_footer
    %s14 = sadd.s32 1, %s10
  $region7: #{_lambda_.2} parent=0 // loop_footer_branch
    %9 = sbr.rel target = $region3
  $region8: #{_lambda_.2} parent=0 // loop_exit
    _

// kernel: _lambda_.3
$region0: #{_lambda_.3}
  #allocation0 [shape = 'u32[]', space=smem, size = 0x4, offset = 0x4, fixed_abs, tag = 'smem constant byte address 0x4 - core index']
  #allocation1 [shape = 'u32[144,128]{1,0:T(1,128)}', space=vmem, size = 0x12000, scoped, tag = 'internal scratch']
  %s0 = inlined_call_operand.vmem [shape: bf16[1024,256], index: 0, kind: input, shape index: {}]
  %s1 = inlined_call_operand.vmem [shape: f32[8,256], index: 1, kind: input, shape index: {}]
  %s2 = inlined_call_operand.vmem [shape: f32[1024,256], index: 2, kind: output, shape index: {}]
  %s3 = sld [smem:[#allocation0]]
  $region18: #{_lambda_.3} parent=0
    _
  %s5 = ssub.s32 1, %s3
  %s6 = scalar_select 0, %s5, %s3
  // Predicated region
  $region2: #{_lambda_.3} parent=0 // pred_check
    _
  $region3: #{_lambda_.3} parent=0 // pred_check_branch
    %8 = sbr.rel (0) target = $region5
  $region4: #{_lambda_.3} parent=0 // pred_region
    _
  $region5: #{_lambda_.3} parent=0 // pred_fallthru
    _
  // Predicated region
  $region6: #{_lambda_.3} parent=0 // pred_check
    _
  $region7: #{_lambda_.3} parent=0 // pred_check_branch
    %10 = sbr.rel (0) target = $region9
  $region8: #{_lambda_.3} parent=0 // pred_region
    _
  $region9: #{_lambda_.3} parent=0 // pred_fallthru
    _
  %v11 = vld [vmem:[%s0] sm:$0xff]
  %v12 = vld [vmem:[%s0 + $0x8] sm:$0xff]
  %v13 = vld [vmem:[%s0 + $0x10] sm:$0xff]
  %v14 = vld [vmem:[%s0 + $0x18] sm:$0xff]
  %v15 = vld [vmem:[%s0 + $0x20] sm:$0xff]
  %v16 = vld [vmem:[%s0 + $0x28] sm:$0xff]
  %v17 = vld [vmem:[%s0 + $0x30] sm:$0xff]
  %v18 = vld [vmem:[%s0 + $0x38] sm:$0xff]
  %v19 = vld [vmem:[%s0 + $0x40] sm:$0xff]
  %v20 = vld [vmem:[%s0 + $0x48] sm:$0xff]
  %v21 = vld [vmem:[%s0 + $0x50] sm:$0xff]
  %v22 = vld [vmem:[%s0 + $0x58] sm:$0xff]
  %v23 = vld [vmem:[%s0 + $0x60] sm:$0xff]
  %v24 = vld [vmem:[%s0 + $0x68] sm:$0xff]
  %v25 = vld [vmem:[%s0 + $0x70] sm:$0xff]
  %v26 = vld [vmem:[%s0 + $0x78] sm:$0xff]
  %v27 = vld [vmem:[%s0 + $0x80] sm:$0xff]
  %v28 = vld [vmem:[%s0 + $0x88] sm:$0xff]
  %v29 = vld [vmem:[%s0 + $0x90] sm:$0xff]
  %v30 = vld [vmem:[%s0 + $0x98] sm:$0xff]
  %v31 = vld [vmem:[%s0 + $0xa0] sm:$0xff]
  %v32 = vld [vmem:[%s0 + $0xa8] sm:$0xff]
  %v33 = vld [vmem:[%s0 + $0xb0] sm:$0xff]
  %v34 = vld [vmem:[%s0 + $0xb8] sm:$0xff]
  %v35 = vld [vmem:[%s0 + $0xc0] sm:$0xff]
  %v36 = vld [vmem:[%s0 + $0xc8] sm:$0xff]
  %v37 = vld [vmem:[%s0 + $0xd0] sm:$0xff]
  %v38 = vld [vmem:[%s0 + $0xd8] sm:$0xff]
  %v39 = vld [vmem:[%s0 + $0xe0] sm:$0xff]
  %v40 = vld [vmem:[%s0 + $0xe8] sm:$0xff]
  %v41 = vld [vmem:[%s0 + $0xf0] sm:$0xff]
  %v42 = vld [vmem:[%s0 + $0xf8] sm:$0xff]
  %v43 = vld [vmem:[%s0 + $0x100] sm:$0xff]
  %v44 = vld [vmem:[%s0 + $0x108] sm:$0xff]
  %v45 = vld [vmem:[%s0 + $0x110] sm:$0xff]
  %v46 = vld [vmem:[%s0 + $0x118] sm:$0xff]
  %v47 = vld [vmem:[%s0 + $0x120] sm:$0xff]
  %v48 = vld [vmem:[%s0 + $0x128] sm:$0xff]
  %v49 = vld [vmem:[%s0 + $0x130] sm:$0xff]
  %v50 = vld [vmem:[%s0 + $0x138] sm:$0xff]
  %v51 = vld [vmem:[%s0 + $0x140] sm:$0xff]
  %v52 = vld [vmem:[%s0 + $0x148] sm:$0xff]
  %v53 = vld [vmem:[%s0 + $0x150] sm:$0xff]
  %v54 = vld [vmem:[%s0 + $0x158] sm:$0xff]
  %v55 = vld [vmem:[%s0 + $0x160] sm:$0xff]
  %v56 = vld [vmem:[%s0 + $0x168] sm:$0xff]
  %v57 = vld [vmem:[%s0 + $0x170] sm:$0xff]
  %v58 = vld [vmem:[%s0 + $0x178] sm:$0xff]
  %v59 = vld [vmem:[%s0 + $0x180] sm:$0xff]
  %v60 = vld [vmem:[%s0 + $0x188] sm:$0xff]
  %v61 = vld [vmem:[%s0 + $0x190] sm:$0xff]
  %v62 = vld [vmem:[%s0 + $0x198] sm:$0xff]
  %v63 = vld [vmem:[%s0 + $0x1a0] sm:$0xff]
  %v64 = vld [vmem:[%s0 + $0x1a8] sm:$0xff]
  %v65 = vld [vmem:[%s0 + $0x1b0] sm:$0xff]
  %v66 = vld [vmem:[%s0 + $0x1b8] sm:$0xff]
  %v67 = vld [vmem:[%s0 + $0x1c0] sm:$0xff]
  %v68 = vld [vmem:[%s0 + $0x1c8] sm:$0xff]
  %v69 = vld [vmem:[%s0 + $0x1d0] sm:$0xff]
  %v70 = vld [vmem:[%s0 + $0x1d8] sm:$0xff]
  %v71 = vld [vmem:[%s0 + $0x1e0] sm:$0xff]
  %v72 = vld [vmem:[%s0 + $0x1e8] sm:$0xff]
  %v73 = vld [vmem:[%s0 + $0x1f0] sm:$0xff]
  %v74 = vld [vmem:[%s0 + $0x1f8] sm:$0xff]
  %v75 = vld [vmem:[%s0 + $0x200] sm:$0xff]
  %v76 = vld [vmem:[%s0 + $0x208] sm:$0xff]
  %v77 = vld [vmem:[%s0 + $0x210] sm:$0xff]
  %v78 = vld [vmem:[%s0 + $0x218] sm:$0xff]
  %v79 = vld [vmem:[%s0 + $0x220] sm:$0xff]
  %v80 = vld [vmem:[%s0 + $0x228] sm:$0xff]
  %v81 = vld [vmem:[%s0 + $0x230] sm:$0xff]
  %v82 = vld [vmem:[%s0 + $0x238] sm:$0xff]
  %v83 = vld [vmem:[%s0 + $0x240] sm:$0xff]
  %v84 = vld [vmem:[%s0 + $0x248] sm:$0xff]
  %v85 = vld [vmem:[%s0 + $0x250] sm:$0xff]
  %v86 = vld [vmem:[%s0 + $0x258] sm:$0xff]
  %v87 = vld [vmem:[%s0 + $0x260] sm:$0xff]
  %v88 = vld [vmem:[%s0 + $0x268] sm:$0xff]
  %v89 = vld [vmem:[%s0 + $0x270] sm:$0xff]
  %v90 = vld [vmem:[%s0 + $0x278] sm:$0xff]
  %v91 = vld [vmem:[%s0 + $0x280] sm:$0xff]
  %v92 = vld [vmem:[%s0 + $0x288] sm:$0xff]
  %v93 = vld [vmem:[%s0 + $0x290] sm:$0xff]
  %v94 = vld [vmem:[%s0 + $0x298] sm:$0xff]
  %v95 = vld [vmem:[%s0 + $0x2a0] sm:$0xff]
  %v96 = vld [vmem:[%s0 + $0x2a8] sm:$0xff]
  %v97 = vld [vmem:[%s0 + $0x2b0] sm:$0xff]
  %v98 = vld [vmem:[%s0 + $0x2b8] sm:$0xff]
  %v99 = vld [vmem:[%s0 + $0x2c0] sm:$0xff]
  %v100 = vld [vmem:[%s0 + $0x2c8] sm:$0xff]
  %v101 = vld [vmem:[%s0 + $0x2d0] sm:$0xff]
  %v102 = vld [vmem:[%s0 + $0x2d8] sm:$0xff]
  %v103 = vld [vmem:[%s0 + $0x2e0] sm:$0xff]
  %v104 = vld [vmem:[%s0 + $0x2e8] sm:$0xff]
  %v105 = vld [vmem:[%s0 + $0x2f0] sm:$0xff]
  %v106 = vld [vmem:[%s0 + $0x2f8] sm:$0xff]
  %v107 = vld [vmem:[%s0 + $0x300] sm:$0xff]
  %v108 = vld [vmem:[%s0 + $0x308] sm:$0xff]
  %v109 = vld [vmem:[%s0 + $0x310] sm:$0xff]
  %v110 = vld [vmem:[%s0 + $0x318] sm:$0xff]
  %v111 = vld [vmem:[%s0 + $0x320] sm:$0xff]
  %v112 = vld [vmem:[%s0 + $0x328] sm:$0xff]
  %v113 = vld [vmem:[%s0 + $0x330] sm:$0xff]
  %v114 = vld [vmem:[%s0 + $0x338] sm:$0xff]
  %v115 = vld [vmem:[%s0 + $0x340] sm:$0xff]
  %v116 = vld [vmem:[%s0 + $0x348] sm:$0xff]
  %v117 = vld [vmem:[%s0 + $0x350] sm:$0xff]
  %v118 = vld [vmem:[%s0 + $0x358] sm:$0xff]
  %v119 = vld [vmem:[%s0 + $0x360] sm:$0xff]
  %v120 = vld [vmem:[%s0 + $0x368] sm:$0xff]
  %v121 = vld [vmem:[%s0 + $0x370] sm:$0xff]
  %v122 = vld [vmem:[%s0 + $0x378] sm:$0xff]
  %v123 = vld [vmem:[%s0 + $0x380] sm:$0xff]
  %v124 = vld [vmem:[%s0 + $0x388] sm:$0xff]
  %v125 = vld [vmem:[%s0 + $0x390] sm:$0xff]
  %v126 = vld [vmem:[%s0 + $0x398] sm:$0xff]
  %v127 = vld [vmem:[%s0 + $0x3a0] sm:$0xff]
  %v128 = vld [vmem:[%s0 + $0x3a8] sm:$0xff]
  %v129 = vld [vmem:[%s0 + $0x3b0] sm:$0xff]
  %v130 = vld [vmem:[%s0 + $0x3b8] sm:$0xff]
  %v131 = vld [vmem:[%s0 + $0x3c0] sm:$0xff]
  %v132 = vld [vmem:[%s0 + $0x3c8] sm:$0xff]
  %v133 = vld [vmem:[%s0 + $0x3d0] sm:$0xff]
  %v134 = vld [vmem:[%s0 + $0x3d8] sm:$0xff]
  %v135 = vld [vmem:[%s0 + $0x3e0] sm:$0xff]
  %v136 = vld [vmem:[%s0 + $0x3e8] sm:$0xff]
  %v137 = vld [vmem:[%s0 + $0x3f0] sm:$0xff]
  %v138 = vld [vmem:[%s0 + $0x3f8] sm:$0xff]
  %v139 = vunpack.c.l.bf16 %v11
  %v140 = vunpack.c.h.bf16 %v11
  %v141 = vunpack.c.l.bf16 %v12
  %v142 = vunpack.c.h.bf16 %v12
  %v143 = vunpack.c.l.bf16 %v13
  %v144 = vunpack.c.h.bf16 %v13
  %v145 = vunpack.c.l.bf16 %v14
  %v146 = vunpack.c.h.bf16 %v14
  %v147 = vunpack.c.l.bf16 %v15
  %v148 = vunpack.c.h.bf16 %v15
  %v149 = vunpack.c.l.bf16 %v16
  %v150 = vunpack.c.h.bf16 %v16
  %v151 = vunpack.c.l.bf16 %v17
  %v152 = vunpack.c.h.bf16 %v17
  %v153 = vunpack.c.l.bf16 %v18
  %v154 = vunpack.c.h.bf16 %v18
  %v155 = vunpack.c.l.bf16 %v19
  %v156 = vunpack.c.h.bf16 %v19
  %v157 = vunpack.c.l.bf16 %v20
  %v158 = vunpack.c.h.bf16 %v20
  %v159 = vunpack.c.l.bf16 %v21
  %v160 = vunpack.c.h.bf16 %v21
  %v161 = vunpack.c.l.bf16 %v22
  %v162 = vunpack.c.h.bf16 %v22
  %v163 = vunpack.c.l.bf16 %v23
  %v164 = vunpack.c.h.bf16 %v23
  %v165 = vunpack.c.l.bf16 %v24
  %v166 = vunpack.c.h.bf16 %v24
  %v167 = vunpack.c.l.bf16 %v25
  %v168 = vunpack.c.h.bf16 %v25
  %v169 = vunpack.c.l.bf16 %v26
  %v170 = vunpack.c.h.bf16 %v26
  %v171 = vunpack.c.l.bf16 %v27
  %v172 = vunpack.c.h.bf16 %v27
  %v173 = vunpack.c.l.bf16 %v28
  %v174 = vunpack.c.h.bf16 %v28
  %v175 = vunpack.c.l.bf16 %v29
  %v176 = vunpack.c.h.bf16 %v29
  %v177 = vunpack.c.l.bf16 %v30
  %v178 = vunpack.c.h.bf16 %v30
  %v179 = vunpack.c.l.bf16 %v31
  %v180 = vunpack.c.h.bf16 %v31
  %v181 = vunpack.c.l.bf16 %v32
  %v182 = vunpack.c.h.bf16 %v32
  %v183 = vunpack.c.l.bf16 %v33
  %v184 = vunpack.c.h.bf16 %v33
  %v185 = vunpack.c.l.bf16 %v34
  %v186 = vunpack.c.h.bf16 %v34
  %v187 = vunpack.c.l.bf16 %v35
  %v188 = vunpack.c.h.bf16 %v35
  %v189 = vunpack.c.l.bf16 %v36
  %v190 = vunpack.c.h.bf16 %v36
  %v191 = vunpack.c.l.bf16 %v37
  %v192 = vunpack.c.h.bf16 %v37
  %v193 = vunpack.c.l.bf16 %v38
  %v194 = vunpack.c.h.bf16 %v38
  %v195 = vunpack.c.l.bf16 %v39
  %v196 = vunpack.c.h.bf16 %v39
  %v197 = vunpack.c.l.bf16 %v40
  %v198 = vunpack.c.h.bf16 %v40
  %v199 = vunpack.c.l.bf16 %v41
  %v200 = vunpack.c.h.bf16 %v41
  %v201 = vunpack.c.l.bf16 %v42
  %v202 = vunpack.c.h.bf16 %v42
  %v203 = vunpack.c.l.bf16 %v43
  %v204 = vunpack.c.h.bf16 %v43
  %v205 = vunpack.c.l.bf16 %v44
  %v206 = vunpack.c.h.bf16 %v44
  %v207 = vunpack.c.l.bf16 %v45
  %v208 = vunpack.c.h.bf16 %v45
  %v209 = vunpack.c.l.bf16 %v46
  %v210 = vunpack.c.h.bf16 %v46
  %v211 = vunpack.c.l.bf16 %v47
  %v212 = vunpack.c.h.bf16 %v47
  %v213 = vunpack.c.l.bf16 %v48
  %v214 = vunpack.c.h.bf16 %v48
  %v215 = vunpack.c.l.bf16 %v49
  %v216 = vunpack.c.h.bf16 %v49
  %v217 = vunpack.c.l.bf16 %v50
  %v218 = vunpack.c.h.bf16 %v50
  %v219 = vunpack.c.l.bf16 %v51
  %v220 = vunpack.c.h.bf16 %v51
  %v221 = vunpack.c.l.bf16 %v52
  %v222 = vunpack.c.h.bf16 %v52
  %v223 = vunpack.c.l.bf16 %v53
  %v224 = vunpack.c.h.bf16 %v53
  %v225 = vunpack.c.l.bf16 %v54
  %v226 = vunpack.c.h.bf16 %v54
  %v227 = vunpack.c.l.bf16 %v55
  %v228 = vunpack.c.h.bf16 %v55
  %v229 = vunpack.c.l.bf16 %v56
  %v230 = vunpack.c.h.bf16 %v56
  %v231 = vunpack.c.l.bf16 %v57
  %v232 = vunpack.c.h.bf16 %v57
  %v233 = vunpack.c.l.bf16 %v58
  %v234 = vunpack.c.h.bf16 %v58
  %v235 = vunpack.c.l.bf16 %v59
  %v236 = vunpack.c.h.bf16 %v59
  %v237 = vunpack.c.l.bf16 %v60
  %v238 = vunpack.c.h.bf16 %v60
  %v239 = vunpack.c.l.bf16 %v61
  %v240 = vunpack.c.h.bf16 %v61
  %v241 = vunpack.c.l.bf16 %v62
  %v242 = vunpack.c.h.bf16 %v62
  %v243 = vunpack.c.l.bf16 %v63
  %v244 = vunpack.c.h.bf16 %v63
  %v245 = vunpack.c.l.bf16 %v64
  %v246 = vunpack.c.h.bf16 %v64
  %v247 = vunpack.c.l.bf16 %v65
  %v248 = vunpack.c.h.bf16 %v65
  %v249 = vunpack.c.l.bf16 %v66
  %v250 = vunpack.c.h.bf16 %v66
  %v251 = vunpack.c.l.bf16 %v67
  %v252 = vunpack.c.h.bf16 %v67
  %v253 = vunpack.c.l.bf16 %v68
  %v254 = vunpack.c.h.bf16 %v68
  %v255 = vunpack.c.l.bf16 %v69
  %v256 = vunpack.c.h.bf16 %v69
  %v257 = vunpack.c.l.bf16 %v70
  %v258 = vunpack.c.h.bf16 %v70
  %v259 = vunpack.c.l.bf16 %v71
  %v260 = vunpack.c.h.bf16 %v71
  %v261 = vunpack.c.l.bf16 %v72
  %v262 = vunpack.c.h.bf16 %v72
  %v263 = vunpack.c.l.bf16 %v73
  %v264 = vunpack.c.h.bf16 %v73
  %v265 = vunpack.c.l.bf16 %v74
  %v266 = vunpack.c.h.bf16 %v74
  %v267 = vunpack.c.l.bf16 %v75
  %v268 = vunpack.c.h.bf16 %v75
  %v269 = vunpack.c.l.bf16 %v76
  %v270 = vunpack.c.h.bf16 %v76
  %v271 = vunpack.c.l.bf16 %v77
  %v272 = vunpack.c.h.bf16 %v77
  %v273 = vunpack.c.l.bf16 %v78
  %v274 = vunpack.c.h.bf16 %v78
  %v275 = vunpack.c.l.bf16 %v79
  %v276 = vunpack.c.h.bf16 %v79
  %v277 = vunpack.c.l.bf16 %v80
  %v278 = vunpack.c.h.bf16 %v80
  %v279 = vunpack.c.l.bf16 %v81
  %v280 = vunpack.c.h.bf16 %v81
  %v281 = vunpack.c.l.bf16 %v82
  %v282 = vunpack.c.h.bf16 %v82
  %v283 = vunpack.c.l.bf16 %v83
  %v284 = vunpack.c.h.bf16 %v83
  %v285 = vunpack.c.l.bf16 %v84
  %v286 = vunpack.c.h.bf16 %v84
  %v287 = vunpack.c.l.bf16 %v85
  %v288 = vunpack.c.h.bf16 %v85
  %v289 = vunpack.c.l.bf16 %v86
  %v290 = vunpack.c.h.bf16 %v86
  %v291 = vunpack.c.l.bf16 %v87
  %v292 = vunpack.c.h.bf16 %v87
  %v293 = vunpack.c.l.bf16 %v88
  %v294 = vunpack.c.h.bf16 %v88
  %v295 = vunpack.c.l.bf16 %v89
  %v296 = vunpack.c.h.bf16 %v89
  %v297 = vunpack.c.l.bf16 %v90
  %v298 = vunpack.c.h.bf16 %v90
  %v299 = vunpack.c.l.bf16 %v91
  %v300 = vunpack.c.h.bf16 %v91
  %v301 = vunpack.c.l.bf16 %v92
  %v302 = vunpack.c.h.bf16 %v92
  %v303 = vunpack.c.l.bf16 %v93
  %v304 = vunpack.c.h.bf16 %v93
  %v305 = vunpack.c.l.bf16 %v94
  %v306 = vunpack.c.h.bf16 %v94
  %v307 = vunpack.c.l.bf16 %v95
  %v308 = vunpack.c.h.bf16 %v95
  %v309 = vunpack.c.l.bf16 %v96
  %v310 = vunpack.c.h.bf16 %v96
  %v311 = vunpack.c.l.bf16 %v97
  %v312 = vunpack.c.h.bf16 %v97
  %v313 = vunpack.c.l.bf16 %v98
  %v314 = vunpack.c.h.bf16 %v98
  %v315 = vunpack.c.l.bf16 %v99
  %v316 = vunpack.c.h.bf16 %v99
  %v317 = vunpack.c.l.bf16 %v100
  %v318 = vunpack.c.h.bf16 %v100
  %v319 = vunpack.c.l.bf16 %v101
  %v320 = vunpack.c.h.bf16 %v101
  %v321 = vunpack.c.l.bf16 %v102
  %v322 = vunpack.c.h.bf16 %v102
  %v323 = vunpack.c.l.bf16 %v103
  %v324 = vunpack.c.h.bf16 %v103
  %v325 = vunpack.c.l.bf16 %v104
  %v326 = vunpack.c.h.bf16 %v104
  %v327 = vunpack.c.l.bf16 %v105
  %v328 = vunpack.c.h.bf16 %v105
  %v329 = vunpack.c.l.bf16 %v106
  %v330 = vunpack.c.h.bf16 %v106
  %v331 = vunpack.c.l.bf16 %v107
  %v332 = vunpack.c.h.bf16 %v107
  %v333 = vunpack.c.l.bf16 %v108
  %v334 = vunpack.c.h.bf16 %v108
  %v335 = vunpack.c.l.bf16 %v109
  %v336 = vunpack.c.h.bf16 %v109
  %v337 = vunpack.c.l.bf16 %v110
  %v338 = vunpack.c.h.bf16 %v110
  %v339 = vunpack.c.l.bf16 %v111
  %v340 = vunpack.c.h.bf16 %v111
  %v341 = vunpack.c.l.bf16 %v112
  %v342 = vunpack.c.h.bf16 %v112
  %v343 = vunpack.c.l.bf16 %v113
  %v344 = vunpack.c.h.bf16 %v113
  %v345 = vunpack.c.l.bf16 %v114
  %v346 = vunpack.c.h.bf16 %v114
  %v347 = vunpack.c.l.bf16 %v115
  %v348 = vunpack.c.h.bf16 %v115
  %v349 = vunpack.c.l.bf16 %v116
  %v350 = vunpack.c.h.bf16 %v116
  %v351 = vunpack.c.l.bf16 %v117
  %v352 = vunpack.c.h.bf16 %v117
  %v353 = vunpack.c.l.bf16 %v118
  %v354 = vunpack.c.h.bf16 %v118
  %v355 = vunpack.c.l.bf16 %v119
  %v356 = vunpack.c.h.bf16 %v119
  %v357 = vunpack.c.l.bf16 %v120
  %v358 = vunpack.c.h.bf16 %v120
  %v359 = vunpack.c.l.bf16 %v121
  %v360 = vunpack.c.h.bf16 %v121
  %v361 = vunpack.c.l.bf16 %v122
  %v362 = vunpack.c.h.bf16 %v122
  %v363 = vunpack.c.l.bf16 %v123
  %v364 = vunpack.c.h.bf16 %v123
  %v365 = vunpack.c.l.bf16 %v124
  %v366 = vunpack.c.h.bf16 %v124
  %v367 = vunpack.c.l.bf16 %v125
  %v368 = vunpack.c.h.bf16 %v125
  %v369 = vunpack.c.l.bf16 %v126
  %v370 = vunpack.c.h.bf16 %v126
  %v371 = vunpack.c.l.bf16 %v127
  %v372 = vunpack.c.h.bf16 %v127
  %v373 = vunpack.c.l.bf16 %v128
  %v374 = vunpack.c.h.bf16 %v128
  %v375 = vunpack.c.l.bf16 %v129
  %v376 = vunpack.c.h.bf16 %v129
  %v377 = vunpack.c.l.bf16 %v130
  %v378 = vunpack.c.h.bf16 %v130
  %v379 = vunpack.c.l.bf16 %v131
  %v380 = vunpack.c.h.bf16 %v131
  %v381 = vunpack.c.l.bf16 %v132
  %v382 = vunpack.c.h.bf16 %v132
  %v383 = vunpack.c.l.bf16 %v133
  %v384 = vunpack.c.h.bf16 %v133
  %v385 = vunpack.c.l.bf16 %v134
  %v386 = vunpack.c.h.bf16 %v134
  %v387 = vunpack.c.l.bf16 %v135
  %v388 = vunpack.c.h.bf16 %v135
  %v389 = vunpack.c.l.bf16 %v136
  %v390 = vunpack.c.h.bf16 %v136
  %v391 = vunpack.c.l.bf16 %v137
  %v392 = vunpack.c.h.bf16 %v137
  %v393 = vunpack.c.l.bf16 %v138
  %v394 = vunpack.c.h.bf16 %v138
  %v395 = vld [vmem:[%s1] sm:$0xff]
  %v396 = vld [vmem:[%s1 + $0x8] sm:$0xff]
  %v397 = vlaneseq
  %v398 = vshrl.u32 %v397, 7
  %v399 = vsub.s32 0, %v398
  %v400 = vrot.slane %v395, %v399
  %v401 = vlaneseq
  %v402 = vshrl.u32 %v401, 7
  %v403 = vsub.s32 0, %v402
  %v404 = vrot.slane %v396, %v403
  %v405 = vmul.f32 %v139, %v400
  %v406 = vmul.f32 %v140, %v404
  %v407 = vmul.f32 %v141, %v400
  %v408 = vmul.f32 %v142, %v404
  %v409 = vmul.f32 %v143, %v400
  %v410 = vmul.f32 %v144, %v404
  %v411 = vmul.f32 %v145, %v400
  %v412 = vmul.f32 %v146, %v404
  %v413 = vmul.f32 %v147, %v400
  %v414 = vmul.f32 %v148, %v404
  %v415 = vmul.f32 %v149, %v400
  %v416 = vmul.f32 %v150, %v404
  %v417 = vmul.f32 %v151, %v400
  %v418 = vmul.f32 %v152, %v404
  %v419 = vmul.f32 %v153, %v400
  %v420 = vmul.f32 %v154, %v404
  %v421 = vmul.f32 %v155, %v400
  %v422 = vmul.f32 %v156, %v404
  %v423 = vmul.f32 %v157, %v400
  %v424 = vmul.f32 %v158, %v404
  %v425 = vmul.f32 %v159, %v400
  %v426 = vmul.f32 %v160, %v404
  %v427 = vmul.f32 %v161, %v400
  %v428 = vmul.f32 %v162, %v404
  %v429 = vmul.f32 %v163, %v400
  %v430 = vmul.f32 %v164, %v404
  %v431 = vmul.f32 %v165, %v400
  %v432 = vmul.f32 %v166, %v404
  %v433 = vmul.f32 %v167, %v400
  %v434 = vmul.f32 %v168, %v404
  %v435 = vmul.f32 %v169, %v400
  %v436 = vmul.f32 %v170, %v404
  %v437 = vmul.f32 %v171, %v400
  %v438 = vmul.f32 %v172, %v404
  %v439 = vmul.f32 %v173, %v400
  %v440 = vmul.f32 %v174, %v404
  %v441 = vmul.f32 %v175, %v400
  %v442 = vmul.f32 %v176, %v404
  %v443 = vmul.f32 %v177, %v400
  %v444 = vmul.f32 %v178, %v404
  %v445 = vmul.f32 %v179, %v400
  %v446 = vmul.f32 %v180, %v404
  %v447 = vmul.f32 %v181, %v400
  %v448 = vmul.f32 %v182, %v404
  %v449 = vmul.f32 %v183, %v400
  %v450 = vmul.f32 %v184, %v404
  %v451 = vmul.f32 %v185, %v400
  %v452 = vmul.f32 %v186, %v404
  %v453 = vmul.f32 %v187, %v400
  %v454 = vmul.f32 %v188, %v404
  %v455 = vmul.f32 %v189, %v400
  %v456 = vmul.f32 %v190, %v404
  %v457 = vmul.f32 %v191, %v400
  %v458 = vmul.f32 %v192, %v404
  %v459 = vmul.f32 %v193, %v400
  %v460 = vmul.f32 %v194, %v404
  %v461 = vmul.f32 %v195, %v400
  %v462 = vmul.f32 %v196, %v404
  %v463 = vmul.f32 %v197, %v400
  %v464 = vmul.f32 %v198, %v404
  %v465 = vmul.f32 %v199, %v400
  %v466 = vmul.f32 %v200, %v404
  %v467 = vmul.f32 %v201, %v400
  %v468 = vmul.f32 %v202, %v404
  %v469 = vmul.f32 %v203, %v400
  %v470 = vmul.f32 %v204, %v404
  %v471 = vmul.f32 %v205, %v400
  %v472 = vmul.f32 %v206, %v404
  %v473 = vmul.f32 %v207, %v400
  %v474 = vmul.f32 %v208, %v404
  %v475 = vmul.f32 %v209, %v400
  %v476 = vmul.f32 %v210, %v404
  %v477 = vmul.f32 %v211, %v400
  %v478 = vmul.f32 %v212, %v404
  %v479 = vmul.f32 %v213, %v400
  %v480 = vmul.f32 %v214, %v404
  %v481 = vmul.f32 %v215, %v400
  %v482 = vmul.f32 %v216, %v404
  %v483 = vmul.f32 %v217, %v400
  %v484 = vmul.f32 %v218, %v404
  %v485 = vmul.f32 %v219, %v400
  %v486 = vmul.f32 %v220, %v404
  %v487 = vmul.f32 %v221, %v400
  %v488 = vmul.f32 %v222, %v404
  %v489 = vmul.f32 %v223, %v400
  %v490 = vmul.f32 %v224, %v404
  %v491 = vmul.f32 %v225, %v400
  %v492 = vmul.f32 %v226, %v404
  %v493 = vmul.f32 %v227, %v400
  %v494 = vmul.f32 %v228, %v404
  %v495 = vmul.f32 %v229, %v400
  %v496 = vmul.f32 %v230, %v404
  %v497 = vmul.f32 %v231, %v400
  %v498 = vmul.f32 %v232, %v404
  %v499 = vmul.f32 %v233, %v400
  %v500 = vmul.f32 %v234, %v404
  %v501 = vmul.f32 %v235, %v400
  %v502 = vmul.f32 %v236, %v404
  %v503 = vmul.f32 %v237, %v400
  %v504 = vmul.f32 %v238, %v404
  %v505 = vmul.f32 %v239, %v400
  %v506 = vmul.f32 %v240, %v404
  %v507 = vmul.f32 %v241, %v400
  %v508 = vmul.f32 %v242, %v404
  %v509 = vmul.f32 %v243, %v400
  %v510 = vmul.f32 %v244, %v404
  %v511 = vmul.f32 %v245, %v400
  %v512 = vmul.f32 %v246, %v404
  %v513 = vmul.f32 %v247, %v400
  %v514 = vmul.f32 %v248, %v404
  %v515 = vmul.f32 %v249, %v400
  %v516 = vmul.f32 %v250, %v404
  %v517 = vmul.f32 %v251, %v400
  %v518 = vmul.f32 %v252, %v404
  %v519 = vmul.f32 %v253, %v400
  %v520 = vmul.f32 %v254, %v404
  %v521 = vmul.f32 %v255, %v400
  %v522 = vmul.f32 %v256, %v404
  %v523 = vmul.f32 %v257, %v400
  %v524 = vmul.f32 %v258, %v404
  %v525 = vmul.f32 %v259, %v400
  %v526 = vmul.f32 %v260, %v404
  %v527 = vmul.f32 %v261, %v400
  %v528 = vmul.f32 %v262, %v404
  %v529 = vmul.f32 %v263, %v400
  %v530 = vmul.f32 %v264, %v404
  %v531 = vmul.f32 %v265, %v400
  %v532 = vmul.f32 %v266, %v404
  %v533 = vmul.f32 %v267, %v400
  %v534 = vmul.f32 %v268, %v404
  %v535 = vmul.f32 %v269, %v400
  %v536 = vmul.f32 %v270, %v404
  %v537 = vmul.f32 %v271, %v400
  %v538 = vmul.f32 %v272, %v404
  %v539 = vmul.f32 %v273, %v400
  %v540 = vmul.f32 %v274, %v404
  %v541 = vmul.f32 %v275, %v400
  %v542 = vmul.f32 %v276, %v404
  %v543 = vmul.f32 %v277, %v400
  %v544 = vmul.f32 %v278, %v404
  %v545 = vmul.f32 %v279, %v400
  %v546 = vmul.f32 %v280, %v404
  %v547 = vmul.f32 %v281, %v400
  %v548 = vmul.f32 %v282, %v404
  %v549 = vmul.f32 %v283, %v400
  %v550 = vmul.f32 %v284, %v404
  %v551 = vmul.f32 %v285, %v400
  %v552 = vmul.f32 %v286, %v404
  %v553 = vmul.f32 %v287, %v400
  %v554 = vmul.f32 %v288, %v404
  %v555 = vmul.f32 %v289, %v400
  %v556 = vmul.f32 %v290, %v404
  %v557 = vmul.f32 %v291, %v400
  %v558 = vmul.f32 %v292, %v404
  %v559 = vmul.f32 %v293, %v400
  %v560 = vmul.f32 %v294, %v404
  %v561 = vmul.f32 %v295, %v400
  %v562 = vmul.f32 %v296, %v404
  %v563 = vmul.f32 %v297, %v400
  %v564 = vmul.f32 %v298, %v404
  %v565 = vmul.f32 %v299, %v400
  %v566 = vmul.f32 %v300, %v404
  %v567 = vmul.f32 %v301, %v400
  %v568 = vmul.f32 %v302, %v404
  %v569 = vmul.f32 %v303, %v400
  %v570 = vmul.f32 %v304, %v404
  %v571 = vmul.f32 %v305, %v400
  %v572 = vmul.f32 %v306, %v404
  %v573 = vmul.f32 %v307, %v400
  %v574 = vmul.f32 %v308, %v404
  %v575 = vmul.f32 %v309, %v400
  %v576 = vmul.f32 %v310, %v404
  %v577 = vmul.f32 %v311, %v400
  %v578 = vmul.f32 %v312, %v404
  %v579 = vmul.f32 %v313, %v400
  %v580 = vmul.f32 %v314, %v404
  %v581 = vmul.f32 %v315, %v400
  %v582 = vmul.f32 %v316, %v404
  %v583 = vmul.f32 %v317, %v400
  %v584 = vmul.f32 %v318, %v404
  %v585 = vmul.f32 %v319, %v400
  %v586 = vmul.f32 %v320, %v404
  %v587 = vmul.f32 %v321, %v400
  %v588 = vmul.f32 %v322, %v404
  %v589 = vmul.f32 %v323, %v400
  %v590 = vmul.f32 %v324, %v404
  %v591 = vmul.f32 %v325, %v400
  %v592 = vmul.f32 %v326, %v404
  %v593 = vmul.f32 %v327, %v400
  %v594 = vmul.f32 %v328, %v404
  %v595 = vmul.f32 %v329, %v400
  %v596 = vmul.f32 %v330, %v404
  %v597 = vmul.f32 %v331, %v400
  %v598 = vmul.f32 %v332, %v404
  %v599 = vmul.f32 %v333, %v400
  %v600 = vmul.f32 %v334, %v404
  %v601 = vmul.f32 %v335, %v400
  %v602 = vmul.f32 %v336, %v404
  %v603 = vmul.f32 %v337, %v400
  %v604 = vmul.f32 %v338, %v404
  %v605 = vmul.f32 %v339, %v400
  %v606 = vmul.f32 %v340, %v404
  %v607 = vmul.f32 %v341, %v400
  %v608 = vmul.f32 %v342, %v404
  %v609 = vmul.f32 %v343, %v400
  %v610 = vmul.f32 %v344, %v404
  %v611 = vmul.f32 %v345, %v400
  %v612 = vmul.f32 %v346, %v404
  %v613 = vmul.f32 %v347, %v400
  %v614 = vmul.f32 %v348, %v404
  %v615 = vmul.f32 %v349, %v400
  %v616 = vmul.f32 %v350, %v404
  %v617 = vmul.f32 %v351, %v400
  %v618 = vmul.f32 %v352, %v404
  %v619 = vmul.f32 %v353, %v400
  %v620 = vmul.f32 %v354, %v404
  %v621 = vmul.f32 %v355, %v400
  %v622 = vmul.f32 %v356, %v404
  %v623 = vmul.f32 %v357, %v400
  %v624 = vmul.f32 %v358, %v404
  %v625 = vmul.f32 %v359, %v400
  %v626 = vmul.f32 %v360, %v404
  %v627 = vmul.f32 %v361, %v400
  %v628 = vmul.f32 %v362, %v404
  %v629 = vmul.f32 %v363, %v400
  %v630 = vmul.f32 %v364, %v404
  %v631 = vmul.f32 %v365, %v400
  %v632 = vmul.f32 %v366, %v404
  %v633 = vmul.f32 %v367, %v400
  %v634 = vmul.f32 %v368, %v404
  %v635 = vmul.f32 %v369, %v400
  %v636 = vmul.f32 %v370, %v404
  %v637 = vmul.f32 %v371, %v400
  %v638 = vmul.f32 %v372, %v404
  %v639 = vmul.f32 %v373, %v400
  %v640 = vmul.f32 %v374, %v404
  %v641 = vmul.f32 %v375, %v400
  %v642 = vmul.f32 %v376, %v404
  %v643 = vmul.f32 %v377, %v400
  %v644 = vmul.f32 %v378, %v404
  %v645 = vmul.f32 %v379, %v400
  %v646 = vmul.f32 %v380, %v404
  %v647 = vmul.f32 %v381, %v400
  %v648 = vmul.f32 %v382, %v404
  %v649 = vmul.f32 %v383, %v400
  %v650 = vmul.f32 %v384, %v404
  %v651 = vmul.f32 %v385, %v400
  %v652 = vmul.f32 %v386, %v404
  %v653 = vmul.f32 %v387, %v400
  %v654 = vmul.f32 %v388, %v404
  %v655 = vmul.f32 %v389, %v400
  %v656 = vmul.f32 %v390, %v404
  %v657 = vmul.f32 %v391, %v400
  %v658 = vmul.f32 %v392, %v404
  %v659 = vmul.f32 %v393, %v400
  %v660 = vmul.f32 %v394, %v404
  %v661 = vlaneseq
  %v662 = vshrl.u32 %v661, 7
  %v663 = vsub.s32 1, %v662
  %v664 = vrot.slane %v395, %v663
  %v665 = vlaneseq
  %v666 = vshrl.u32 %v665, 7
  %v667 = vsub.s32 1, %v666
  %v668 = vrot.slane %v396, %v667
  %v669 = vadd.f32 %v405, %v664
  %v670 = vadd.f32 %v406, %v668
  %v671 = vadd.f32 %v407, %v664
  %v672 = vadd.f32 %v408, %v668
  %v673 = vadd.f32 %v409, %v664
  %v674 = vadd.f32 %v410, %v668
  %v675 = vadd.f32 %v411, %v664
  %v676 = vadd.f32 %v412, %v668
  %v677 = vadd.f32 %v413, %v664
  %v678 = vadd.f32 %v414, %v668
  %v679 = vadd.f32 %v415, %v664
  %v680 = vadd.f32 %v416, %v668
  %v681 = vadd.f32 %v417, %v664
  %v682 = vadd.f32 %v418, %v668
  %v683 = vadd.f32 %v419, %v664
  %v684 = vadd.f32 %v420, %v668
  %v685 = vadd.f32 %v421, %v664
  %v686 = vadd.f32 %v422, %v668
  %v687 = vadd.f32 %v423, %v664
  %v688 = vadd.f32 %v424, %v668
  %v689 = vadd.f32 %v425, %v664
  %v690 = vadd.f32 %v426, %v668
  %v691 = vadd.f32 %v427, %v664
  %v692 = vadd.f32 %v428, %v668
  %v693 = vadd.f32 %v429, %v664
  %v694 = vadd.f32 %v430, %v668
  %v695 = vadd.f32 %v431, %v664
  %v696 = vadd.f32 %v432, %v668
  %v697 = vadd.f32 %v433, %v664
  %v698 = vadd.f32 %v434, %v668
  %v699 = vadd.f32 %v435, %v664
  %v700 = vadd.f32 %v436, %v668
  %v701 = vadd.f32 %v437, %v664
  %v702 = vadd.f32 %v438, %v668
  %v703 = vadd.f32 %v439, %v664
  %v704 = vadd.f32 %v440, %v668
  %v705 = vadd.f32 %v441, %v664
  %v706 = vadd.f32 %v442, %v668
  %v707 = vadd.f32 %v443, %v664
  %v708 = vadd.f32 %v444, %v668
  %v709 = vadd.f32 %v445, %v664
  %v710 = vadd.f32 %v446, %v668
  %v711 = vadd.f32 %v447, %v664
  %v712 = vadd.f32 %v448, %v668
  %v713 = vadd.f32 %v449, %v664
  %v714 = vadd.f32 %v450, %v668
  %v715 = vadd.f32 %v451, %v664
  %v716 = vadd.f32 %v452, %v668
  %v717 = vadd.f32 %v453, %v664
  %v718 = vadd.f32 %v454, %v668
  %v719 = vadd.f32 %v455, %v664
  %v720 = vadd.f32 %v456, %v668
  %v721 = vadd.f32 %v457, %v664
  %v722 = vadd.f32 %v458, %v668
  %v723 = vadd.f32 %v459, %v664
  %v724 = vadd.f32 %v460, %v668
  %v725 = vadd.f32 %v461, %v664
  %v726 = vadd.f32 %v462, %v668
  %v727 = vadd.f32 %v463, %v664
  %v728 = vadd.f32 %v464, %v668
  %v729 = vadd.f32 %v465, %v664
  %v730 = vadd.f32 %v466, %v668
  %v731 = vadd.f32 %v467, %v664
  %v732 = vadd.f32 %v468, %v668
  %v733 = vadd.f32 %v469, %v664
  %v734 = vadd.f32 %v470, %v668
  %v735 = vadd.f32 %v471, %v664
  %v736 = vadd.f32 %v472, %v668
  %v737 = vadd.f32 %v473, %v664
  %v738 = vadd.f32 %v474, %v668
  %v739 = vadd.f32 %v475, %v664
  %v740 = vadd.f32 %v476, %v668
  %v741 = vadd.f32 %v477, %v664
  %v742 = vadd.f32 %v478, %v668
  %v743 = vadd.f32 %v479, %v664
  %v744 = vadd.f32 %v480, %v668
  %v745 = vadd.f32 %v481, %v664
  %v746 = vadd.f32 %v482, %v668
  %v747 = vadd.f32 %v483, %v664
  %v748 = vadd.f32 %v484, %v668
  %v749 = vadd.f32 %v485, %v664
  %v750 = vadd.f32 %v486, %v668
  %v751 = vadd.f32 %v487, %v664
  %v752 = vadd.f32 %v488, %v668
  %v753 = vadd.f32 %v489, %v664
  %v754 = vadd.f32 %v490, %v668
  %v755 = vadd.f32 %v491, %v664
  %v756 = vadd.f32 %v492, %v668
  %v757 = vadd.f32 %v493, %v664
  %v758 = vadd.f32 %v494, %v668
  %v759 = vadd.f32 %v495, %v664
  %v760 = vadd.f32 %v496, %v668
  %v761 = vadd.f32 %v497, %v664
  %v762 = vadd.f32 %v498, %v668
  %v763 = vadd.f32 %v499, %v664
  %v764 = vadd.f32 %v500, %v668
  %v765 = vadd.f32 %v501, %v664
  %v766 = vadd.f32 %v502, %v668
  %v767 = vadd.f32 %v503, %v664
  %v768 = vadd.f32 %v504, %v668
  %v769 = vadd.f32 %v505, %v664
  %v770 = vadd.f32 %v506, %v668
  %v771 = vadd.f32 %v507, %v664
  %v772 = vadd.f32 %v508, %v668
  %v773 = vadd.f32 %v509, %v664
  %v774 = vadd.f32 %v510, %v668
  %v775 = vadd.f32 %v511, %v664
  %v776 = vadd.f32 %v512, %v668
  %v777 = vadd.f32 %v513, %v664
  %v778 = vadd.f32 %v514, %v668
  %v779 = vadd.f32 %v515, %v664
  %v780 = vadd.f32 %v516, %v668
  %v781 = vadd.f32 %v517, %v664
  %v782 = vadd.f32 %v518, %v668
  %v783 = vadd.f32 %v519, %v664
  %v784 = vadd.f32 %v520, %v668
  %v785 = vadd.f32 %v521, %v664
  %v786 = vadd.f32 %v522, %v668
  %v787 = vadd.f32 %v523, %v664
  %v788 = vadd.f32 %v524, %v668
  %v789 = vadd.f32 %v525, %v664
  %v790 = vadd.f32 %v526, %v668
  %v791 = vadd.f32 %v527, %v664
  %v792 = vadd.f32 %v528, %v668
  %v793 = vadd.f32 %v529, %v664
  %v794 = vadd.f32 %v530, %v668
  %v795 = vadd.f32 %v531, %v664
  %v796 = vadd.f32 %v532, %v668
  %v797 = vadd.f32 %v533, %v664
  %v798 = vadd.f32 %v534, %v668
  %v799 = vadd.f32 %v535, %v664
  %v800 = vadd.f32 %v536, %v668
  %v801 = vadd.f32 %v537, %v664
  %v802 = vadd.f32 %v538, %v668
  %v803 = vadd.f32 %v539, %v664
  %v804 = vadd.f32 %v540, %v668
  %v805 = vadd.f32 %v541, %v664
  %v806 = vadd.f32 %v542, %v668
  %v807 = vadd.f32 %v543, %v664
  %v808 = vadd.f32 %v544, %v668
  %v809 = vadd.f32 %v545, %v664
  %v810 = vadd.f32 %v546, %v668
  %v811 = vadd.f32 %v547, %v664
  %v812 = vadd.f32 %v548, %v668
  %v813 = vadd.f32 %v549, %v664
  %v814 = vadd.f32 %v550, %v668
  %v815 = vadd.f32 %v551, %v664
  %v816 = vadd.f32 %v552, %v668
  %v817 = vadd.f32 %v553, %v664
  %v818 = vadd.f32 %v554, %v668
  %v819 = vadd.f32 %v555, %v664
  %v820 = vadd.f32 %v556, %v668
  %v821 = vadd.f32 %v557, %v664
  %v822 = vadd.f32 %v558, %v668
  %v823 = vadd.f32 %v559, %v664
  %v824 = vadd.f32 %v560, %v668
  %v825 = vadd.f32 %v561, %v664
  %v826 = vadd.f32 %v562, %v668
  %v827 = vadd.f32 %v563, %v664
  %v828 = vadd.f32 %v564, %v668
  %v829 = vadd.f32 %v565, %v664
  %v830 = vadd.f32 %v566, %v668
  %v831 = vadd.f32 %v567, %v664
  %v832 = vadd.f32 %v568, %v668
  %v833 = vadd.f32 %v569, %v664
  %v834 = vadd.f32 %v570, %v668
  %v835 = vadd.f32 %v571, %v664
  %v836 = vadd.f32 %v572, %v668
  %v837 = vadd.f32 %v573, %v664
  %v838 = vadd.f32 %v574, %v668
  %v839 = vadd.f32 %v575, %v664
  %v840 = vadd.f32 %v576, %v668
  %v841 = vadd.f32 %v577, %v664
  %v842 = vadd.f32 %v578, %v668
  %v843 = vadd.f32 %v579, %v664
  %v844 = vadd.f32 %v580, %v668
  %v845 = vadd.f32 %v581, %v664
  %v846 = vadd.f32 %v582, %v668
  %v847 = vadd.f32 %v583, %v664
  %v848 = vadd.f32 %v584, %v668
  %v849 = vadd.f32 %v585, %v664
  %v850 = vadd.f32 %v586, %v668
  %v851 = vadd.f32 %v587, %v664
  %v852 = vadd.f32 %v588, %v668
  %v853 = vadd.f32 %v589, %v664
  %v854 = vadd.f32 %v590, %v668
  %v855 = vadd.f32 %v591, %v664
  %v856 = vadd.f32 %v592, %v668
  %v857 = vadd.f32 %v593, %v664
  %v858 = vadd.f32 %v594, %v668
  %v859 = vadd.f32 %v595, %v664
  %v860 = vadd.f32 %v596, %v668
  %v861 = vadd.f32 %v597, %v664
  %v862 = vadd.f32 %v598, %v668
  %v863 = vadd.f32 %v599, %v664
  %v864 = vadd.f32 %v600, %v668
  %v865 = vadd.f32 %v601, %v664
  %v866 = vadd.f32 %v602, %v668
  %v867 = vadd.f32 %v603, %v664
  %v868 = vadd.f32 %v604, %v668
  %v869 = vadd.f32 %v605, %v664
  %v870 = vadd.f32 %v606, %v668
  %v871 = vadd.f32 %v607, %v664
  %v872 = vadd.f32 %v608, %v668
  %v873 = vadd.f32 %v609, %v664
  %v874 = vadd.f32 %v610, %v668
  %v875 = vadd.f32 %v611, %v664
  %v876 = vadd.f32 %v612, %v668
  %v877 = vadd.f32 %v613, %v664
  %v878 = vadd.f32 %v614, %v668
  %v879 = vadd.f32 %v615, %v664
  %v880 = vadd.f32 %v616, %v668
  %v881 = vadd.f32 %v617, %v664
  %v882 = vadd.f32 %v618, %v668
  %v883 = vadd.f32 %v619, %v664
  %v884 = vadd.f32 %v620, %v668
  %v885 = vadd.f32 %v621, %v664
  %v886 = vadd.f32 %v622, %v668
  %v887 = vadd.f32 %v623, %v664
  %v888 = vadd.f32 %v624, %v668
  %v889 = vadd.f32 %v625, %v664
  %v890 = vadd.f32 %v626, %v668
  %v891 = vadd.f32 %v627, %v664
  %v892 = vadd.f32 %v628, %v668
  %v893 = vadd.f32 %v629, %v664
  %v894 = vadd.f32 %v630, %v668
  %v895 = vadd.f32 %v631, %v664
  %v896 = vadd.f32 %v632, %v668
  %v897 = vadd.f32 %v633, %v664
  %v898 = vadd.f32 %v634, %v668
  %v899 = vadd.f32 %v635, %v664
  %v900 = vadd.f32 %v636, %v668
  %v901 = vadd.f32 %v637, %v664
  %v902 = vadd.f32 %v638, %v668
  %v903 = vadd.f32 %v639, %v664
  %v904 = vadd.f32 %v640, %v668
  %v905 = vadd.f32 %v641, %v664
  %v906 = vadd.f32 %v642, %v668
  %v907 = vadd.f32 %v643, %v664
  %v908 = vadd.f32 %v644, %v668
  %v909 = vadd.f32 %v645, %v664
  %v910 = vadd.f32 %v646, %v668
  %v911 = vadd.f32 %v647, %v664
  %v912 = vadd.f32 %v648, %v668
  %v913 = vadd.f32 %v649, %v664
  %v914 = vadd.f32 %v650, %v668
  %v915 = vadd.f32 %v651, %v664
  %v916 = vadd.f32 %v652, %v668
  %v917 = vadd.f32 %v653, %v664
  %v918 = vadd.f32 %v654, %v668
  %v919 = vadd.f32 %v655, %v664
  %v920 = vadd.f32 %v656, %v668
  %v921 = vadd.f32 %v657, %v664
  %v922 = vadd.f32 %v658, %v668
  %v923 = vadd.f32 %v659, %v664
  %v924 = vadd.f32 %v660, %v668
  %v925 = vmax.f32 %v669, 0.0
  %v926 = vmax.f32 %v670, 0.0
  %v927 = vmax.f32 %v671, 0.0
  %v928 = vmax.f32 %v672, 0.0
  %v929 = vmax.f32 %v673, 0.0
  %v930 = vmax.f32 %v674, 0.0
  %v931 = vmax.f32 %v675, 0.0
  %v932 = vmax.f32 %v676, 0.0
  %v933 = vmax.f32 %v677, 0.0
  %v934 = vmax.f32 %v678, 0.0
  %v935 = vmax.f32 %v679, 0.0
  %v936 = vmax.f32 %v680, 0.0
  %v937 = vmax.f32 %v681, 0.0
  %v938 = vmax.f32 %v682, 0.0
  %v939 = vmax.f32 %v683, 0.0
  %v940 = vmax.f32 %v684, 0.0
  %v941 = vmax.f32 %v685, 0.0
  %v942 = vmax.f32 %v686, 0.0
  %v943 = vmax.f32 %v687, 0.0
  %v944 = vmax.f32 %v688, 0.0
  %v945 = vmax.f32 %v689, 0.0
  %v946 = vmax.f32 %v690, 0.0
  %v947 = vmax.f32 %v691, 0.0
  %v948 = vmax.f32 %v692, 0.0
  %v949 = vmax.f32 %v693, 0.0
  %v950 = vmax.f32 %v694, 0.0
  %v951 = vmax.f32 %v695, 0.0
  %v952 = vmax.f32 %v696, 0.0
  %v953 = vmax.f32 %v697, 0.0
  %v954 = vmax.f32 %v698, 0.0
  %v955 = vmax.f32 %v699, 0.0
  %v956 = vmax.f32 %v700, 0.0
  %v957 = vmax.f32 %v701, 0.0
  %v958 = vmax.f32 %v702, 0.0
  %v959 = vmax.f32 %v703, 0.0
  %v960 = vmax.f32 %v704, 0.0
  %v961 = vmax.f32 %v705, 0.0
  %v962 = vmax.f32 %v706, 0.0
  %v963 = vmax.f32 %v707, 0.0
  %v964 = vmax.f32 %v708, 0.0
  %v965 = vmax.f32 %v709, 0.0
  %v966 = vmax.f32 %v710, 0.0
  %v967 = vmax.f32 %v711, 0.0
  %v968 = vmax.f32 %v712, 0.0
  %v969 = vmax.f32 %v713, 0.0
  %v970 = vmax.f32 %v714, 0.0
  %v971 = vmax.f32 %v715, 0.0
  %v972 = vmax.f32 %v716, 0.0
  %v973 = vmax.f32 %v717, 0.0
  %v974 = vmax.f32 %v718, 0.0
  %v975 = vmax.f32 %v719, 0.0
  %v976 = vmax.f32 %v720, 0.0
  %v977 = vmax.f32 %v721, 0.0
  %v978 = vmax.f32 %v722, 0.0
  %v979 = vmax.f32 %v723, 0.0
  %v980 = vmax.f32 %v724, 0.0
  %v981 = vmax.f32 %v725, 0.0
  %v982 = vmax.f32 %v726, 0.0
  %v983 = vmax.f32 %v727, 0.0
  %v984 = vmax.f32 %v728, 0.0
  %v985 = vmax.f32 %v729, 0.0
  %v986 = vmax.f32 %v730, 0.0
  %v987 = vmax.f32 %v731, 0.0
  %v988 = vmax.f32 %v732, 0.0
  %v989 = vmax.f32 %v733, 0.0
  %v990 = vmax.f32 %v734, 0.0
  %v991 = vmax.f32 %v735, 0.0
  %v992 = vmax.f32 %v736, 0.0
  %v993 = vmax.f32 %v737, 0.0
  %v994 = vmax.f32 %v738, 0.0
  %v995 = vmax.f32 %v739, 0.0
  %v996 = vmax.f32 %v740, 0.0
  %v997 = vmax.f32 %v741, 0.0
  %v998 = vmax.f32 %v742, 0.0
  %v999 = vmax.f32 %v743, 0.0
  %v1000 = vmax.f32 %v744, 0.0
  %v1001 = vmax.f32 %v745, 0.0
  %v1002 = vmax.f32 %v746, 0.0
  %v1003 = vmax.f32 %v747, 0.0
  %v1004 = vmax.f32 %v748, 0.0
  %v1005 = vmax.f32 %v749, 0.0
  %v1006 = vmax.f32 %v750, 0.0
  %v1007 = vmax.f32 %v751, 0.0
  %v1008 = vmax.f32 %v752, 0.0
  %v1009 = vmax.f32 %v753, 0.0
  %v1010 = vmax.f32 %v754, 0.0
  %v1011 = vmax.f32 %v755, 0.0
  %v1012 = vmax.f32 %v756, 0.0
  %v1013 = vmax.f32 %v757, 0.0
  %v1014 = vmax.f32 %v758, 0.0
  %v1015 = vmax.f32 %v759, 0.0
  %v1016 = vmax.f32 %v760, 0.0
  %v1017 = vmax.f32 %v761, 0.0
  %v1018 = vmax.f32 %v762, 0.0
  %v1019 = vmax.f32 %v763, 0.0
  %v1020 = vmax.f32 %v764, 0.0
  %v1021 = vmax.f32 %v765, 0.0
  %v1022 = vmax.f32 %v766, 0.0
  %v1023 = vmax.f32 %v767, 0.0
  %v1024 = vmax.f32 %v768, 0.0
  %v1025 = vmax.f32 %v769, 0.0
  %v1026 = vmax.f32 %v770, 0.0
  %v1027 = vmax.f32 %v771, 0.0
  %v1028 = vmax.f32 %v772, 0.0
  %v1029 = vmax.f32 %v773, 0.0
  %v1030 = vmax.f32 %v774, 0.0
  %v1031 = vmax.f32 %v775, 0.0
  %v1032 = vmax.f32 %v776, 0.0
  %v1033 = vmax.f32 %v777, 0.0
  %v1034 = vmax.f32 %v778, 0.0
  %v1035 = vmax.f32 %v779, 0.0
  %v1036 = vmax.f32 %v780, 0.0
  %v1037 = vmax.f32 %v781, 0.0
  %v1038 = vmax.f32 %v782, 0.0
  %v1039 = vmax.f32 %v783, 0.0
  %v1040 = vmax.f32 %v784, 0.0
  %v1041 = vmax.f32 %v785, 0.0
  %v1042 = vmax.f32 %v786, 0.0
  %v1043 = vmax.f32 %v787, 0.0
  %v1044 = vmax.f32 %v788, 0.0
  %v1045 = vmax.f32 %v789, 0.0
  %v1046 = vmax.f32 %v790, 0.0
  %v1047 = vmax.f32 %v791, 0.0
  %v1048 = vmax.f32 %v792, 0.0
  %v1049 = vmax.f32 %v793, 0.0
  %v1050 = vmax.f32 %v794, 0.0
  %v1051 = vmax.f32 %v795, 0.0
  %v1052 = vmax.f32 %v796, 0.0
  %v1053 = vmax.f32 %v797, 0.0
  %v1054 = vmax.f32 %v798, 0.0
  %v1055 = vmax.f32 %v799, 0.0
  %v1056 = vmax.f32 %v800, 0.0
  %v1057 = vmax.f32 %v801, 0.0
  %v1058 = vmax.f32 %v802, 0.0
  %v1059 = vmax.f32 %v803, 0.0
  %v1060 = vmax.f32 %v804, 0.0
  %v1061 = vmax.f32 %v805, 0.0
  %v1062 = vmax.f32 %v806, 0.0
  %v1063 = vmax.f32 %v807, 0.0
  %v1064 = vmax.f32 %v808, 0.0
  %v1065 = vmax.f32 %v809, 0.0
  %v1066 = vmax.f32 %v810, 0.0
  %v1067 = vmax.f32 %v811, 0.0
  %v1068 = vmax.f32 %v812, 0.0
  %v1069 = vmax.f32 %v813, 0.0
  %v1070 = vmax.f32 %v814, 0.0
  %v1071 = vmax.f32 %v815, 0.0
  %v1072 = vmax.f32 %v816, 0.0
  %v1073 = vmax.f32 %v817, 0.0
  %v1074 = vmax.f32 %v818, 0.0
  %v1075 = vmax.f32 %v819, 0.0
  %v1076 = vmax.f32 %v820, 0.0
  %v1077 = vmax.f32 %v821, 0.0
  %v1078 = vmax.f32 %v822, 0.0
  %v1079 = vmax.f32 %v823, 0.0
  %v1080 = vmax.f32 %v824, 0.0
  %v1081 = vmax.f32 %v825, 0.0
  %v1082 = vmax.f32 %v826, 0.0
  %v1083 = vmax.f32 %v827, 0.0
  %v1084 = vmax.f32 %v828, 0.0
  %v1085 = vmax.f32 %v829, 0.0
  %v1086 = vmax.f32 %v830, 0.0
  %v1087 = vmax.f32 %v831, 0.0
  %v1088 = vmax.f32 %v832, 0.0
  %v1089 = vmax.f32 %v833, 0.0
  %v1090 = vmax.f32 %v834, 0.0
  %v1091 = vmax.f32 %v835, 0.0
  %v1092 = vmax.f32 %v836, 0.0
  %v1093 = vmax.f32 %v837, 0.0
  %v1094 = vmax.f32 %v838, 0.0
  %v1095 = vmax.f32 %v839, 0.0
  %v1096 = vmax.f32 %v840, 0.0
  %v1097 = vmax.f32 %v841, 0.0
  %v1098 = vmax.f32 %v842, 0.0
  %v1099 = vmax.f32 %v843, 0.0
  %v1100 = vmax.f32 %v844, 0.0
  %v1101 = vmax.f32 %v845, 0.0
  %v1102 = vmax.f32 %v846, 0.0
  %v1103 = vmax.f32 %v847, 0.0
  %v1104 = vmax.f32 %v848, 0.0
  %v1105 = vmax.f32 %v849, 0.0
  %v1106 = vmax.f32 %v850, 0.0
  %v1107 = vmax.f32 %v851, 0.0
  %v1108 = vmax.f32 %v852, 0.0
  %v1109 = vmax.f32 %v853, 0.0
  %v1110 = vmax.f32 %v854, 0.0
  %v1111 = vmax.f32 %v855, 0.0
  %v1112 = vmax.f32 %v856, 0.0
  %v1113 = vmax.f32 %v857, 0.0
  %v1114 = vmax.f32 %v858, 0.0
  %v1115 = vmax.f32 %v859, 0.0
  %v1116 = vmax.f32 %v860, 0.0
  %v1117 = vmax.f32 %v861, 0.0
  %v1118 = vmax.f32 %v862, 0.0
  %v1119 = vmax.f32 %v863, 0.0
  %v1120 = vmax.f32 %v864, 0.0
  %v1121 = vmax.f32 %v865, 0.0
  %v1122 = vmax.f32 %v866, 0.0
  %v1123 = vmax.f32 %v867, 0.0
  %v1124 = vmax.f32 %v868, 0.0
  %v1125 = vmax.f32 %v869, 0.0
  %v1126 = vmax.f32 %v870, 0.0
  %v1127 = vmax.f32 %v871, 0.0
  %v1128 = vmax.f32 %v872, 0.0
  %v1129 = vmax.f32 %v873, 0.0
  %v1130 = vmax.f32 %v874, 0.0
  %v1131 = vmax.f32 %v875, 0.0
  %v1132 = vmax.f32 %v876, 0.0
  %v1133 = vmax.f32 %v877, 0.0
  %v1134 = vmax.f32 %v878, 0.0
  %v1135 = vmax.f32 %v879, 0.0
  %v1136 = vmax.f32 %v880, 0.0
  %v1137 = vmax.f32 %v881, 0.0
  %v1138 = vmax.f32 %v882, 0.0
  %v1139 = vmax.f32 %v883, 0.0
  %v1140 = vmax.f32 %v884, 0.0
  %v1141 = vmax.f32 %v885, 0.0
  %v1142 = vmax.f32 %v886, 0.0
  %v1143 = vmax.f32 %v887, 0.0
  %v1144 = vmax.f32 %v888, 0.0
  %v1145 = vmax.f32 %v889, 0.0
  %v1146 = vmax.f32 %v890, 0.0
  %v1147 = vmax.f32 %v891, 0.0
  %v1148 = vmax.f32 %v892, 0.0
  %v1149 = vmax.f32 %v893, 0.0
  %v1150 = vmax.f32 %v894, 0.0
  %v1151 = vmax.f32 %v895, 0.0
  %v1152 = vmax.f32 %v896, 0.0
  %v1153 = vmax.f32 %v897, 0.0
  %v1154 = vmax.f32 %v898, 0.0
  %v1155 = vmax.f32 %v899, 0.0
  %v1156 = vmax.f32 %v900, 0.0
  %v1157 = vmax.f32 %v901, 0.0
  %v1158 = vmax.f32 %v902, 0.0
  %v1159 = vmax.f32 %v903, 0.0
  %v1160 = vmax.f32 %v904, 0.0
  %v1161 = vmax.f32 %v905, 0.0
  %v1162 = vmax.f32 %v906, 0.0
  %v1163 = vmax.f32 %v907, 0.0
  %v1164 = vmax.f32 %v908, 0.0
  %v1165 = vmax.f32 %v909, 0.0
  %v1166 = vmax.f32 %v910, 0.0
  %v1167 = vmax.f32 %v911, 0.0
  %v1168 = vmax.f32 %v912, 0.0
  %v1169 = vmax.f32 %v913, 0.0
  %v1170 = vmax.f32 %v914, 0.0
  %v1171 = vmax.f32 %v915, 0.0
  %v1172 = vmax.f32 %v916, 0.0
  %v1173 = vmax.f32 %v917, 0.0
  %v1174 = vmax.f32 %v918, 0.0
  %v1175 = vmax.f32 %v919, 0.0
  %v1176 = vmax.f32 %v920, 0.0
  %v1177 = vmax.f32 %v921, 0.0
  %v1178 = vmax.f32 %v922, 0.0
  %v1179 = vmax.f32 %v923, 0.0
  %v1180 = vmax.f32 %v924, 0.0
  %1181 = vst [vmem:[%s2] sm:$0xff] %v925
  %1182 = vst [vmem:[%s2 + $0x8] sm:$0xff] %v926
  %1183 = vst [vmem:[%s2 + $0x10] sm:$0xff] %v927
  %1184 = vst [vmem:[%s2 + $0x18] sm:$0xff] %v928
  %1185 = vst [vmem:[%s2 + $0x20] sm:$0xff] %v929
  %1186 = vst [vmem:[%s2 + $0x28] sm:$0xff] %v930
  %1187 = vst [vmem:[%s2 + $0x30] sm:$0xff] %v931
  %1188 = vst [vmem:[%s2 + $0x38] sm:$0xff] %v932
  %1189 = vst [vmem:[%s2 + $0x40] sm:$0xff] %v933
  %1190 = vst [vmem:[%s2 + $0x48] sm:$0xff] %v934
  %1191 = vst [vmem:[%s2 + $0x50] sm:$0xff] %v935
  %1192 = vst [vmem:[%s2 + $0x58] sm:$0xff] %v936
  %1193 = vst [vmem:[%s2 + $0x60] sm:$0xff] %v937
  %1194 = vst [vmem:[%s2 + $0x68] sm:$0xff] %v938
  %1195 = vst [vmem:[%s2 + $0x70] sm:$0xff] %v939
  %1196 = vst [vmem:[%s2 + $0x78] sm:$0xff] %v940
  %1197 = vst [vmem:[%s2 + $0x80] sm:$0xff] %v941
  %1198 = vst [vmem:[%s2 + $0x88] sm:$0xff] %v942
  %1199 = vst [vmem:[%s2 + $0x90] sm:$0xff] %v943
  %1200 = vst [vmem:[%s2 + $0x98] sm:$0xff] %v944
  %1201 = vst [vmem:[%s2 + $0xa0] sm:$0xff] %v945
  %1202 = vst [vmem:[%s2 + $0xa8] sm:$0xff] %v946
  %1203 = vst [vmem:[%s2 + $0xb0] sm:$0xff] %v947
  %1204 = vst [vmem:[%s2 + $0xb8] sm:$0xff] %v948
  %1205 = vst [vmem:[%s2 + $0xc0] sm:$0xff] %v949
  %1206 = vst [vmem:[%s2 + $0xc8] sm:$0xff] %v950
  %1207 = vst [vmem:[%s2 + $0xd0] sm:$0xff] %v951
  %1208 = vst [vmem:[%s2 + $0xd8] sm:$0xff] %v952
  %1209 = vst [vmem:[%s2 + $0xe0] sm:$0xff] %v953
  %1210 = vst [vmem:[%s2 + $0xe8] sm:$0xff] %v954
  %1211 = vst [vmem:[%s2 + $0xf0] sm:$0xff] %v955
  %1212 = vst [vmem:[%s2 + $0xf8] sm:$0xff] %v956
  %1213 = vst [vmem:[%s2 + $0x100] sm:$0xff] %v957
  %1214 = vst [vmem:[%s2 + $0x108] sm:$0xff] %v958
  %1215 = vst [vmem:[%s2 + $0x110] sm:$0xff] %v959
  %1216 = vst [vmem:[%s2 + $0x118] sm:$0xff] %v960
  %1217 = vst [vmem:[%s2 + $0x120] sm:$0xff] %v961
  %1218 = vst [vmem:[%s2 + $0x128] sm:$0xff] %v962
  %1219 = vst [vmem:[%s2 + $0x130] sm:$0xff] %v963
  %1220 = vst [vmem:[%s2 + $0x138] sm:$0xff] %v964
  %1221 = vst [vmem:[%s2 + $0x140] sm:$0xff] %v965
  %1222 = vst [vmem:[%s2 + $0x148] sm:$0xff] %v966
  %1223 = vst [vmem:[%s2 + $0x150] sm:$0xff] %v967
  %1224 = vst [vmem:[%s2 + $0x158] sm:$0xff] %v968
  %1225 = vst [vmem:[%s2 + $0x160] sm:$0xff] %v969
  %1226 = vst [vmem:[%s2 + $0x168] sm:$0xff] %v970
  %1227 = vst [vmem:[%s2 + $0x170] sm:$0xff] %v971
  %1228 = vst [vmem:[%s2 + $0x178] sm:$0xff] %v972
  %1229 = vst [vmem:[%s2 + $0x180] sm:$0xff] %v973
  %1230 = vst [vmem:[%s2 + $0x188] sm:$0xff] %v974
  %1231 = vst [vmem:[%s2 + $0x190] sm:$0xff] %v975
  %1232 = vst [vmem:[%s2 + $0x198] sm:$0xff] %v976
  %1233 = vst [vmem:[%s2 + $0x1a0] sm:$0xff] %v977
  %1234 = vst [vmem:[%s2 + $0x1a8] sm:$0xff] %v978
  %1235 = vst [vmem:[%s2 + $0x1b0] sm:$0xff] %v979
  %1236 = vst [vmem:[%s2 + $0x1b8] sm:$0xff] %v980
  %1237 = vst [vmem:[%s2 + $0x1c0] sm:$0xff] %v981
  %1238 = vst [vmem:[%s2 + $0x1c8] sm:$0xff] %v982
  %1239 = vst [vmem:[%s2 + $0x1d0] sm:$0xff] %v983
  %1240 = vst [vmem:[%s2 + $0x1d8] sm:$0xff] %v984
  %1241 = vst [vmem:[%s2 + $0x1e0] sm:$0xff] %v985
  %1242 = vst [vmem:[%s2 + $0x1e8] sm:$0xff] %v986
  %1243 = vst [vmem:[%s2 + $0x1f0] sm:$0xff] %v987
  %1244 = vst [vmem:[%s2 + $0x1f8] sm:$0xff] %v988
  %1245 = vst [vmem:[%s2 + $0x200] sm:$0xff] %v989
  %1246 = vst [vmem:[%s2 + $0x208] sm:$0xff] %v990
  %1247 = vst [vmem:[%s2 + $0x210] sm:$0xff] %v991
  %1248 = vst [vmem:[%s2 + $0x218] sm:$0xff] %v992
  %1249 = vst [vmem:[%s2 + $0x220] sm:$0xff] %v993
  %1250 = vst [vmem:[%s2 + $0x228] sm:$0xff] %v994
  %1251 = vst [vmem:[%s2 + $0x230] sm:$0xff] %v995
  %1252 = vst [vmem:[%s2 + $0x238] sm:$0xff] %v996
  %1253 = vst [vmem:[%s2 + $0x240] sm:$0xff] %v997
  %1254 = vst [vmem:[%s2 + $0x248] sm:$0xff] %v998
  %1255 = vst [vmem:[%s2 + $0x250] sm:$0xff] %v999
  %1256 = vst [vmem:[%s2 + $0x258] sm:$0xff] %v1000
  %1257 = vst [vmem:[%s2 + $0x260] sm:$0xff] %v1001
  %1258 = vst [vmem:[%s2 + $0x268] sm:$0xff] %v1002
  %1259 = vst [vmem:[%s2 + $0x270] sm:$0xff] %v1003
  %1260 = vst [vmem:[%s2 + $0x278] sm:$0xff] %v1004
  %1261 = vst [vmem:[%s2 + $0x280] sm:$0xff] %v1005
  %1262 = vst [vmem:[%s2 + $0x288] sm:$0xff] %v1006
  %1263 = vst [vmem:[%s2 + $0x290] sm:$0xff] %v1007
  %1264 = vst [vmem:[%s2 + $0x298] sm:$0xff] %v1008
  %1265 = vst [vmem:[%s2 + $0x2a0] sm:$0xff] %v1009
  %1266 = vst [vmem:[%s2 + $0x2a8] sm:$0xff] %v1010
  %1267 = vst [vmem:[%s2 + $0x2b0] sm:$0xff] %v1011
  %1268 = vst [vmem:[%s2 + $0x2b8] sm:$0xff] %v1012
  %1269 = vst [vmem:[%s2 + $0x2c0] sm:$0xff] %v1013
  %1270 = vst [vmem:[%s2 + $0x2c8] sm:$0xff] %v1014
  %1271 = vst [vmem:[%s2 + $0x2d0] sm:$0xff] %v1015
  %1272 = vst [vmem:[%s2 + $0x2d8] sm:$0xff] %v1016
  %1273 = vst [vmem:[%s2 + $0x2e0] sm:$0xff] %v1017
  %1274 = vst [vmem:[%s2 + $0x2e8] sm:$0xff] %v1018
  %1275 = vst [vmem:[%s2 + $0x2f0] sm:$0xff] %v1019
  %1276 = vst [vmem:[%s2 + $0x2f8] sm:$0xff] %v1020
  %1277 = vst [vmem:[%s2 + $0x300] sm:$0xff] %v1021
  %1278 = vst [vmem:[%s2 + $0x308] sm:$0xff] %v1022
  %1279 = vst [vmem:[%s2 + $0x310] sm:$0xff] %v1023
  %1280 = vst [vmem:[%s2 + $0x318] sm:$0xff] %v1024
  %1281 = vst [vmem:[%s2 + $0x320] sm:$0xff] %v1025
  %1282 = vst [vmem:[%s2 + $0x328] sm:$0xff] %v1026
  %1283 = vst [vmem:[%s2 + $0x330] sm:$0xff] %v1027
  %1284 = vst [vmem:[%s2 + $0x338] sm:$0xff] %v1028
  %1285 = vst [vmem:[%s2 + $0x340] sm:$0xff] %v1029
  %1286 = vst [vmem:[%s2 + $0x348] sm:$0xff] %v1030
  %1287 = vst [vmem:[%s2 + $0x350] sm:$0xff] %v1031
  %1288 = vst [vmem:[%s2 + $0x358] sm:$0xff] %v1032
  %1289 = vst [vmem:[%s2 + $0x360] sm:$0xff] %v1033
  %1290 = vst [vmem:[%s2 + $0x368] sm:$0xff] %v1034
  %1291 = vst [vmem:[%s2 + $0x370] sm:$0xff] %v1035
  %1292 = vst [vmem:[%s2 + $0x378] sm:$0xff] %v1036
  %1293 = vst [vmem:[%s2 + $0x380] sm:$0xff] %v1037
  %1294 = vst [vmem:[%s2 + $0x388] sm:$0xff] %v1038
  %1295 = vst [vmem:[%s2 + $0x390] sm:$0xff] %v1039
  %1296 = vst [vmem:[%s2 + $0x398] sm:$0xff] %v1040
  %1297 = vst [vmem:[%s2 + $0x3a0] sm:$0xff] %v1041
  %1298 = vst [vmem:[%s2 + $0x3a8] sm:$0xff] %v1042
  %1299 = vst [vmem:[%s2 + $0x3b0] sm:$0xff] %v1043
  %1300 = vst [vmem:[%s2 + $0x3b8] sm:$0xff] %v1044
  %1301 = vst [vmem:[%s2 + $0x3c0] sm:$0xff] %v1045
  %1302 = vst [vmem:[%s2 + $0x3c8] sm:$0xff] %v1046
  %1303 = vst [vmem:[%s2 + $0x3d0] sm:$0xff] %v1047
  %1304 = vst [vmem:[%s2 + $0x3d8] sm:$0xff] %v1048
  %1305 = vst [vmem:[%s2 + $0x3e0] sm:$0xff] %v1049
  %1306 = vst [vmem:[%s2 + $0x3e8] sm:$0xff] %v1050
  %1307 = vst [vmem:[%s2 + $0x3f0] sm:$0xff] %v1051
  %1308 = vst [vmem:[%s2 + $0x3f8] sm:$0xff] %v1052
  %1309 = vst [vmem:[%s2 + $0x400] sm:$0xff] %v1053
  %1310 = vst [vmem:[%s2 + $0x408] sm:$0xff] %v1054
  %1311 = vst [vmem:[%s2 + $0x410] sm:$0xff] %v1055
  %1312 = vst [vmem:[%s2 + $0x418] sm:$0xff] %v1056
  %1313 = vst [vmem:[%s2 + $0x420] sm:$0xff] %v1057
  %1314 = vst [vmem:[%s2 + $0x428] sm:$0xff] %v1058
  %1315 = vst [vmem:[%s2 + $0x430] sm:$0xff] %v1059
  %1316 = vst [vmem:[%s2 + $0x438] sm:$0xff] %v1060
  %1317 = vst [vmem:[%s2 + $0x440] sm:$0xff] %v1061
  %1318 = vst [vmem:[%s2 + $0x448] sm:$0xff] %v1062
  %1319 = vst [vmem:[%s2 + $0x450] sm:$0xff] %v1063
  %1320 = vst [vmem:[%s2 + $0x458] sm:$0xff] %v1064
  %1321 = vst [vmem:[%s2 + $0x460] sm:$0xff] %v1065
  %1322 = vst [vmem:[%s2 + $0x468] sm:$0xff] %v1066
  %1323 = vst [vmem:[%s2 + $0x470] sm:$0xff] %v1067
  %1324 = vst [vmem:[%s2 + $0x478] sm:$0xff] %v1068
  %1325 = vst [vmem:[%s2 + $0x480] sm:$0xff] %v1069
  %1326 = vst [vmem:[%s2 + $0x488] sm:$0xff] %v1070
  %1327 = vst [vmem:[%s2 + $0x490] sm:$0xff] %v1071
  %1328 = vst [vmem:[%s2 + $0x498] sm:$0xff] %v1072
  %1329 = vst [vmem:[%s2 + $0x4a0] sm:$0xff] %v1073
  %1330 = vst [vmem:[%s2 + $0x4a8] sm:$0xff] %v1074
  %1331 = vst [vmem:[%s2 + $0x4b0] sm:$0xff] %v1075
  %1332 = vst [vmem:[%s2 + $0x4b8] sm:$0xff] %v1076
  %1333 = vst [vmem:[%s2 + $0x4c0] sm:$0xff] %v1077
  %1334 = vst [vmem:[%s2 + $0x4c8] sm:$0xff] %v1078
  %1335 = vst [vmem:[%s2 + $0x4d0] sm:$0xff] %v1079
  %1336 = vst [vmem:[%s2 + $0x4d8] sm:$0xff] %v1080
  %1337 = vst [vmem:[%s2 + $0x4e0] sm:$0xff] %v1081
  %1338 = vst [vmem:[%s2 + $0x4e8] sm:$0xff] %v1082
  %1339 = vst [vmem:[%s2 + $0x4f0] sm:$0xff] %v1083
  %1340 = vst [vmem:[%s2 + $0x4f8] sm:$0xff] %v1084
  %1341 = vst [vmem:[%s2 + $0x500] sm:$0xff] %v1085
  %1342 = vst [vmem:[%s2 + $0x508] sm:$0xff] %v1086
  %1343 = vst [vmem:[%s2 + $0x510] sm:$0xff] %v1087
  %1344 = vst [vmem:[%s2 + $0x518] sm:$0xff] %v1088
  %1345 = vst [vmem:[%s2 + $0x520] sm:$0xff] %v1089
  %1346 = vst [vmem:[%s2 + $0x528] sm:$0xff] %v1090
  %1347 = vst [vmem:[%s2 + $0x530] sm:$0xff] %v1091
  %1348 = vst [vmem:[%s2 + $0x538] sm:$0xff] %v1092
  %1349 = vst [vmem:[%s2 + $0x540] sm:$0xff] %v1093
  %1350 = vst [vmem:[%s2 + $0x548] sm:$0xff] %v1094
  %1351 = vst [vmem:[%s2 + $0x550] sm:$0xff] %v1095
  %1352 = vst [vmem:[%s2 + $0x558] sm:$0xff] %v1096
  %1353 = vst [vmem:[%s2 + $0x560] sm:$0xff] %v1097
  %1354 = vst [vmem:[%s2 + $0x568] sm:$0xff] %v1098
  %1355 = vst [vmem:[%s2 + $0x570] sm:$0xff] %v1099
  %1356 = vst [vmem:[%s2 + $0x578] sm:$0xff] %v1100
  %1357 = vst [vmem:[%s2 + $0x580] sm:$0xff] %v1101
  %1358 = vst [vmem:[%s2 + $0x588] sm:$0xff] %v1102
  %1359 = vst [vmem:[%s2 + $0x590] sm:$0xff] %v1103
  %1360 = vst [vmem:[%s2 + $0x598] sm:$0xff] %v1104
  %1361 = vst [vmem:[%s2 + $0x5a0] sm:$0xff] %v1105
  %1362 = vst [vmem:[%s2 + $0x5a8] sm:$0xff] %v1106
  %1363 = vst [vmem:[%s2 + $0x5b0] sm:$0xff] %v1107
  %1364 = vst [vmem:[%s2 + $0x5b8] sm:$0xff] %v1108
  %1365 = vst [vmem:[%s2 + $0x5c0] sm:$0xff] %v1109
  %1366 = vst [vmem:[%s2 + $0x5c8] sm:$0xff] %v1110
  %1367 = vst [vmem:[%s2 + $0x5d0] sm:$0xff] %v1111
  %1368 = vst [vmem:[%s2 + $0x5d8] sm:$0xff] %v1112
  %1369 = vst [vmem:[%s2 + $0x5e0] sm:$0xff] %v1113
  %1370 = vst [vmem:[%s2 + $0x5e8] sm:$0xff] %v1114
  %1371 = vst [vmem:[%s2 + $0x5f0] sm:$0xff] %v1115
  %1372 = vst [vmem:[%s2 + $0x5f8] sm:$0xff] %v1116
  %1373 = vst [vmem:[%s2 + $0x600] sm:$0xff] %v1117
  %1374 = vst [vmem:[%s2 + $0x608] sm:$0xff] %v1118
  %1375 = vst [vmem:[%s2 + $0x610] sm:$0xff] %v1119
  %1376 = vst [vmem:[%s2 + $0x618] sm:$0xff] %v1120
  %1377 = vst [vmem:[%s2 + $0x620] sm:$0xff] %v1121
  %1378 = vst [vmem:[%s2 + $0x628] sm:$0xff] %v1122
  %1379 = vst [vmem:[%s2 + $0x630] sm:$0xff] %v1123
  %1380 = vst [vmem:[%s2 + $0x638] sm:$0xff] %v1124
  %1381 = vst [vmem:[%s2 + $0x640] sm:$0xff] %v1125
  %1382 = vst [vmem:[%s2 + $0x648] sm:$0xff] %v1126
  %1383 = vst [vmem:[%s2 + $0x650] sm:$0xff] %v1127
  %1384 = vst [vmem:[%s2 + $0x658] sm:$0xff] %v1128
  %1385 = vst [vmem:[%s2 + $0x660] sm:$0xff] %v1129
  %1386 = vst [vmem:[%s2 + $0x668] sm:$0xff] %v1130
  %1387 = vst [vmem:[%s2 + $0x670] sm:$0xff] %v1131
  %1388 = vst [vmem:[%s2 + $0x678] sm:$0xff] %v1132
  %1389 = vst [vmem:[%s2 + $0x680] sm:$0xff] %v1133
  %1390 = vst [vmem:[%s2 + $0x688] sm:$0xff] %v1134
  %1391 = vst [vmem:[%s2 + $0x690] sm:$0xff] %v1135
  %1392 = vst [vmem:[%s2 + $0x698] sm:$0xff] %v1136
  %1393 = vst [vmem:[%s2 + $0x6a0] sm:$0xff] %v1137
  %1394 = vst [vmem:[%s2 + $0x6a8] sm:$0xff] %v1138
  %1395 = vst [vmem:[%s2 + $0x6b0] sm:$0xff] %v1139
  %1396 = vst [vmem:[%s2 + $0x6b8] sm:$0xff] %v1140
  %1397 = vst [vmem:[%s2 + $0x6c0] sm:$0xff] %v1141
  %1398 = vst [vmem:[%s2 + $0x6c8] sm:$0xff] %v1142
  %1399 = vst [vmem:[%s2 + $0x6d0] sm:$0xff] %v1143
  %1400 = vst [vmem:[%s2 + $0x6d8] sm:$0xff] %v1144
  %1401 = vst [vmem:[%s2 + $0x6e0] sm:$0xff] %v1145
  %1402 = vst [vmem:[%s2 + $0x6e8] sm:$0xff] %v1146
  %1403 = vst [vmem:[%s2 + $0x6f0] sm:$0xff] %v1147
  %1404 = vst [vmem:[%s2 + $0x6f8] sm:$0xff] %v1148
  %1405 = vst [vmem:[%s2 + $0x700] sm:$0xff] %v1149
  %1406 = vst [vmem:[%s2 + $0x708] sm:$0xff] %v1150
  %1407 = vst [vmem:[%s2 + $0x710] sm:$0xff] %v1151
  %1408 = vst [vmem:[%s2 + $0x718] sm:$0xff] %v1152
  %1409 = vst [vmem:[%s2 + $0x720] sm:$0xff] %v1153
  %1410 = vst [vmem:[%s2 + $0x728] sm:$0xff] %v1154
  %1411 = vst [vmem:[%s2 + $0x730] sm:$0xff] %v1155
  %1412 = vst [vmem:[%s2 + $0x738] sm:$0xff] %v1156
  %1413 = vst [vmem:[%s2 + $0x740] sm:$0xff] %v1157
  %1414 = vst [vmem:[%s2 + $0x748] sm:$0xff] %v1158
  %1415 = vst [vmem:[%s2 + $0x750] sm:$0xff] %v1159
  %1416 = vst [vmem:[%s2 + $0x758] sm:$0xff] %v1160
  %1417 = vst [vmem:[%s2 + $0x760] sm:$0xff] %v1161
  %1418 = vst [vmem:[%s2 + $0x768] sm:$0xff] %v1162
  %1419 = vst [vmem:[%s2 + $0x770] sm:$0xff] %v1163
  %1420 = vst [vmem:[%s2 + $0x778] sm:$0xff] %v1164
  %1421 = vst [vmem:[%s2 + $0x780] sm:$0xff] %v1165
  %1422 = vst [vmem:[%s2 + $0x788] sm:$0xff] %v1166
  %1423 = vst [vmem:[%s2 + $0x790] sm:$0xff] %v1167
  %1424 = vst [vmem:[%s2 + $0x798] sm:$0xff] %v1168
  %1425 = vst [vmem:[%s2 + $0x7a0] sm:$0xff] %v1169
  %1426 = vst [vmem:[%s2 + $0x7a8] sm:$0xff] %v1170
  %1427 = vst [vmem:[%s2 + $0x7b0] sm:$0xff] %v1171
  %1428 = vst [vmem:[%s2 + $0x7b8] sm:$0xff] %v1172
  %1429 = vst [vmem:[%s2 + $0x7c0] sm:$0xff] %v1173
  %1430 = vst [vmem:[%s2 + $0x7c8] sm:$0xff] %v1174
  %1431 = vst [vmem:[%s2 + $0x7d0] sm:$0xff] %v1175
  %1432 = vst [vmem:[%s2 + $0x7d8] sm:$0xff] %v1176
  %1433 = vst [vmem:[%s2 + $0x7e0] sm:$0xff] %v1177
  %1434 = vst [vmem:[%s2 + $0x7e8] sm:$0xff] %v1178
  %1435 = vst [vmem:[%s2 + $0x7f0] sm:$0xff] %v1179
  %1436 = vst [vmem:[%s2 + $0x7f8] sm:$0xff] %v1180
  // Predicated region
  $region10: #{_lambda_.3} parent=0 // pred_check
    _
  $region11: #{_lambda_.3} parent=0 // pred_check_branch
    %1438 = sbr.rel (0) target = $region13
  $region12: #{_lambda_.3} parent=0 // pred_region
    _
  $region13: #{_lambda_.3} parent=0 // pred_fallthru
    _
  // Predicated region
  $region14: #{_lambda_.3} parent=0 // pred_check
    _
  $region15: #{_lambda_.3} parent=0 // pred_check_branch
    %1440 = sbr.rel (0) target = $region17
  $region16: #{_lambda_.3} parent=0 // pred_region
    _
  $region17: #{_lambda_.3} parent=0 // pred_fallthru
    _

</llo_original>
